<compile_context>
chip_gen: v7x
topology: tpu7x:2x2x1
jax: 0.10.0
libtpu: 0.0.40
codegen_flags: <defaults>
</compile_context>

<pallas_src>
import functools

import jax
import jax.numpy as jnp
from jax.experimental import pallas as pl
from jax.experimental.pallas import tpu as pltpu

ATT_DIM = 256
FEAT_DIM = 256  # input channel dim of attention (rows of W)

_NEG_BIG = -1.0e30  # mask value for padded time columns (exp underflows to 0)


def _attention_kernel(x_ref, wt_ref, v_ref, o_ref, m_sc, l_sc, acc_sc, *,
                      t_actual):
    # x_ref : (TB, C, TT)  compute dtype -- channel-first block, native layout
    # wt_ref: (A, C)       compute dtype -- W pre-transposed on host
    # v_ref : (1, A)       compute dtype -- (V * scale)^T, lane-dense row
    # o_ref : (TB, C)      float32       -- lane/sublane-dense output block
    # m_sc/l_sc: (TB, 1) f32, acc_sc: (TB, C) f32 -- online-softmax state
    kv = pl.program_id(1)
    tb, c, tt = x_ref.shape

    @pl.when(kv == 0)
    def _init():
        m_sc[...] = jnp.full_like(m_sc, -jnp.inf)
        l_sc[...] = jnp.zeros_like(l_sc)
        acc_sc[...] = jnp.zeros_like(acc_sc)

    x = x_ref[...]          # (TB, C, TT) -- no relayout, T stays on lanes
    wt = wt_ref[...]        # (A, C)
    v = v_ref[...]          # (1, A)

    # Per-batch 2-D MXU matmuls in the natural orientation (LHS contracts its
    # last dim, RHS its second-to-last).  TB is small, the loop is unrolled.
    rows = []
    for b in range(tb):
        e_b = jnp.dot(wt, x[b], preferred_element_type=jnp.float32)  # (A, TT)
        h_b = jnp.tanh(e_b).astype(x.dtype)                          # (A, TT)
        rows.append(jnp.dot(v, h_b,
                            preferred_element_type=jnp.float32))     # (1, TT)
    s = jnp.concatenate(rows, axis=0)                                # (TB, TT)

    # Mask padded time columns: removed from the softmax denominator exactly.
    t_idx = kv * tt + jax.lax.broadcasted_iota(jnp.int32, s.shape, 1)
    s = jnp.where(t_idx < t_actual, s, _NEG_BIG)

    # Online softmax over T tiles (shift-invariant => identical result).
    m_prev = m_sc[...]                                               # (TB, 1)
    m_new = jnp.maximum(m_prev, jnp.max(s, axis=-1, keepdims=True))
    corr = jnp.exp(m_prev - m_new)                                   # (TB, 1)
    p = jnp.exp(s - m_new)                                           # (TB, TT)
    l_sc[...] = corr * l_sc[...] + jnp.sum(p, axis=-1, keepdims=True)
    m_sc[...] = m_new

    # Weighted time pooling directly against channel-first x:
    #   acc[b, c] += sum_t p[b, t] * x[b, c, t]
    # Both operands contract their last (lane) dim -- the q·kᵀ MXU pattern.
    contrib = jnp.einsum('bkt,bct->bkc',
                         p.astype(x.dtype).reshape(tb, 1, tt), x,
                         preferred_element_type=jnp.float32)         # (TB,1,C)
    acc_sc[...] = corr * acc_sc[...] + contrib.reshape(tb, c)

    @pl.when(kv == pl.num_programs(1) - 1)
    def _finalize():
        o_ref[...] = (acc_sc[...] *
                      pl.reciprocal(l_sc[...], approx=True)).astype(o_ref.dtype)


def attention_pallas(x_bct, W, V, *, block_b=8, block_t=512,
                     compute_dtype=jnp.bfloat16):
    """x_bct: (B, C, T) channel-first, W: (C, A), V: (A, 1) -> (B, C) f32.

    compute_dtype=bf16 is the production path (bf16 MXU operands, f32
    accumulation).  compute_dtype=f32 is a test-only accuracy path (slow on
    v5e, whose MXU is bf16-only).
    """
    B, C, T = x_bct.shape
    C_w, A = W.shape
    assert C == C_w, (C, C_w)

    # Fold the 1/sqrt(att_dim) scale into V on the host (applied before exp,
    # so exact) and present it lane-dense; pre-transpose W once.
    scale = float(A) ** (-0.5)
    wt = jnp.asarray(W.T, dtype=compute_dtype)                  # (A, C)
    v_row = (jnp.reshape(V, (1, A)) * scale).astype(compute_dtype)

    # Batch blocking.  TB=8 keeps the (TB, C) output block sublane-aligned for
    # f32; for very small B on v7x a smaller TB would expose more grid steps.
    tb = block_b
    b_pad = pl.cdiv(B, tb) * tb

    # Time blocking: pad T to a multiple of 128 (lane-dense), tile T so the
    # per-step working set stays bounded (online softmax handles the rest).
    t128 = pl.cdiv(T, 128) * 128
    tt = max(128, (min(block_t, t128) // 128) * 128)
    t_pad = pl.cdiv(T, tt) * tt

    # Single host-side cast; the kernel never casts x or W again.
    x = x_bct.astype(compute_dtype)
    if b_pad != B or t_pad != T:
        x = jnp.pad(x, ((0, b_pad - B), (0, 0), (0, t_pad - T)))

    kernel = functools.partial(_attention_kernel, t_actual=T)

    # VMEM budget: double-buffered x block + weights + f32 intermediates.
    itm = jnp.dtype(compute_dtype).itemsize
    est = (2 * tb * C * tt * itm          # x block, double-buffered
           + 2 * (A * C + A) * itm        # Wt + v, double-buffered
           + A * tt * (4 + itm)           # e_b (f32) + tanh (compute dtype)
           + tb * tt * 4 * 4              # s / p / mask intermediates
           + tb * C * 4 * 3)              # acc scratch + contrib + out
    vmem_limit = int(min(max(2 * est, 32 * 1024 * 1024), 48 * 1024 * 1024))

    out = pl.pallas_call(
        kernel,
        out_shape=jax.ShapeDtypeStruct((b_pad, C), jnp.float32),
        grid_spec=pltpu.PrefetchScalarGridSpec(
            num_scalar_prefetch=0,
            grid=(b_pad // tb, t_pad // tt),
            in_specs=[
                pl.BlockSpec((tb, C, tt), lambda i, k: (i, 0, k)),  # native x
                pl.BlockSpec((A, C), lambda i, k: (0, 0)),          # Wt
                pl.BlockSpec((1, A), lambda i, k: (0, 0)),          # v row
            ],
            out_specs=pl.BlockSpec((tb, C), lambda i, k: (i, 0)),
            scratch_shapes=[
                pltpu.VMEM((tb, 1), jnp.float32),   # m (running max)
                pltpu.VMEM((tb, 1), jnp.float32),   # l (running denom)
                pltpu.VMEM((tb, C), jnp.float32),   # acc (running pooled sum)
            ],
        ),
        compiler_params=pltpu.CompilerParams(
            # Batch axis parallel (megacore on v7x); T axis is the reduction.
            dimension_semantics=("parallel", "arbitrary"),
            vmem_limit_bytes=vmem_limit,
        ),
    )(x, wt, v_row)
    return out[:B]


def encoder_forward(x_bct, W, V, *, block_t=512, compute_dtype=jnp.bfloat16):
    """Mirror of encoder.forward; x_bct: (B, C=256, T) channel-first."""
    # time_model (BaseNet) treated as identity -- see TODO at top.
    time = x_bct
    # attention consumes the native (B, C, T) layout; permute is fused.
    return attention_pallas(time, W, V, block_t=block_t,
                            compute_dtype=compute_dtype)


def encoder_reference(x_bct, W, V):
    """Pure-JAX reference replicating the PyTorch forward exactly."""
    x = jnp.transpose(x_bct, (0, 2, 1))            # (B, T, C)
    e = jnp.matmul(x, W)                           # (B, T, A)
    e = jnp.matmul(jnp.tanh(e), V)                 # (B, T, 1)
    e = e * (W.shape[1] ** (-0.5))
    n1 = jnp.exp(e)
    n2 = jnp.sum(jnp.exp(e), axis=1, keepdims=True)
    alpha = n1 / n2
    return jnp.sum(alpha * x, axis=1)              # (B, C)


if __name__ == "__main__":
    key = jax.random.PRNGKey(0)
    k_x, k_w, k_v, k_x2 = jax.random.split(key, 4)

    W = jax.random.normal(k_w, (FEAT_DIM, ATT_DIM), dtype=jnp.float32)
    V = jax.random.normal(k_v, (ATT_DIM, 1), dtype=jnp.float32)

    # ---- Case 1: small batch/time; single T tile (T padded 64 -> 128). ----
    B, T = 16, 64
    x = jax.random.normal(k_x, (B, FEAT_DIM, T), dtype=jnp.float32)
    ref = encoder_reference(x, W, V)

    # Test-only strict f32-MXU path vs. the PyTorch-equivalent f32 reference.
    out_f32 = jax.block_until_ready(
        encoder_forward(x, W, V, compute_dtype=jnp.float32))
    assert out_f32.shape == (B, FEAT_DIM), out_f32.shape
    assert jnp.allclose(out_f32, ref, atol=2e-3, rtol=1e-2), (
        float(jnp.max(jnp.abs(out_f32 - ref))))

    # Production path: bf16 operands / f32 accumulation (documented numerics).
    out_bf16 = jax.block_until_ready(encoder_forward(x, W, V))
    assert out_bf16.shape == (B, FEAT_DIM), out_bf16.shape
    assert jnp.allclose(out_bf16, ref, atol=6e-2, rtol=6e-2), (
        float(jnp.max(jnp.abs(out_bf16 - ref))))

    # ---- Case 2: exercise T tiling + time masking + batch padding. --------
    B2, T2 = 10, 200   # b_pad=16, t_pad=256 with block_t=128 -> 2 T tiles
    x2 = jax.random.normal(k_x2, (B2, FEAT_DIM, T2), dtype=jnp.float32)
    ref2 = encoder_reference(x2, W, V)

    out2_f32 = jax.block_until_ready(
        encoder_forward(x2, W, V, block_t=128, compute_dtype=jnp.float32))
    assert out2_f32.shape == (B2, FEAT_DIM), out2_f32.shape
    assert jnp.allclose(out2_f32, ref2, atol=2e-3, rtol=1e-2), (
        float(jnp.max(jnp.abs(out2_f32 - ref2))))

    out2_bf16 = jax.block_until_ready(encoder_forward(x2, W, V, block_t=128))
    assert out2_bf16.shape == (B2, FEAT_DIM), out2_bf16.shape
    assert jnp.allclose(out2_bf16, ref2, atol=6e-2, rtol=6e-2), (
        float(jnp.max(jnp.abs(out2_bf16 - ref2))))

    print("KERNEL_OK")
</pallas_src>

<mosaic_0001>
module attributes {stable_mosaic.version = 11 : i64} {
  func.func @_attention_kernel(%arg0: i32, %arg1: i32, %arg2: memref<8x256x128xf32, #tpu.memory_space<vmem>>, %arg3: memref<256x256xf32, #tpu.memory_space<vmem>>, %arg4: memref<1x256xf32, #tpu.memory_space<vmem>>, %arg5: memref<8x256xf32, #tpu.memory_space<vmem>>, %arg6: memref<8x1xf32, #tpu.memory_space<vmem>>, %arg7: memref<8x1xf32, #tpu.memory_space<vmem>>, %arg8: memref<8x256xf32, #tpu.memory_space<vmem>>) attributes {dimension_semantics = [#tpu.dimension_semantics<parallel>, #tpu.dimension_semantics<arbitrary>], iteration_bounds = array<i64: 2, 1>, scalar_prefetch = 0 : i64, scratch_operands = 3 : i64, tpu.core_type = #tpu.core_type<tc>, window_params = [{transform_indices = @transform_0, window_bounds = array<i64: 8, 256, 128>}, {pipeline_mode = #tpu.pipeline_mode<synchronous>, transform_indices = @transform_1, window_bounds = array<i64: 256, 256>}, {pipeline_mode = #tpu.pipeline_mode<synchronous>, transform_indices = @transform_2, window_bounds = array<i64: 1, 256>}, {transform_indices = @transform_3, window_bounds = array<i64: 8, 256>}]} {
    %c0_i32 = arith.constant 0 : i32
    %0 = arith.cmpi eq, %arg1, %c0_i32 : i32
    %1 = arith.extui %0 : i1 to i32
    %c0_i32_0 = arith.constant 0 : i32
    %2 = arith.cmpi ne, %1, %c0_i32_0 : i32
    scf.if %2 {
      %cst_40 = arith.constant 0xFF800000 : f32
      %82 = vector.broadcast %cst_40 : f32 to vector<8x1xf32>
      %c0_41 = arith.constant 0 : index
      %c0_42 = arith.constant 0 : index
      %83 = vector.load %arg6[%c0_41, %c0_42] : memref<8x1xf32, #tpu.memory_space<vmem>>, vector<8x1xf32>
      tpu.vector_store %arg6[%c0_41, %c0_42], %82 {strides = array<i32>} : memref<8x1xf32, #tpu.memory_space<vmem>>, vector<8x1xf32>,
      %cst_43 = arith.constant 0.000000e+00 : f32
      %84 = vector.broadcast %cst_43 : f32 to vector<8x1xf32>
      %c0_44 = arith.constant 0 : index
      %c0_45 = arith.constant 0 : index
      %85 = vector.load %arg7[%c0_44, %c0_45] : memref<8x1xf32, #tpu.memory_space<vmem>>, vector<8x1xf32>
      tpu.vector_store %arg7[%c0_44, %c0_45], %84 {strides = array<i32>} : memref<8x1xf32, #tpu.memory_space<vmem>>, vector<8x1xf32>,
      %cst_46 = arith.constant 0.000000e+00 : f32
      %86 = vector.broadcast %cst_46 : f32 to vector<8x256xf32>
      %c0_47 = arith.constant 0 : index
      %c0_48 = arith.constant 0 : index
      %87 = vector.load %arg8[%c0_47, %c0_48] : memref<8x256xf32, #tpu.memory_space<vmem>>, vector<8x256xf32>
      tpu.vector_store %arg8[%c0_47, %c0_48], %86 {strides = array<i32>} : memref<8x256xf32, #tpu.memory_space<vmem>>, vector<8x256xf32>,
    } else {
    }
    %c0 = arith.constant 0 : index
    %c0_1 = arith.constant 0 : index
    %c0_2 = arith.constant 0 : index
    %3 = vector.load %arg2[%c0, %c0_1, %c0_2] : memref<8x256x128xf32, #tpu.memory_space<vmem>>, vector<8x256x128xf32>
    %c0_3 = arith.constant 0 : index
    %c0_4 = arith.constant 0 : index
    %4 = vector.load %arg3[%c0_3, %c0_4] : memref<256x256xf32, #tpu.memory_space<vmem>>, vector<256x256xf32>
    %c0_5 = arith.constant 0 : index
    %c0_6 = arith.constant 0 : index
    %5 = vector.load %arg4[%c0_5, %c0_6] : memref<1x256xf32, #tpu.memory_space<vmem>>, vector<1x256xf32>
    %6 = vector.extract_strided_slice %3 {offsets = [0, 0, 0], sizes = [1, 256, 128], strides = [1, 1, 1]} : vector<8x256x128xf32> to vector<1x256x128xf32>
    %7 = vector.shape_cast %6 : vector<1x256x128xf32> to vector<256x128xf32>
    %cst = arith.constant dense<0.000000e+00> : vector<256x128xf32>
    %8 = tpu.matmul %4, %7, %cst {dimension_numbers = #tpu.dot_dimension_numbers<[1], [0], [0], [1], [0, 0, 1, 1], [], []>} : vector<256x256xf32>, vector<256x128xf32>, vector<256x128xf32> -> vector<256x128xf32>
    %9 = math.tanh %8 : vector<256x128xf32>
    %cst_7 = arith.constant dense<0.000000e+00> : vector<1x128xf32>
    %10 = tpu.matmul %5, %9, %cst_7 {dimension_numbers = #tpu.dot_dimension_numbers<[1], [0], [0], [1], [0, 0, 1, 1], [], []>} : vector<1x256xf32>, vector<256x128xf32>, vector<1x128xf32> -> vector<1x128xf32>
    %11 = vector.extract_strided_slice %3 {offsets = [1, 0, 0], sizes = [1, 256, 128], strides = [1, 1, 1]} : vector<8x256x128xf32> to vector<1x256x128xf32>
    %12 = vector.shape_cast %11 : vector<1x256x128xf32> to vector<256x128xf32>
    %cst_8 = arith.constant dense<0.000000e+00> : vector<256x128xf32>
    %13 = tpu.matmul %4, %12, %cst_8 {dimension_numbers = #tpu.dot_dimension_numbers<[1], [0], [0], [1], [0, 0, 1, 1], [], []>} : vector<256x256xf32>, vector<256x128xf32>, vector<256x128xf32> -> vector<256x128xf32>
    %14 = math.tanh %13 : vector<256x128xf32>
    %cst_9 = arith.constant dense<0.000000e+00> : vector<1x128xf32>
    %15 = tpu.matmul %5, %14, %cst_9 {dimension_numbers = #tpu.dot_dimension_numbers<[1], [0], [0], [1], [0, 0, 1, 1], [], []>} : vector<1x256xf32>, vector<256x128xf32>, vector<1x128xf32> -> vector<1x128xf32>
    %16 = vector.extract_strided_slice %3 {offsets = [2, 0, 0], sizes = [1, 256, 128], strides = [1, 1, 1]} : vector<8x256x128xf32> to vector<1x256x128xf32>
    %17 = vector.shape_cast %16 : vector<1x256x128xf32> to vector<256x128xf32>
    %cst_10 = arith.constant dense<0.000000e+00> : vector<256x128xf32>
    %18 = tpu.matmul %4, %17, %cst_10 {dimension_numbers = #tpu.dot_dimension_numbers<[1], [0], [0], [1], [0, 0, 1, 1], [], []>} : vector<256x256xf32>, vector<256x128xf32>, vector<256x128xf32> -> vector<256x128xf32>
    %19 = math.tanh %18 : vector<256x128xf32>
    %cst_11 = arith.constant dense<0.000000e+00> : vector<1x128xf32>
    %20 = tpu.matmul %5, %19, %cst_11 {dimension_numbers = #tpu.dot_dimension_numbers<[1], [0], [0], [1], [0, 0, 1, 1], [], []>} : vector<1x256xf32>, vector<256x128xf32>, vector<1x128xf32> -> vector<1x128xf32>
    %21 = vector.extract_strided_slice %3 {offsets = [3, 0, 0], sizes = [1, 256, 128], strides = [1, 1, 1]} : vector<8x256x128xf32> to vector<1x256x128xf32>
    %22 = vector.shape_cast %21 : vector<1x256x128xf32> to vector<256x128xf32>
    %cst_12 = arith.constant dense<0.000000e+00> : vector<256x128xf32>
    %23 = tpu.matmul %4, %22, %cst_12 {dimension_numbers = #tpu.dot_dimension_numbers<[1], [0], [0], [1], [0, 0, 1, 1], [], []>} : vector<256x256xf32>, vector<256x128xf32>, vector<256x128xf32> -> vector<256x128xf32>
    %24 = math.tanh %23 : vector<256x128xf32>
    %cst_13 = arith.constant dense<0.000000e+00> : vector<1x128xf32>
    %25 = tpu.matmul %5, %24, %cst_13 {dimension_numbers = #tpu.dot_dimension_numbers<[1], [0], [0], [1], [0, 0, 1, 1], [], []>} : vector<1x256xf32>, vector<256x128xf32>, vector<1x128xf32> -> vector<1x128xf32>
    %26 = vector.extract_strided_slice %3 {offsets = [4, 0, 0], sizes = [1, 256, 128], strides = [1, 1, 1]} : vector<8x256x128xf32> to vector<1x256x128xf32>
    %27 = vector.shape_cast %26 : vector<1x256x128xf32> to vector<256x128xf32>
    %cst_14 = arith.constant dense<0.000000e+00> : vector<256x128xf32>
    %28 = tpu.matmul %4, %27, %cst_14 {dimension_numbers = #tpu.dot_dimension_numbers<[1], [0], [0], [1], [0, 0, 1, 1], [], []>} : vector<256x256xf32>, vector<256x128xf32>, vector<256x128xf32> -> vector<256x128xf32>
    %29 = math.tanh %28 : vector<256x128xf32>
    %cst_15 = arith.constant dense<0.000000e+00> : vector<1x128xf32>
    %30 = tpu.matmul %5, %29, %cst_15 {dimension_numbers = #tpu.dot_dimension_numbers<[1], [0], [0], [1], [0, 0, 1, 1], [], []>} : vector<1x256xf32>, vector<256x128xf32>, vector<1x128xf32> -> vector<1x128xf32>
    %31 = vector.extract_strided_slice %3 {offsets = [5, 0, 0], sizes = [1, 256, 128], strides = [1, 1, 1]} : vector<8x256x128xf32> to vector<1x256x128xf32>
    %32 = vector.shape_cast %31 : vector<1x256x128xf32> to vector<256x128xf32>
    %cst_16 = arith.constant dense<0.000000e+00> : vector<256x128xf32>
    %33 = tpu.matmul %4, %32, %cst_16 {dimension_numbers = #tpu.dot_dimension_numbers<[1], [0], [0], [1], [0, 0, 1, 1], [], []>} : vector<256x256xf32>, vector<256x128xf32>, vector<256x128xf32> -> vector<256x128xf32>
    %34 = math.tanh %33 : vector<256x128xf32>
    %cst_17 = arith.constant dense<0.000000e+00> : vector<1x128xf32>
    %35 = tpu.matmul %5, %34, %cst_17 {dimension_numbers = #tpu.dot_dimension_numbers<[1], [0], [0], [1], [0, 0, 1, 1], [], []>} : vector<1x256xf32>, vector<256x128xf32>, vector<1x128xf32> -> vector<1x128xf32>
    %36 = vector.extract_strided_slice %3 {offsets = [6, 0, 0], sizes = [1, 256, 128], strides = [1, 1, 1]} : vector<8x256x128xf32> to vector<1x256x128xf32>
    %37 = vector.shape_cast %36 : vector<1x256x128xf32> to vector<256x128xf32>
    %cst_18 = arith.constant dense<0.000000e+00> : vector<256x128xf32>
    %38 = tpu.matmul %4, %37, %cst_18 {dimension_numbers = #tpu.dot_dimension_numbers<[1], [0], [0], [1], [0, 0, 1, 1], [], []>} : vector<256x256xf32>, vector<256x128xf32>, vector<256x128xf32> -> vector<256x128xf32>
    %39 = math.tanh %38 : vector<256x128xf32>
    %cst_19 = arith.constant dense<0.000000e+00> : vector<1x128xf32>
    %40 = tpu.matmul %5, %39, %cst_19 {dimension_numbers = #tpu.dot_dimension_numbers<[1], [0], [0], [1], [0, 0, 1, 1], [], []>} : vector<1x256xf32>, vector<256x128xf32>, vector<1x128xf32> -> vector<1x128xf32>
    %41 = vector.extract_strided_slice %3 {offsets = [7, 0, 0], sizes = [1, 256, 128], strides = [1, 1, 1]} : vector<8x256x128xf32> to vector<1x256x128xf32>
    %42 = vector.shape_cast %41 : vector<1x256x128xf32> to vector<256x128xf32>
    %cst_20 = arith.constant dense<0.000000e+00> : vector<256x128xf32>
    %43 = tpu.matmul %4, %42, %cst_20 {dimension_numbers = #tpu.dot_dimension_numbers<[1], [0], [0], [1], [0, 0, 1, 1], [], []>} : vector<256x256xf32>, vector<256x128xf32>, vector<256x128xf32> -> vector<256x128xf32>
    %44 = math.tanh %43 : vector<256x128xf32>
    %cst_21 = arith.constant dense<0.000000e+00> : vector<1x128xf32>
    %45 = tpu.matmul %5, %44, %cst_21 {dimension_numbers = #tpu.dot_dimension_numbers<[1], [0], [0], [1], [0, 0, 1, 1], [], []>} : vector<1x256xf32>, vector<256x128xf32>, vector<1x128xf32> -> vector<1x128xf32>
    %46 = tpu.concatenate %10, %15, %20, %25, %30, %35, %40, %45 in 0 : vector<1x128xf32>, vector<1x128xf32>, vector<1x128xf32>, vector<1x128xf32>, vector<1x128xf32>, vector<1x128xf32>, vector<1x128xf32>, vector<1x128xf32> -> vector<8x128xf32>
    %c128_i32 = arith.constant 128 : i32
    %47 = arith.muli %arg1, %c128_i32 : i32
    %48 = tpu.iota {dimensions = array<i32: 1>} : vector<8x128xi32>
    %49 = vector.broadcast %47 : i32 to vector<8x128xi32>
    %50 = arith.addi %49, %48 : vector<8x128xi32>
    %c64_i32 = arith.constant 64 : i32
    %51 = vector.broadcast %c64_i32 : i32 to vector<8x128xi32>
    %52 = arith.cmpi slt, %50, %51 : vector<8x128xi32>
    %cst_22 = arith.constant -1.000000e+30 : f32
    %53 = vector.broadcast %cst_22 : f32 to vector<8x128xf32>
    %54 = arith.select %52, %46, %53 : vector<8x128xi1>, vector<8x128xf32>
    %c0_23 = arith.constant 0 : index
    %c0_24 = arith.constant 0 : index
    %55 = vector.load %arg6[%c0_23, %c0_24] : memref<8x1xf32, #tpu.memory_space<vmem>>, vector<8x1xf32>
    %cst_25 = arith.constant dense<0xFF800000> : vector<8xf32>
    %56 = vector.multi_reduction <maximumf>, %54, %cst_25 [1] : vector<8x128xf32> to vector<8xf32>
    %57 = vector.shape_cast %56 : vector<8xf32> to vector<8x1xf32>
    %58 = arith.maximumf %55, %57 : vector<8x1xf32>
    %59 = arith.subf %55, %58 : vector<8x1xf32>
    %60 = math.exp %59 : vector<8x1xf32>
    %61 = vector.broadcast %58 : vector<8x1xf32> to vector<8x128xf32>
    %62 = arith.subf %54, %61 : vector<8x128xf32>
    %63 = math.exp %62 : vector<8x128xf32>
    %c0_26 = arith.constant 0 : index
    %c0_27 = arith.constant 0 : index
    %64 = vector.load %arg7[%c0_26, %c0_27] : memref<8x1xf32, #tpu.memory_space<vmem>>, vector<8x1xf32>
    %65 = arith.mulf %60, %64 : vector<8x1xf32>
    %cst_28 = arith.constant dense<0.000000e+00> : vector<8xf32>
    %66 = vector.multi_reduction <add>, %63, %cst_28 [1] : vector<8x128xf32> to vector<8xf32>
    %67 = vector.shape_cast %66 : vector<8xf32> to vector<8x1xf32>
    %68 = arith.addf %65, %67 : vector<8x1xf32>
    %c0_29 = arith.constant 0 : index
    %c0_30 = arith.constant 0 : index
    %69 = vector.load %arg7[%c0_29, %c0_30] : memref<8x1xf32, #tpu.memory_space<vmem>>, vector<8x1xf32>
    tpu.vector_store %arg7[%c0_29, %c0_30], %68 {strides = array<i32>} : memref<8x1xf32, #tpu.memory_space<vmem>>, vector<8x1xf32>,
    %c0_31 = arith.constant 0 : index
    %c0_32 = arith.constant 0 : index
    %70 = vector.load %arg6[%c0_31, %c0_32] : memref<8x1xf32, #tpu.memory_space<vmem>>, vector<8x1xf32>
    tpu.vector_store %arg6[%c0_31, %c0_32], %58 {strides = array<i32>} : memref<8x1xf32, #tpu.memory_space<vmem>>, vector<8x1xf32>,
    %71 = vector.shape_cast %63 : vector<8x128xf32> to vector<8x1x128xf32>
    "tpu.trace_start"() <{level = 10 : i32, message = "bkt,bct->bkc"}> : () -> ()
    %cst_33 = arith.constant dense<0.000000e+00> : vector<8x1x256xf32>
    %72 = tpu.matmul %71, %3, %cst_33 {dimension_numbers = #tpu.dot_dimension_numbers<[2], [2], [1], [1], [0, 0, 0, 1, 1, 1], [0], [0]>} : vector<8x1x128xf32>, vector<8x256x128xf32>, vector<8x1x256xf32> -> vector<8x1x256xf32>
    "tpu.trace_stop"() : () -> ()
    %c0_34 = arith.constant 0 : index
    %c0_35 = arith.constant 0 : index
    %73 = vector.load %arg8[%c0_34, %c0_35] : memref<8x256xf32, #tpu.memory_space<vmem>>, vector<8x256xf32>
    %74 = vector.broadcast %60 : vector<8x1xf32> to vector<8x256xf32>
    %75 = arith.mulf %74, %73 : vector<8x256xf32>
    %76 = vector.shape_cast %72 : vector<8x1x256xf32> to vector<8x256xf32>
    %77 = arith.addf %75, %76 : vector<8x256xf32>
    %c0_36 = arith.constant 0 : index
    %c0_37 = arith.constant 0 : index
    %78 = vector.load %arg8[%c0_36, %c0_37] : memref<8x256xf32, #tpu.memory_space<vmem>>, vector<8x256xf32>
    tpu.vector_store %arg8[%c0_36, %c0_37], %77 {strides = array<i32>} : memref<8x256xf32, #tpu.memory_space<vmem>>, vector<8x256xf32>,
    %c0_i32_38 = arith.constant 0 : i32
    %79 = arith.cmpi eq, %arg1, %c0_i32_38 : i32
    %80 = arith.extui %79 : i1 to i32
    %c0_i32_39 = arith.constant 0 : i32
    %81 = arith.cmpi ne, %80, %c0_i32_39 : i32
    scf.if %81 {
      %c0_40 = arith.constant 0 : index
      %c0_41 = arith.constant 0 : index
      %82 = vector.load %arg8[%c0_40, %c0_41] : memref<8x256xf32, #tpu.memory_space<vmem>>, vector<8x256xf32>
      %c0_42 = arith.constant 0 : index
      %c0_43 = arith.constant 0 : index
      %83 = vector.load %arg7[%c0_42, %c0_43] : memref<8x1xf32, #tpu.memory_space<vmem>>, vector<8x1xf32>
      %84 = tpu.reciprocal %83 {approx = true} : vector<8x1xf32> -> vector<8x1xf32>
      %85 = vector.broadcast %84 : vector<8x1xf32> to vector<8x256xf32>
      %86 = arith.mulf %82, %85 : vector<8x256xf32>
      %c0_44 = arith.constant 0 : index
      %c0_45 = arith.constant 0 : index
      %87 = vector.load %arg5[%c0_44, %c0_45] : memref<8x256xf32, #tpu.memory_space<vmem>>, vector<8x256xf32>
      tpu.vector_store %arg5[%c0_44, %c0_45], %86 {strides = array<i32>} : memref<8x256xf32, #tpu.memory_space<vmem>>, vector<8x256xf32>,
    } else {
    }
    return
  }
  func.func @transform_0(%arg0: i32, %arg1: i32) -> (i32, i32, i32) {
    %c0_i32 = arith.constant 0 : i32
    %c0_i32_0 = arith.constant 0 : i32
    return %arg0, %c0_i32, %arg1 : i32, i32, i32
  }
  func.func @transform_1(%arg0: i32, %arg1: i32) -> (i32, i32) {
    %c0_i32 = arith.constant 0 : i32
    %c0_i32_0 = arith.constant 0 : i32
    %c0_i32_1 = arith.constant 0 : i32
    return %c0_i32, %c0_i32_0 : i32, i32
  }
  func.func @transform_2(%arg0: i32, %arg1: i32) -> (i32, i32) {
    %c0_i32 = arith.constant 0 : i32
    %c0_i32_0 = arith.constant 0 : i32
    %c0_i32_1 = arith.constant 0 : i32
    return %c0_i32, %c0_i32_0 : i32, i32
  }
  func.func @transform_3(%arg0: i32, %arg1: i32) -> (i32, i32) {
    %c0_i32 = arith.constant 0 : i32
    %c0_i32_0 = arith.constant 0 : i32
    return %arg0, %c0_i32 : i32, i32
  }
}

</mosaic_0001>

<llo_original>
// kernel: tpu_custom_call.1
$region0: #{tpu_custom_call.1}
  #allocation0 [shape = 'u32[]', space=smem, size = 0x4, offset = 0x4, fixed_abs, tag = 'smem constant byte address 0x4 - core index']
  #allocation1 [shape = 'u32[144,128]{1,0:T(1,128)}', space=vmem, size = 0x12000, scoped, tag = 'internal scratch']
  #allocation2 [shape = 'f32[8,1]{1,0:T(8,128)}', space=vmem, size = 0x1000, scoped, tag = 'scratch operand']
  #allocation3 [shape = 'f32[8,1]{1,0:T(8,128)}', space=vmem, size = 0x1000, scoped, tag = 'scratch operand']
  #allocation4 [shape = 'f32[8,256]{1,0:T(8,128)}', space=vmem, size = 0x2000, scoped, tag = 'scratch operand']
  %s0 = inlined_call_operand.hbm [shape: f32[16,256,128], index: 0, kind: input, shape index: {}]
  %s1 = inlined_call_operand.hbm [shape: f32[256,256], index: 1, kind: input, shape index: {}]
  %s2 = inlined_call_operand.hbm [shape: f32[1,256], index: 2, kind: input, shape index: {}]
  %s3 = inlined_call_operand.hbm [shape: f32[16,256], index: 3, kind: output, shape index: {}]
  %s4 = sld [smem:[#allocation0]]
  $region65: #{tpu_custom_call.1} parent=0
    _
  %s6 = ssub.s32 1, %s4
  %s7 = scalar_select 0, %s6, %s4
  $region1: #{tpu_custom_call.1} parent=0
    #allocation5 [shape = 'u8[2097152]{0}', space=vmem, size = 0x200000, scoped, tag = 'input window, operand 0']
    #allocation6 [shape = 's32[2]{0}', space=sflag, size = 0x8, scoped, tag = 'scoped memory for tpu_custom_call.1']
    #allocation7 [shape = 's32[2]{0}', space=sflag, size = 0x8, scoped, tag = 'scoped memory for tpu_custom_call.1']
    #allocation8 [shape = 'u8[262144]{0}', space=vmem, size = 0x40000, scoped, tag = 'input window, operand 1, single buffered']
    #allocation9 [shape = 's32[1]{0}', space=sflag, size = 0x4, scoped, tag = 'scoped memory for tpu_custom_call.1']
    #allocation10 [shape = 'u8[1024]{0}', space=vmem, size = 0x400, scoped, tag = 'input window, operand 2, single buffered']
    #allocation11 [shape = 'u8[16384]{0}', space=vmem, size = 0x4000, scoped, tag = 'output window, operand 0']
    %8 = vsyncpa [#allocation6], 0
    %s9 = scalar_lea.sflag [#allocation6], 1
    %10 = vsyncpa %s9, 0
    %11 = vsyncpa [#allocation9], 0
    %12 = vsyncpa [#allocation7], 0
    %s13 = scalar_lea.sflag [#allocation7], 1
    %14 = vsyncpa %s13, 0
    loop: start=0, step=1, limit=4
    $region2: #{tpu_custom_call.1} parent=1 // loop_pre_header
      _
    $region3: #{tpu_custom_call.1} parent=1 // loop_header
      %s16 = sphi 0, %s20
      %p17 = scmp.ge.s32.totalorder %s16, 4
      %s23 = sphi 0, %s35
      %s24 = sphi 0, %s31
      %s25 = sphi 0, %s23
      %s26 = sphi 0, %s24
      %s27 = sphi 0, %s25
      %s28 = sphi 0, %s26
      %s40 = sphi 0, %s42
      %s43 = sphi 0, %s40
      %s44 = sphi 0, %s43
      %s60 = sphi 0, %s44
      %s64 = sphi 0, %s64
      %s66 = sphi 0, %s64
      %s67 = sphi 0, %s66
      %s81 = sphi 0, %s67
      %s85 = sphi 0, %s85
      %s87 = sphi 0, %s85
      %s88 = sphi 0, %s87
      %s102 = sphi 0, %s88
      %s108 = sphi 0, %s110
      %s111 = sphi 0, %s108
      %s112 = sphi 0, %s111
      %s128 = sphi 0, %s112
    $region4: #{tpu_custom_call.1} parent=1 // loop_header_branch
      %19 = sbr.rel (%p17) target = $region8
    $region5: #{tpu_custom_call.1} parent=1 // loop_body
      %s21 = ssub.s32 %s16, 1
      %s22 = ssub.s32 %s16, 2
      %s29 = sadd.s32 1, %s24
      %p30 = scmp.ge.s32.totalorder %s29, 1
      %s31 = scalar_select %p30, 0, %s29
      %s32 = sadd.s32 1, %s23
      %s33 = scalar_select %p30, %s32, %s23
      %p34 = scmp.ge.s32.totalorder %s33, 2
      %s35 = scalar_select %p34, 0, %s33
      %s36 = ssub.s32 %s23, %s35
      %s37 = ssub.s32 %s24, %s31
      %s38 = sor.u32 %s36, %s37
      %p39 = scmp.eq.s32.totalorder %s38, 0
      %s41 = sadd.s32 %s40, 1
      %s42 = scalar_select %p39, %s40, %s41
      %p45 = pneg %p39
      %p46 = scmp.eq.s32.totalorder %s16, 1
      %p47 = por %p45, %p46
      %p48 = scmp.ne.s32.totalorder %s40, %s43
      %p49 = scmp.eq.s32.totalorder %s16, 0
      %p50 = por %p48, %p49
      %p51 = scmp.ne.s32.totalorder %s40, %s43
      %p52 = scmp.eq.s32.totalorder %s21, 1
      %p53 = por %p51, %p52
      %p54 = scmp.ne.s32.totalorder %s43, %s44
      %p55 = scmp.eq.s32.totalorder %s21, 0
      %p56 = por %p54, %p55
      %p57 = scmp.ne.s32.totalorder %s43, %s44
      %p58 = scmp.eq.s32.totalorder %s22, 1
      %p59 = por %p57, %p58
      %p61 = scmp.ne.s32.totalorder %s44, %s60
      %p62 = scmp.eq.s32.totalorder %s22, 0
      %p63 = por %p61, %p62
      %s65 = sadd.s32 %s64, 1
      %p68 = scmp.eq.s32.totalorder %s16, 1
      %p69 = scmp.ne.s32.totalorder %s64, %s66
      %p70 = scmp.eq.s32.totalorder %s16, 0
      %p71 = por %p69, %p70
      %p72 = scmp.ne.s32.totalorder %s64, %s66
      %p73 = scmp.eq.s32.totalorder %s21, 1
      %p74 = por %p72, %p73
      %p75 = scmp.ne.s32.totalorder %s66, %s67
      %p76 = scmp.eq.s32.totalorder %s21, 0
      %p77 = por %p75, %p76
      %p78 = scmp.ne.s32.totalorder %s66, %s67
      %p79 = scmp.eq.s32.totalorder %s22, 1
      %p80 = por %p78, %p79
      %p82 = scmp.ne.s32.totalorder %s67, %s81
      %p83 = scmp.eq.s32.totalorder %s22, 0
      %p84 = por %p82, %p83
      %s86 = sadd.s32 %s85, 1
      %p89 = scmp.eq.s32.totalorder %s16, 1
      %p90 = scmp.ne.s32.totalorder %s85, %s87
      %p91 = scmp.eq.s32.totalorder %s16, 0
      %p92 = por %p90, %p91
      %p93 = scmp.ne.s32.totalorder %s85, %s87
      %p94 = scmp.eq.s32.totalorder %s21, 1
      %p95 = por %p93, %p94
      %p96 = scmp.ne.s32.totalorder %s87, %s88
      %p97 = scmp.eq.s32.totalorder %s21, 0
      %p98 = por %p96, %p97
      %p99 = scmp.ne.s32.totalorder %s87, %s88
      %p100 = scmp.eq.s32.totalorder %s22, 1
      %p101 = por %p99, %p100
      %p103 = scmp.ne.s32.totalorder %s88, %s102
      %p104 = scmp.eq.s32.totalorder %s22, 0
      %p105 = por %p103, %p104
      %s106 = ssub.s32 %s23, %s35
      %p107 = scmp.eq.s32.totalorder %s106, 0
      %s109 = sadd.s32 %s108, 1
      %s110 = scalar_select %p107, %s108, %s109
      %p113 = pneg %p107
      %p114 = scmp.eq.s32.totalorder %s16, 1
      %p115 = por %p113, %p114
      %p116 = scmp.ne.s32.totalorder %s108, %s111
      %p117 = scmp.eq.s32.totalorder %s16, 0
      %p118 = por %p116, %p117
      %p119 = scmp.ne.s32.totalorder %s108, %s111
      %p120 = scmp.eq.s32.totalorder %s21, 1
      %p121 = por %p119, %p120
      %p122 = scmp.ne.s32.totalorder %s111, %s112
      %p123 = scmp.eq.s32.totalorder %s21, 0
      %p124 = por %p122, %p123
      %p125 = scmp.ne.s32.totalorder %s111, %s112
      %p126 = scmp.eq.s32.totalorder %s22, 1
      %p127 = por %p125, %p126
      %p129 = scmp.ne.s32.totalorder %s112, %s128
      %p130 = scmp.eq.s32.totalorder %s22, 0
      %p131 = por %p129, %p130
      %p132 = scmp.le.s32.totalorder 1, %s16
      %p133 = scmp.lt.s32.totalorder %s16, 3
      %p134 = pnand %p132, %p133
      %p135 = pneg %p134
      // Predicated region
      $region9: #{tpu_custom_call.1} parent=5 // pred_check
        _
      $region10: #{tpu_custom_call.1} parent=5 // pred_check_branch
        %137 = sbr.rel (%p134) target = $region12
      $region11: #{tpu_custom_call.1} parent=5 // pred_region
        %s138 = ssub.s32 %s16, 1
        // Predicated region
        $region13: #{tpu_custom_call.1} parent=11 // pred_check
          %p139 = pneg %p77
        $region14: #{tpu_custom_call.1} parent=11 // pred_check_branch
          %141 = sbr.rel (%p139) target = $region16
        $region15: #{tpu_custom_call.1} parent=11 // pred_region
          %s143 = ssub.s32 8192, 8192
          %144 = vsyncadd [#allocation9], %s143
          %s145 = sshll.u32 [#allocation8], 4
          %s146 = int_to_ptr.vmem [resolvable:$true] %s145
          %151 = dma.hbm_to_vmem [thread:$0]  %s1, 8192, %s146, [#allocation9], 256, 256, 16
        $region16: #{tpu_custom_call.1} parent=11 // pred_fallthru
          _
        // Predicated region
        $region17: #{tpu_custom_call.1} parent=11 // pred_check
          %p152 = pneg %p98
        $region18: #{tpu_custom_call.1} parent=11 // pred_check_branch
          %154 = sbr.rel (%p152) target = $region20
        $region19: #{tpu_custom_call.1} parent=11 // pred_region
          %s156 = ssub.s32 32, 32
          %157 = vsyncadd [#allocation9], %s156
          %s159 = sshll.u32 [#allocation10], 4
          %s160 = int_to_ptr.vmem [resolvable:$true] %s159
          %162 = dma.hbm_to_vmem [thread:$0]  %s2, 32, %s160, [#allocation9]
        $region20: #{tpu_custom_call.1} parent=11 // pred_fallthru
          _
      $region12: #{tpu_custom_call.1} parent=5 // pred_fallthru
        _
      %p163 = scmp.lt.s32.totalorder %s16, 2
      // Predicated region
      $region21: #{tpu_custom_call.1} parent=5 // pred_check
        %p164 = pneg %p163
      $region22: #{tpu_custom_call.1} parent=5 // pred_check_branch
        %166 = sbr.rel (%p164) target = $region24
      $region23: #{tpu_custom_call.1} parent=5 // pred_region
        // Predicated region
        $region25: #{tpu_custom_call.1} parent=23 // pred_check
          %p167 = pneg %p50
        $region26: #{tpu_custom_call.1} parent=23 // pred_check_branch
          %169 = sbr.rel (%p167) target = $region28
        $region27: #{tpu_custom_call.1} parent=23 // pred_region
          %s170 = sand.u32 %s40, 1
          %s171 = scalar_lea.sflag [#allocation6], %s170
          %s172 = sand.u32 %s40, 1
          %s173 = smul.addr %s172, 2048
          %s174 = scalar_lea.vmem [#allocation5], %s173
          %s175 = smul.u32 8, %s23
          %s177 = ssub.s32 32768, 32768
          %178 = vsyncadd %s171, %s177
          %s179 = smul.addr %s175, 32
          %s180 = sadd.s32 %s24, %s179
          %s181 = smul.addr %s180, 128
          %s182 = scalar_lea.hbm %s0, %s181
          %s183 = sshll.u32 %s174, 4
          %s184 = int_to_ptr.vmem [resolvable:$true] %s183
          %189 = dma.hbm_to_vmem [thread:$0]  %s182, 32768, %s184, %s171, 128, 128, 8
        $region28: #{tpu_custom_call.1} parent=23 // pred_fallthru
          _
      $region24: #{tpu_custom_call.1} parent=5 // pred_fallthru
        _
      %p190 = scmp.le.s32.totalorder 1, %s16
      %p191 = scmp.lt.s32.totalorder %s16, 3
      %p192 = pnand %p190, %p191
      %p193 = pneg %p192
      // Predicated region
      $region29: #{tpu_custom_call.1} parent=5 // pred_check
        _
      $region30: #{tpu_custom_call.1} parent=5 // pred_check_branch
        %195 = sbr.rel (%p192) target = $region32
      $region31: #{tpu_custom_call.1} parent=5 // pred_region
        %s196 = ssub.s32 %s16, 1
        %s197 = sand.u32 %s43, 1
        %s198 = scalar_lea.sflag [#allocation6], %s197
        %s199 = sand.u32 %s43, 1
        %s200 = smul.addr %s199, 2048
        %s201 = scalar_lea.vmem [#allocation5], %s200
        // Predicated region
        $region33: #{tpu_custom_call.1} parent=31 // pred_check
          %p202 = pneg %p56
        $region34: #{tpu_custom_call.1} parent=31 // pred_check_branch
          %204 = sbr.rel (%p202) target = $region36
        $region35: #{tpu_custom_call.1} parent=31 // pred_region
          %205 = dma.done %s198, 32768
        $region36: #{tpu_custom_call.1} parent=31 // pred_fallthru
          _
        // Predicated region
        $region37: #{tpu_custom_call.1} parent=31 // pred_check
          %p206 = pneg %p77
        $region38: #{tpu_custom_call.1} parent=31 // pred_check_branch
          %208 = sbr.rel (%p206) target = $region40
        $region39: #{tpu_custom_call.1} parent=31 // pred_region
          %209 = dma.done [#allocation9], 8192
        $region40: #{tpu_custom_call.1} parent=31 // pred_fallthru
          _
        // Predicated region
        $region41: #{tpu_custom_call.1} parent=31 // pred_check
          %p210 = pneg %p98
        $region42: #{tpu_custom_call.1} parent=31 // pred_check_branch
          %212 = sbr.rel (%p210) target = $region44
        $region43: #{tpu_custom_call.1} parent=31 // pred_region
          %213 = dma.done [#allocation9], 32
        $region44: #{tpu_custom_call.1} parent=31 // pred_fallthru
          _
        %s214 = sand.u32 %s43, 1
        %s215 = scalar_lea.sflag [#allocation6], %s214
        %s216 = sand.u32 %s43, 1
        %s217 = smul.addr %s216, 2048
        %s218 = scalar_lea.vmem [#allocation5], %s217
        %p219 = pneg %p56
        %p220 = pneg %p53
        %p221 = pneg %p77
        %p222 = pneg %p74
        %p223 = pneg %p98
        %p224 = pneg %p95
        %p225 = pneg %p124
        %p226 = pneg %p121
        %s227 = sand.u32 %s111, 1
        %s228 = scalar_lea.sflag [#allocation7], %s227
        %s229 = sand.u32 %s111, 1
        %s230 = smul.addr %s229, 16
        %s231 = scalar_lea.vmem [#allocation11], %s230
        %s232 = smul.u32 8, %s25
        %p233 = scmp.eq.s32.totalorder %s26, 0
        // Predicated region
        $region45: #{tpu_custom_call.1} parent=31 // pred_check
          %p234 = pneg %p233
        $region46: #{tpu_custom_call.1} parent=31 // pred_check_branch
          %236 = sbr.rel (%p234) target = $region48
        $region47: #{tpu_custom_call.1} parent=31 // pred_region
          %vm237 = vcmask 7168
          %238 = vst.msk [vmem:[#allocation2] sm:$0xff] %vm237, -inf
          %239 = vst.msk [vmem:[#allocation3] sm:$0xff] %vm237, 0.0
          %240 = vst [vmem:[#allocation4] sm:$0xff] 0.0
          %241 = vst [vmem:[#allocation4 + $0x8] sm:$0xff] 0.0
        $region48: #{tpu_custom_call.1} parent=31 // pred_fallthru
          _
        %v242 = vld [vmem:[%s201] sm:$0xff]
        %v243 = vld [vmem:[%s201 + $0x8] sm:$0xff]
        %v244 = vld [vmem:[%s201 + $0x10] sm:$0xff]
        %v245 = vld [vmem:[%s201 + $0x18] sm:$0xff]
        %v246 = vld [vmem:[%s201 + $0x20] sm:$0xff]
        %v247 = vld [vmem:[%s201 + $0x28] sm:$0xff]
        %v248 = vld [vmem:[%s201 + $0x30] sm:$0xff]
        %v249 = vld [vmem:[%s201 + $0x38] sm:$0xff]
        %v250 = vld [vmem:[%s201 + $0x40] sm:$0xff]
        %v251 = vld [vmem:[%s201 + $0x48] sm:$0xff]
        %v252 = vld [vmem:[%s201 + $0x50] sm:$0xff]
        %v253 = vld [vmem:[%s201 + $0x58] sm:$0xff]
        %v254 = vld [vmem:[%s201 + $0x60] sm:$0xff]
        %v255 = vld [vmem:[%s201 + $0x68] sm:$0xff]
        %v256 = vld [vmem:[%s201 + $0x70] sm:$0xff]
        %v257 = vld [vmem:[%s201 + $0x78] sm:$0xff]
        %v258 = vld [vmem:[%s201 + $0x80] sm:$0xff]
        %v259 = vld [vmem:[%s201 + $0x88] sm:$0xff]
        %v260 = vld [vmem:[%s201 + $0x90] sm:$0xff]
        %v261 = vld [vmem:[%s201 + $0x98] sm:$0xff]
        %v262 = vld [vmem:[%s201 + $0xa0] sm:$0xff]
        %v263 = vld [vmem:[%s201 + $0xa8] sm:$0xff]
        %v264 = vld [vmem:[%s201 + $0xb0] sm:$0xff]
        %v265 = vld [vmem:[%s201 + $0xb8] sm:$0xff]
        %v266 = vld [vmem:[%s201 + $0xc0] sm:$0xff]
        %v267 = vld [vmem:[%s201 + $0xc8] sm:$0xff]
        %v268 = vld [vmem:[%s201 + $0xd0] sm:$0xff]
        %v269 = vld [vmem:[%s201 + $0xd8] sm:$0xff]
        %v270 = vld [vmem:[%s201 + $0xe0] sm:$0xff]
        %v271 = vld [vmem:[%s201 + $0xe8] sm:$0xff]
        %v272 = vld [vmem:[%s201 + $0xf0] sm:$0xff]
        %v273 = vld [vmem:[%s201 + $0xf8] sm:$0xff]
        %v274 = vld [vmem:[%s201 + $0x100] sm:$0xff]
        %v275 = vld [vmem:[%s201 + $0x108] sm:$0xff]
        %v276 = vld [vmem:[%s201 + $0x110] sm:$0xff]
        %v277 = vld [vmem:[%s201 + $0x118] sm:$0xff]
        %v278 = vld [vmem:[%s201 + $0x120] sm:$0xff]
        %v279 = vld [vmem:[%s201 + $0x128] sm:$0xff]
        %v280 = vld [vmem:[%s201 + $0x130] sm:$0xff]
        %v281 = vld [vmem:[%s201 + $0x138] sm:$0xff]
        %v282 = vld [vmem:[%s201 + $0x140] sm:$0xff]
        %v283 = vld [vmem:[%s201 + $0x148] sm:$0xff]
        %v284 = vld [vmem:[%s201 + $0x150] sm:$0xff]
        %v285 = vld [vmem:[%s201 + $0x158] sm:$0xff]
        %v286 = vld [vmem:[%s201 + $0x160] sm:$0xff]
        %v287 = vld [vmem:[%s201 + $0x168] sm:$0xff]
        %v288 = vld [vmem:[%s201 + $0x170] sm:$0xff]
        %v289 = vld [vmem:[%s201 + $0x178] sm:$0xff]
        %v290 = vld [vmem:[%s201 + $0x180] sm:$0xff]
        %v291 = vld [vmem:[%s201 + $0x188] sm:$0xff]
        %v292 = vld [vmem:[%s201 + $0x190] sm:$0xff]
        %v293 = vld [vmem:[%s201 + $0x198] sm:$0xff]
        %v294 = vld [vmem:[%s201 + $0x1a0] sm:$0xff]
        %v295 = vld [vmem:[%s201 + $0x1a8] sm:$0xff]
        %v296 = vld [vmem:[%s201 + $0x1b0] sm:$0xff]
        %v297 = vld [vmem:[%s201 + $0x1b8] sm:$0xff]
        %v298 = vld [vmem:[%s201 + $0x1c0] sm:$0xff]
        %v299 = vld [vmem:[%s201 + $0x1c8] sm:$0xff]
        %v300 = vld [vmem:[%s201 + $0x1d0] sm:$0xff]
        %v301 = vld [vmem:[%s201 + $0x1d8] sm:$0xff]
        %v302 = vld [vmem:[%s201 + $0x1e0] sm:$0xff]
        %v303 = vld [vmem:[%s201 + $0x1e8] sm:$0xff]
        %v304 = vld [vmem:[%s201 + $0x1f0] sm:$0xff]
        %v305 = vld [vmem:[%s201 + $0x1f8] sm:$0xff]
        %v306 = vld [vmem:[%s201 + $0x200] sm:$0xff]
        %v307 = vld [vmem:[%s201 + $0x208] sm:$0xff]
        %v308 = vld [vmem:[%s201 + $0x210] sm:$0xff]
        %v309 = vld [vmem:[%s201 + $0x218] sm:$0xff]
        %v310 = vld [vmem:[%s201 + $0x220] sm:$0xff]
        %v311 = vld [vmem:[%s201 + $0x228] sm:$0xff]
        %v312 = vld [vmem:[%s201 + $0x230] sm:$0xff]
        %v313 = vld [vmem:[%s201 + $0x238] sm:$0xff]
        %v314 = vld [vmem:[%s201 + $0x240] sm:$0xff]
        %v315 = vld [vmem:[%s201 + $0x248] sm:$0xff]
        %v316 = vld [vmem:[%s201 + $0x250] sm:$0xff]
        %v317 = vld [vmem:[%s201 + $0x258] sm:$0xff]
        %v318 = vld [vmem:[%s201 + $0x260] sm:$0xff]
        %v319 = vld [vmem:[%s201 + $0x268] sm:$0xff]
        %v320 = vld [vmem:[%s201 + $0x270] sm:$0xff]
        %v321 = vld [vmem:[%s201 + $0x278] sm:$0xff]
        %v322 = vld [vmem:[%s201 + $0x280] sm:$0xff]
        %v323 = vld [vmem:[%s201 + $0x288] sm:$0xff]
        %v324 = vld [vmem:[%s201 + $0x290] sm:$0xff]
        %v325 = vld [vmem:[%s201 + $0x298] sm:$0xff]
        %v326 = vld [vmem:[%s201 + $0x2a0] sm:$0xff]
        %v327 = vld [vmem:[%s201 + $0x2a8] sm:$0xff]
        %v328 = vld [vmem:[%s201 + $0x2b0] sm:$0xff]
        %v329 = vld [vmem:[%s201 + $0x2b8] sm:$0xff]
        %v330 = vld [vmem:[%s201 + $0x2c0] sm:$0xff]
        %v331 = vld [vmem:[%s201 + $0x2c8] sm:$0xff]
        %v332 = vld [vmem:[%s201 + $0x2d0] sm:$0xff]
        %v333 = vld [vmem:[%s201 + $0x2d8] sm:$0xff]
        %v334 = vld [vmem:[%s201 + $0x2e0] sm:$0xff]
        %v335 = vld [vmem:[%s201 + $0x2e8] sm:$0xff]
        %v336 = vld [vmem:[%s201 + $0x2f0] sm:$0xff]
        %v337 = vld [vmem:[%s201 + $0x2f8] sm:$0xff]
        %v338 = vld [vmem:[%s201 + $0x300] sm:$0xff]
        %v339 = vld [vmem:[%s201 + $0x308] sm:$0xff]
        %v340 = vld [vmem:[%s201 + $0x310] sm:$0xff]
        %v341 = vld [vmem:[%s201 + $0x318] sm:$0xff]
        %v342 = vld [vmem:[%s201 + $0x320] sm:$0xff]
        %v343 = vld [vmem:[%s201 + $0x328] sm:$0xff]
        %v344 = vld [vmem:[%s201 + $0x330] sm:$0xff]
        %v345 = vld [vmem:[%s201 + $0x338] sm:$0xff]
        %v346 = vld [vmem:[%s201 + $0x340] sm:$0xff]
        %v347 = vld [vmem:[%s201 + $0x348] sm:$0xff]
        %v348 = vld [vmem:[%s201 + $0x350] sm:$0xff]
        %v349 = vld [vmem:[%s201 + $0x358] sm:$0xff]
        %v350 = vld [vmem:[%s201 + $0x360] sm:$0xff]
        %v351 = vld [vmem:[%s201 + $0x368] sm:$0xff]
        %v352 = vld [vmem:[%s201 + $0x370] sm:$0xff]
        %v353 = vld [vmem:[%s201 + $0x378] sm:$0xff]
        %v354 = vld [vmem:[%s201 + $0x380] sm:$0xff]
        %v355 = vld [vmem:[%s201 + $0x388] sm:$0xff]
        %v356 = vld [vmem:[%s201 + $0x390] sm:$0xff]
        %v357 = vld [vmem:[%s201 + $0x398] sm:$0xff]
        %v358 = vld [vmem:[%s201 + $0x3a0] sm:$0xff]
        %v359 = vld [vmem:[%s201 + $0x3a8] sm:$0xff]
        %v360 = vld [vmem:[%s201 + $0x3b0] sm:$0xff]
        %v361 = vld [vmem:[%s201 + $0x3b8] sm:$0xff]
        %v362 = vld [vmem:[%s201 + $0x3c0] sm:$0xff]
        %v363 = vld [vmem:[%s201 + $0x3c8] sm:$0xff]
        %v364 = vld [vmem:[%s201 + $0x3d0] sm:$0xff]
        %v365 = vld [vmem:[%s201 + $0x3d8] sm:$0xff]
        %v366 = vld [vmem:[%s201 + $0x3e0] sm:$0xff]
        %v367 = vld [vmem:[%s201 + $0x3e8] sm:$0xff]
        %v368 = vld [vmem:[%s201 + $0x3f0] sm:$0xff]
        %v369 = vld [vmem:[%s201 + $0x3f8] sm:$0xff]
        %v370 = vld [vmem:[%s201 + $0x400] sm:$0xff]
        %v371 = vld [vmem:[%s201 + $0x408] sm:$0xff]
        %v372 = vld [vmem:[%s201 + $0x410] sm:$0xff]
        %v373 = vld [vmem:[%s201 + $0x418] sm:$0xff]
        %v374 = vld [vmem:[%s201 + $0x420] sm:$0xff]
        %v375 = vld [vmem:[%s201 + $0x428] sm:$0xff]
        %v376 = vld [vmem:[%s201 + $0x430] sm:$0xff]
        %v377 = vld [vmem:[%s201 + $0x438] sm:$0xff]
        %v378 = vld [vmem:[%s201 + $0x440] sm:$0xff]
        %v379 = vld [vmem:[%s201 + $0x448] sm:$0xff]
        %v380 = vld [vmem:[%s201 + $0x450] sm:$0xff]
        %v381 = vld [vmem:[%s201 + $0x458] sm:$0xff]
        %v382 = vld [vmem:[%s201 + $0x460] sm:$0xff]
        %v383 = vld [vmem:[%s201 + $0x468] sm:$0xff]
        %v384 = vld [vmem:[%s201 + $0x470] sm:$0xff]
        %v385 = vld [vmem:[%s201 + $0x478] sm:$0xff]
        %v386 = vld [vmem:[%s201 + $0x480] sm:$0xff]
        %v387 = vld [vmem:[%s201 + $0x488] sm:$0xff]
        %v388 = vld [vmem:[%s201 + $0x490] sm:$0xff]
        %v389 = vld [vmem:[%s201 + $0x498] sm:$0xff]
        %v390 = vld [vmem:[%s201 + $0x4a0] sm:$0xff]
        %v391 = vld [vmem:[%s201 + $0x4a8] sm:$0xff]
        %v392 = vld [vmem:[%s201 + $0x4b0] sm:$0xff]
        %v393 = vld [vmem:[%s201 + $0x4b8] sm:$0xff]
        %v394 = vld [vmem:[%s201 + $0x4c0] sm:$0xff]
        %v395 = vld [vmem:[%s201 + $0x4c8] sm:$0xff]
        %v396 = vld [vmem:[%s201 + $0x4d0] sm:$0xff]
        %v397 = vld [vmem:[%s201 + $0x4d8] sm:$0xff]
        %v398 = vld [vmem:[%s201 + $0x4e0] sm:$0xff]
        %v399 = vld [vmem:[%s201 + $0x4e8] sm:$0xff]
        %v400 = vld [vmem:[%s201 + $0x4f0] sm:$0xff]
        %v401 = vld [vmem:[%s201 + $0x4f8] sm:$0xff]
        %v402 = vld [vmem:[%s201 + $0x500] sm:$0xff]
        %v403 = vld [vmem:[%s201 + $0x508] sm:$0xff]
        %v404 = vld [vmem:[%s201 + $0x510] sm:$0xff]
        %v405 = vld [vmem:[%s201 + $0x518] sm:$0xff]
        %v406 = vld [vmem:[%s201 + $0x520] sm:$0xff]
        %v407 = vld [vmem:[%s201 + $0x528] sm:$0xff]
        %v408 = vld [vmem:[%s201 + $0x530] sm:$0xff]
        %v409 = vld [vmem:[%s201 + $0x538] sm:$0xff]
        %v410 = vld [vmem:[%s201 + $0x540] sm:$0xff]
        %v411 = vld [vmem:[%s201 + $0x548] sm:$0xff]
        %v412 = vld [vmem:[%s201 + $0x550] sm:$0xff]
        %v413 = vld [vmem:[%s201 + $0x558] sm:$0xff]
        %v414 = vld [vmem:[%s201 + $0x560] sm:$0xff]
        %v415 = vld [vmem:[%s201 + $0x568] sm:$0xff]
        %v416 = vld [vmem:[%s201 + $0x570] sm:$0xff]
        %v417 = vld [vmem:[%s201 + $0x578] sm:$0xff]
        %v418 = vld [vmem:[%s201 + $0x580] sm:$0xff]
        %v419 = vld [vmem:[%s201 + $0x588] sm:$0xff]
        %v420 = vld [vmem:[%s201 + $0x590] sm:$0xff]
        %v421 = vld [vmem:[%s201 + $0x598] sm:$0xff]
        %v422 = vld [vmem:[%s201 + $0x5a0] sm:$0xff]
        %v423 = vld [vmem:[%s201 + $0x5a8] sm:$0xff]
        %v424 = vld [vmem:[%s201 + $0x5b0] sm:$0xff]
        %v425 = vld [vmem:[%s201 + $0x5b8] sm:$0xff]
        %v426 = vld [vmem:[%s201 + $0x5c0] sm:$0xff]
        %v427 = vld [vmem:[%s201 + $0x5c8] sm:$0xff]
        %v428 = vld [vmem:[%s201 + $0x5d0] sm:$0xff]
        %v429 = vld [vmem:[%s201 + $0x5d8] sm:$0xff]
        %v430 = vld [vmem:[%s201 + $0x5e0] sm:$0xff]
        %v431 = vld [vmem:[%s201 + $0x5e8] sm:$0xff]
        %v432 = vld [vmem:[%s201 + $0x5f0] sm:$0xff]
        %v433 = vld [vmem:[%s201 + $0x5f8] sm:$0xff]
        %v434 = vld [vmem:[%s201 + $0x600] sm:$0xff]
        %v435 = vld [vmem:[%s201 + $0x608] sm:$0xff]
        %v436 = vld [vmem:[%s201 + $0x610] sm:$0xff]
        %v437 = vld [vmem:[%s201 + $0x618] sm:$0xff]
        %v438 = vld [vmem:[%s201 + $0x620] sm:$0xff]
        %v439 = vld [vmem:[%s201 + $0x628] sm:$0xff]
        %v440 = vld [vmem:[%s201 + $0x630] sm:$0xff]
        %v441 = vld [vmem:[%s201 + $0x638] sm:$0xff]
        %v442 = vld [vmem:[%s201 + $0x640] sm:$0xff]
        %v443 = vld [vmem:[%s201 + $0x648] sm:$0xff]
        %v444 = vld [vmem:[%s201 + $0x650] sm:$0xff]
        %v445 = vld [vmem:[%s201 + $0x658] sm:$0xff]
        %v446 = vld [vmem:[%s201 + $0x660] sm:$0xff]
        %v447 = vld [vmem:[%s201 + $0x668] sm:$0xff]
        %v448 = vld [vmem:[%s201 + $0x670] sm:$0xff]
        %v449 = vld [vmem:[%s201 + $0x678] sm:$0xff]
        %v450 = vld [vmem:[%s201 + $0x680] sm:$0xff]
        %v451 = vld [vmem:[%s201 + $0x688] sm:$0xff]
        %v452 = vld [vmem:[%s201 + $0x690] sm:$0xff]
        %v453 = vld [vmem:[%s201 + $0x698] sm:$0xff]
        %v454 = vld [vmem:[%s201 + $0x6a0] sm:$0xff]
        %v455 = vld [vmem:[%s201 + $0x6a8] sm:$0xff]
        %v456 = vld [vmem:[%s201 + $0x6b0] sm:$0xff]
        %v457 = vld [vmem:[%s201 + $0x6b8] sm:$0xff]
        %v458 = vld [vmem:[%s201 + $0x6c0] sm:$0xff]
        %v459 = vld [vmem:[%s201 + $0x6c8] sm:$0xff]
        %v460 = vld [vmem:[%s201 + $0x6d0] sm:$0xff]
        %v461 = vld [vmem:[%s201 + $0x6d8] sm:$0xff]
        %v462 = vld [vmem:[%s201 + $0x6e0] sm:$0xff]
        %v463 = vld [vmem:[%s201 + $0x6e8] sm:$0xff]
        %v464 = vld [vmem:[%s201 + $0x6f0] sm:$0xff]
        %v465 = vld [vmem:[%s201 + $0x6f8] sm:$0xff]
        %v466 = vld [vmem:[%s201 + $0x700] sm:$0xff]
        %v467 = vld [vmem:[%s201 + $0x708] sm:$0xff]
        %v468 = vld [vmem:[%s201 + $0x710] sm:$0xff]
        %v469 = vld [vmem:[%s201 + $0x718] sm:$0xff]
        %v470 = vld [vmem:[%s201 + $0x720] sm:$0xff]
        %v471 = vld [vmem:[%s201 + $0x728] sm:$0xff]
        %v472 = vld [vmem:[%s201 + $0x730] sm:$0xff]
        %v473 = vld [vmem:[%s201 + $0x738] sm:$0xff]
        %v474 = vld [vmem:[%s201 + $0x740] sm:$0xff]
        %v475 = vld [vmem:[%s201 + $0x748] sm:$0xff]
        %v476 = vld [vmem:[%s201 + $0x750] sm:$0xff]
        %v477 = vld [vmem:[%s201 + $0x758] sm:$0xff]
        %v478 = vld [vmem:[%s201 + $0x760] sm:$0xff]
        %v479 = vld [vmem:[%s201 + $0x768] sm:$0xff]
        %v480 = vld [vmem:[%s201 + $0x770] sm:$0xff]
        %v481 = vld [vmem:[%s201 + $0x778] sm:$0xff]
        %v482 = vld [vmem:[%s201 + $0x780] sm:$0xff]
        %v483 = vld [vmem:[%s201 + $0x788] sm:$0xff]
        %v484 = vld [vmem:[%s201 + $0x790] sm:$0xff]
        %v485 = vld [vmem:[%s201 + $0x798] sm:$0xff]
        %v486 = vld [vmem:[%s201 + $0x7a0] sm:$0xff]
        %v487 = vld [vmem:[%s201 + $0x7a8] sm:$0xff]
        %v488 = vld [vmem:[%s201 + $0x7b0] sm:$0xff]
        %v489 = vld [vmem:[%s201 + $0x7b8] sm:$0xff]
        %v490 = vld [vmem:[%s201 + $0x7c0] sm:$0xff]
        %v491 = vld [vmem:[%s201 + $0x7c8] sm:$0xff]
        %v492 = vld [vmem:[%s201 + $0x7d0] sm:$0xff]
        %v493 = vld [vmem:[%s201 + $0x7d8] sm:$0xff]
        %v494 = vld [vmem:[%s201 + $0x7e0] sm:$0xff]
        %v495 = vld [vmem:[%s201 + $0x7e8] sm:$0xff]
        %v496 = vld [vmem:[%s201 + $0x7f0] sm:$0xff]
        %v497 = vld [vmem:[%s201 + $0x7f8] sm:$0xff]
        %v498 = vld [vmem:[#allocation8] sm:$0xff]
        %v499 = vld [vmem:[#allocation8 + $0x8] sm:$0xff]
        %v500 = vld [vmem:[#allocation8 + $0x10] sm:$0xff]
        %v501 = vld [vmem:[#allocation8 + $0x18] sm:$0xff]
        %v502 = vld [vmem:[#allocation8 + $0x20] sm:$0xff]
        %v503 = vld [vmem:[#allocation8 + $0x28] sm:$0xff]
        %v504 = vld [vmem:[#allocation8 + $0x30] sm:$0xff]
        %v505 = vld [vmem:[#allocation8 + $0x38] sm:$0xff]
        %v506 = vld [vmem:[#allocation8 + $0x40] sm:$0xff]
        %v507 = vld [vmem:[#allocation8 + $0x48] sm:$0xff]
        %v508 = vld [vmem:[#allocation8 + $0x50] sm:$0xff]
        %v509 = vld [vmem:[#allocation8 + $0x58] sm:$0xff]
        %v510 = vld [vmem:[#allocation8 + $0x60] sm:$0xff]
        %v511 = vld [vmem:[#allocation8 + $0x68] sm:$0xff]
        %v512 = vld [vmem:[#allocation8 + $0x70] sm:$0xff]
        %v513 = vld [vmem:[#allocation8 + $0x78] sm:$0xff]
        %v514 = vld [vmem:[#allocation8 + $0x80] sm:$0xff]
        %v515 = vld [vmem:[#allocation8 + $0x88] sm:$0xff]
        %v516 = vld [vmem:[#allocation8 + $0x90] sm:$0xff]
        %v517 = vld [vmem:[#allocation8 + $0x98] sm:$0xff]
        %v518 = vld [vmem:[#allocation8 + $0xa0] sm:$0xff]
        %v519 = vld [vmem:[#allocation8 + $0xa8] sm:$0xff]
        %v520 = vld [vmem:[#allocation8 + $0xb0] sm:$0xff]
        %v521 = vld [vmem:[#allocation8 + $0xb8] sm:$0xff]
        %v522 = vld [vmem:[#allocation8 + $0xc0] sm:$0xff]
        %v523 = vld [vmem:[#allocation8 + $0xc8] sm:$0xff]
        %v524 = vld [vmem:[#allocation8 + $0xd0] sm:$0xff]
        %v525 = vld [vmem:[#allocation8 + $0xd8] sm:$0xff]
        %v526 = vld [vmem:[#allocation8 + $0xe0] sm:$0xff]
        %v527 = vld [vmem:[#allocation8 + $0xe8] sm:$0xff]
        %v528 = vld [vmem:[#allocation8 + $0xf0] sm:$0xff]
        %v529 = vld [vmem:[#allocation8 + $0xf8] sm:$0xff]
        %v530 = vld [vmem:[#allocation8 + $0x100] sm:$0xff]
        %v531 = vld [vmem:[#allocation8 + $0x108] sm:$0xff]
        %v532 = vld [vmem:[#allocation8 + $0x110] sm:$0xff]
        %v533 = vld [vmem:[#allocation8 + $0x118] sm:$0xff]
        %v534 = vld [vmem:[#allocation8 + $0x120] sm:$0xff]
        %v535 = vld [vmem:[#allocation8 + $0x128] sm:$0xff]
        %v536 = vld [vmem:[#allocation8 + $0x130] sm:$0xff]
        %v537 = vld [vmem:[#allocation8 + $0x138] sm:$0xff]
        %v538 = vld [vmem:[#allocation8 + $0x140] sm:$0xff]
        %v539 = vld [vmem:[#allocation8 + $0x148] sm:$0xff]
        %v540 = vld [vmem:[#allocation8 + $0x150] sm:$0xff]
        %v541 = vld [vmem:[#allocation8 + $0x158] sm:$0xff]
        %v542 = vld [vmem:[#allocation8 + $0x160] sm:$0xff]
        %v543 = vld [vmem:[#allocation8 + $0x168] sm:$0xff]
        %v544 = vld [vmem:[#allocation8 + $0x170] sm:$0xff]
        %v545 = vld [vmem:[#allocation8 + $0x178] sm:$0xff]
        %v546 = vld [vmem:[#allocation8 + $0x180] sm:$0xff]
        %v547 = vld [vmem:[#allocation8 + $0x188] sm:$0xff]
        %v548 = vld [vmem:[#allocation8 + $0x190] sm:$0xff]
        %v549 = vld [vmem:[#allocation8 + $0x198] sm:$0xff]
        %v550 = vld [vmem:[#allocation8 + $0x1a0] sm:$0xff]
        %v551 = vld [vmem:[#allocation8 + $0x1a8] sm:$0xff]
        %v552 = vld [vmem:[#allocation8 + $0x1b0] sm:$0xff]
        %v553 = vld [vmem:[#allocation8 + $0x1b8] sm:$0xff]
        %v554 = vld [vmem:[#allocation8 + $0x1c0] sm:$0xff]
        %v555 = vld [vmem:[#allocation8 + $0x1c8] sm:$0xff]
        %v556 = vld [vmem:[#allocation8 + $0x1d0] sm:$0xff]
        %v557 = vld [vmem:[#allocation8 + $0x1d8] sm:$0xff]
        %v558 = vld [vmem:[#allocation8 + $0x1e0] sm:$0xff]
        %v559 = vld [vmem:[#allocation8 + $0x1e8] sm:$0xff]
        %v560 = vld [vmem:[#allocation8 + $0x1f0] sm:$0xff]
        %v561 = vld [vmem:[#allocation8 + $0x1f8] sm:$0xff]
        %v562 = vld [vmem:[#allocation10] sm:$0x3]
        %563 = vmatprep.subr.mxu0 0.0
        %564 = vmatpush1.msra.mxu0 %v242
        %565 = vmatprep.subr.mxu0 0.0
        %566 = vmatpush1.msra.mxu0 %v243
        %567 = vmatprep.subr.mxu0 0.0
        %568 = vmatpush1.msra.mxu0 %v244
        %569 = vmatprep.subr.mxu0 0.0
        %570 = vmatpush1.msra.mxu0 %v245
        %571 = vmatprep.subr.mxu0 0.0
        %572 = vmatpush1.msra.mxu0 %v246
        %573 = vmatprep.subr.mxu0 0.0
        %574 = vmatpush1.msra.mxu0 %v247
        %575 = vmatprep.subr.mxu0 0.0
        %576 = vmatpush1.msra.mxu0 %v248
        %577 = vmatprep.subr.mxu0 0.0
        %578 = vmatpush1.msra.mxu0 %v249
        %579 = vmatprep.subr.mxu0 0.0
        %580 = vmatpush1.msra.mxu0 %v250
        %581 = vmatprep.subr.mxu0 0.0
        %582 = vmatpush1.msra.mxu0 %v251
        %583 = vmatprep.subr.mxu0 0.0
        %584 = vmatpush1.msra.mxu0 %v252
        %585 = vmatprep.subr.mxu0 0.0
        %586 = vmatpush1.msra.mxu0 %v253
        %587 = vmatprep.subr.mxu0 0.0
        %588 = vmatpush1.msra.mxu0 %v254
        %589 = vmatprep.subr.mxu0 0.0
        %590 = vmatpush1.msra.mxu0 %v255
        %591 = vmatprep.subr.mxu0 0.0
        %592 = vmatpush1.msra.mxu0 %v256
        %593 = vmatprep.subr.mxu0 0.0
        %594 = vmatpush1.msra.mxu0 %v257
        %595 = vmatprep.subr.mxu0 0.0
        %596 = vmatpush1.msra.mxu0 %v258
        %597 = vmatprep.subr.mxu0 0.0
        %598 = vmatpush1.msra.mxu0 %v259
        %599 = vmatprep.subr.mxu0 0.0
        %600 = vmatpush1.msra.mxu0 %v260
        %601 = vmatprep.subr.mxu0 0.0
        %602 = vmatpush1.msra.mxu0 %v261
        %603 = vmatprep.subr.mxu0 0.0
        %604 = vmatpush1.msra.mxu0 %v262
        %605 = vmatprep.subr.mxu0 0.0
        %606 = vmatpush1.msra.mxu0 %v263
        %607 = vmatprep.subr.mxu0 0.0
        %608 = vmatpush1.msra.mxu0 %v264
        %609 = vmatprep.subr.mxu0 0.0
        %610 = vmatpush1.msra.mxu0 %v265
        %611 = vmatprep.subr.mxu0 0.0
        %612 = vmatpush1.msra.mxu0 %v266
        %613 = vmatprep.subr.mxu0 0.0
        %614 = vmatpush1.msra.mxu0 %v267
        %615 = vmatprep.subr.mxu0 0.0
        %616 = vmatpush1.msra.mxu0 %v268
        %617 = vmatprep.subr.mxu0 0.0
        %618 = vmatpush1.msra.mxu0 %v269
        %619 = vmatprep.subr.mxu0 0.0
        %620 = vmatpush1.msra.mxu0 %v270
        %621 = vmatprep.subr.mxu0 0.0
        %622 = vmatpush1.msra.mxu0 %v271
        %623 = vmatprep.subr.mxu0 0.0
        %624 = vmatpush1.msra.mxu0 %v272
        %625 = vmatprep.subr.mxu0 0.0
        %626 = vmatpush1.msra.mxu0 %v273
        %627 = vmatprep.mubr.f32.mxu0 %v499
        %628 = vmatmul.mubr.f32.gmra.mrb[0].mxu0 %v498
        %v629 = vpop.f32.mrb[0].mxu0
        %v630 = vadd.f32 0.0, %v629
        %v631 = vpop.f32.mrb[0].mxu0
        %632 = vmatprep.mubr.f32.mxu0 %v501
        %633 = vmatmul.mubr.f32.gmra.mrb[0].mxu0 %v500
        %v634 = vpop.f32.mrb[0].mxu0
        %v635 = vadd.f32 0.0, %v634
        %v636 = vpop.f32.mrb[0].mxu0
        %637 = vmatprep.mubr.f32.mxu0 %v503
        %638 = vmatmul.mubr.f32.gmra.mrb[0].mxu0 %v502
        %v639 = vpop.f32.mrb[0].mxu0
        %v640 = vadd.f32 0.0, %v639
        %v641 = vpop.f32.mrb[0].mxu0
        %642 = vmatprep.mubr.f32.mxu0 %v505
        %643 = vmatmul.mubr.f32.gmra.mrb[0].mxu0 %v504
        %v644 = vpop.f32.mrb[0].mxu0
        %v645 = vadd.f32 0.0, %v644
        %v646 = vpop.f32.mrb[0].mxu0
        %647 = vmatprep.mubr.f32.mxu0 %v507
        %648 = vmatmul.mubr.f32.gmra.mrb[0].mxu0 %v506
        %v649 = vpop.f32.mrb[0].mxu0
        %v650 = vadd.f32 0.0, %v649
        %v651 = vpop.f32.mrb[0].mxu0
        %652 = vmatprep.mubr.f32.mxu0 %v509
        %653 = vmatmul.mubr.f32.gmra.mrb[0].mxu0 %v508
        %v654 = vpop.f32.mrb[0].mxu0
        %v655 = vadd.f32 0.0, %v654
        %v656 = vpop.f32.mrb[0].mxu0
        %657 = vmatprep.mubr.f32.mxu0 %v511
        %658 = vmatmul.mubr.f32.gmra.mrb[0].mxu0 %v510
        %v659 = vpop.f32.mrb[0].mxu0
        %v660 = vadd.f32 0.0, %v659
        %v661 = vpop.f32.mrb[0].mxu0
        %662 = vmatprep.mubr.f32.mxu0 %v513
        %663 = vmatmul.mubr.f32.gmra.mrb[0].mxu0 %v512
        %v664 = vpop.f32.mrb[0].mxu0
        %v665 = vadd.f32 0.0, %v664
        %v666 = vpop.f32.mrb[0].mxu0
        %667 = vmatprep.mubr.f32.mxu0 %v515
        %668 = vmatmul.mubr.f32.gmra.mrb[0].mxu0 %v514
        %v669 = vpop.f32.mrb[0].mxu0
        %v670 = vadd.f32 0.0, %v669
        %v671 = vpop.f32.mrb[0].mxu0
        %672 = vmatprep.mubr.f32.mxu0 %v517
        %673 = vmatmul.mubr.f32.gmra.mrb[0].mxu0 %v516
        %v674 = vpop.f32.mrb[0].mxu0
        %v675 = vadd.f32 0.0, %v674
        %v676 = vpop.f32.mrb[0].mxu0
        %677 = vmatprep.mubr.f32.mxu0 %v519
        %678 = vmatmul.mubr.f32.gmra.mrb[0].mxu0 %v518
        %v679 = vpop.f32.mrb[0].mxu0
        %v680 = vadd.f32 0.0, %v679
        %v681 = vpop.f32.mrb[0].mxu0
        %682 = vmatprep.mubr.f32.mxu0 %v521
        %683 = vmatmul.mubr.f32.gmra.mrb[0].mxu0 %v520
        %v684 = vpop.f32.mrb[0].mxu0
        %v685 = vadd.f32 0.0, %v684
        %v686 = vpop.f32.mrb[0].mxu0
        %687 = vmatprep.mubr.f32.mxu0 %v523
        %688 = vmatmul.mubr.f32.gmra.mrb[0].mxu0 %v522
        %v689 = vpop.f32.mrb[0].mxu0
        %v690 = vadd.f32 0.0, %v689
        %v691 = vpop.f32.mrb[0].mxu0
        %692 = vmatprep.mubr.f32.mxu0 %v525
        %693 = vmatmul.mubr.f32.gmra.mrb[0].mxu0 %v524
        %v694 = vpop.f32.mrb[0].mxu0
        %v695 = vadd.f32 0.0, %v694
        %v696 = vpop.f32.mrb[0].mxu0
        %697 = vmatprep.mubr.f32.mxu0 %v527
        %698 = vmatmul.mubr.f32.gmra.mrb[0].mxu0 %v526
        %v699 = vpop.f32.mrb[0].mxu0
        %v700 = vadd.f32 0.0, %v699
        %v701 = vpop.f32.mrb[0].mxu0
        %702 = vmatprep.mubr.f32.mxu0 %v529
        %703 = vmatmul.mubr.f32.gmra.mrb[0].mxu0 %v528
        %v704 = vpop.f32.mrb[0].mxu0
        %v705 = vadd.f32 0.0, %v704
        %v706 = vpop.f32.mrb[0].mxu0
        %707 = vmatprep.mubr.f32.mxu0 %v531
        %708 = vmatmul.mubr.f32.gmra.mrb[0].mxu0 %v530
        %v709 = vpop.f32.mrb[0].mxu0
        %v710 = vadd.f32 0.0, %v709
        %v711 = vpop.f32.mrb[0].mxu0
        %712 = vmatprep.mubr.f32.mxu0 %v533
        %713 = vmatmul.mubr.f32.gmra.mrb[0].mxu0 %v532
        %v714 = vpop.f32.mrb[0].mxu0
        %v715 = vadd.f32 0.0, %v714
        %v716 = vpop.f32.mrb[0].mxu0
        %717 = vmatprep.mubr.f32.mxu0 %v535
        %718 = vmatmul.mubr.f32.gmra.mrb[0].mxu0 %v534
        %v719 = vpop.f32.mrb[0].mxu0
        %v720 = vadd.f32 0.0, %v719
        %v721 = vpop.f32.mrb[0].mxu0
        %722 = vmatprep.mubr.f32.mxu0 %v537
        %723 = vmatmul.mubr.f32.gmra.mrb[0].mxu0 %v536
        %v724 = vpop.f32.mrb[0].mxu0
        %v725 = vadd.f32 0.0, %v724
        %v726 = vpop.f32.mrb[0].mxu0
        %727 = vmatprep.mubr.f32.mxu0 %v539
        %728 = vmatmul.mubr.f32.gmra.mrb[0].mxu0 %v538
        %v729 = vpop.f32.mrb[0].mxu0
        %v730 = vadd.f32 0.0, %v729
        %v731 = vpop.f32.mrb[0].mxu0
        %732 = vmatprep.mubr.f32.mxu0 %v541
        %733 = vmatmul.mubr.f32.gmra.mrb[0].mxu0 %v540
        %v734 = vpop.f32.mrb[0].mxu0
        %v735 = vadd.f32 0.0, %v734
        %v736 = vpop.f32.mrb[0].mxu0
        %737 = vmatprep.mubr.f32.mxu0 %v543
        %738 = vmatmul.mubr.f32.gmra.mrb[0].mxu0 %v542
        %v739 = vpop.f32.mrb[0].mxu0
        %v740 = vadd.f32 0.0, %v739
        %v741 = vpop.f32.mrb[0].mxu0
        %742 = vmatprep.mubr.f32.mxu0 %v545
        %743 = vmatmul.mubr.f32.gmra.mrb[0].mxu0 %v544
        %v744 = vpop.f32.mrb[0].mxu0
        %v745 = vadd.f32 0.0, %v744
        %v746 = vpop.f32.mrb[0].mxu0
        %747 = vmatprep.mubr.f32.mxu0 %v547
        %748 = vmatmul.mubr.f32.gmra.mrb[0].mxu0 %v546
        %v749 = vpop.f32.mrb[0].mxu0
        %v750 = vadd.f32 0.0, %v749
        %v751 = vpop.f32.mrb[0].mxu0
        %752 = vmatprep.mubr.f32.mxu0 %v549
        %753 = vmatmul.mubr.f32.gmra.mrb[0].mxu0 %v548
        %v754 = vpop.f32.mrb[0].mxu0
        %v755 = vadd.f32 0.0, %v754
        %v756 = vpop.f32.mrb[0].mxu0
        %757 = vmatprep.mubr.f32.mxu0 %v551
        %758 = vmatmul.mubr.f32.gmra.mrb[0].mxu0 %v550
        %v759 = vpop.f32.mrb[0].mxu0
        %v760 = vadd.f32 0.0, %v759
        %v761 = vpop.f32.mrb[0].mxu0
        %762 = vmatprep.mubr.f32.mxu0 %v553
        %763 = vmatmul.mubr.f32.gmra.mrb[0].mxu0 %v552
        %v764 = vpop.f32.mrb[0].mxu0
        %v765 = vadd.f32 0.0, %v764
        %v766 = vpop.f32.mrb[0].mxu0
        %767 = vmatprep.mubr.f32.mxu0 %v555
        %768 = vmatmul.mubr.f32.gmra.mrb[0].mxu0 %v554
        %v769 = vpop.f32.mrb[0].mxu0
        %v770 = vadd.f32 0.0, %v769
        %v771 = vpop.f32.mrb[0].mxu0
        %772 = vmatprep.mubr.f32.mxu0 %v557
        %773 = vmatmul.mubr.f32.gmra.mrb[0].mxu0 %v556
        %v774 = vpop.f32.mrb[0].mxu0
        %v775 = vadd.f32 0.0, %v774
        %v776 = vpop.f32.mrb[0].mxu0
        %777 = vmatprep.mubr.f32.mxu0 %v559
        %778 = vmatmul.mubr.f32.gmra.mrb[0].mxu0 %v558
        %v779 = vpop.f32.mrb[0].mxu0
        %v780 = vadd.f32 0.0, %v779
        %v781 = vpop.f32.mrb[0].mxu0
        %782 = vmatprep.mubr.f32.mxu0 %v561
        %783 = vmatmul.mubr.f32.gmra.mrb[0].mxu0 %v560
        %v784 = vpop.f32.mrb[0].mxu0
        %v785 = vadd.f32 0.0, %v784
        %v786 = vpop.f32.mrb[0].mxu0
        %787 = vdwg.mxu0
        %v788 = vtanh.pop %v630
        %v789 = vtanh.pop %v635
        %v790 = vtanh.pop %v640
        %v791 = vtanh.pop %v645
        %v792 = vtanh.pop %v650
        %v793 = vtanh.pop %v655
        %v794 = vtanh.pop %v660
        %v795 = vtanh.pop %v665
        %v796 = vtanh.pop %v670
        %v797 = vtanh.pop %v675
        %v798 = vtanh.pop %v680
        %v799 = vtanh.pop %v685
        %v800 = vtanh.pop %v690
        %v801 = vtanh.pop %v695
        %v802 = vtanh.pop %v700
        %v803 = vtanh.pop %v705
        %v804 = vtanh.pop %v710
        %v805 = vtanh.pop %v715
        %v806 = vtanh.pop %v720
        %v807 = vtanh.pop %v725
        %v808 = vtanh.pop %v730
        %v809 = vtanh.pop %v735
        %v810 = vtanh.pop %v740
        %v811 = vtanh.pop %v745
        %v812 = vtanh.pop %v750
        %v813 = vtanh.pop %v755
        %v814 = vtanh.pop %v760
        %v815 = vtanh.pop %v765
        %v816 = vtanh.pop %v770
        %v817 = vtanh.pop %v775
        %v818 = vtanh.pop %v780
        %v819 = vtanh.pop %v785
        %v821 = vlaneseq
        %v822 = vshrl.u32 %v821, 7
        %v823 = vsub.s32 0, %v822
        %v824 = vrot.slane %v562, %v823
        %v825 = vlaneseq
        %v826 = vshrl.u32 %v825, 7
        %v827 = vsub.s32 1, %v826
        %v828 = vrot.slane %v562, %v827
        %831 = vmatprep.subr.mxu0 0.0
        %832 = vmatpush1.msra.mxu0 %v788
        %833 = vmatprep.subr.mxu0 0.0
        %834 = vmatpush1.msra.mxu0 %v789
        %835 = vmatprep.subr.mxu0 0.0
        %836 = vmatpush1.msra.mxu0 %v790
        %837 = vmatprep.subr.mxu0 0.0
        %838 = vmatpush1.msra.mxu0 %v791
        %839 = vmatprep.subr.mxu0 0.0
        %840 = vmatpush1.msra.mxu0 %v792
        %841 = vmatprep.subr.mxu0 0.0
        %842 = vmatpush1.msra.mxu0 %v793
        %843 = vmatprep.subr.mxu0 0.0
        %844 = vmatpush1.msra.mxu0 %v794
        %845 = vmatprep.subr.mxu0 0.0
        %846 = vmatpush1.msra.mxu0 %v795
        %847 = vmatprep.subr.mxu0 0.0
        %848 = vmatpush1.msra.mxu0 %v796
        %849 = vmatprep.subr.mxu0 0.0
        %850 = vmatpush1.msra.mxu0 %v797
        %851 = vmatprep.subr.mxu0 0.0
        %852 = vmatpush1.msra.mxu0 %v798
        %853 = vmatprep.subr.mxu0 0.0
        %854 = vmatpush1.msra.mxu0 %v799
        %855 = vmatprep.subr.mxu0 0.0
        %856 = vmatpush1.msra.mxu0 %v800
        %857 = vmatprep.subr.mxu0 0.0
        %858 = vmatpush1.msra.mxu0 %v801
        %859 = vmatprep.subr.mxu0 0.0
        %860 = vmatpush1.msra.mxu0 %v802
        %861 = vmatprep.subr.mxu0 0.0
        %862 = vmatpush1.msra.mxu0 %v803
        %863 = vmatprep.subr.mxu0 0.0
        %864 = vmatpush1.msra.mxu0 %v804
        %865 = vmatprep.subr.mxu0 0.0
        %866 = vmatpush1.msra.mxu0 %v805
        %867 = vmatprep.subr.mxu0 0.0
        %868 = vmatpush1.msra.mxu0 %v806
        %869 = vmatprep.subr.mxu0 0.0
        %870 = vmatpush1.msra.mxu0 %v807
        %871 = vmatprep.subr.mxu0 0.0
        %872 = vmatpush1.msra.mxu0 %v808
        %873 = vmatprep.subr.mxu0 0.0
        %874 = vmatpush1.msra.mxu0 %v809
        %875 = vmatprep.subr.mxu0 0.0
        %876 = vmatpush1.msra.mxu0 %v810
        %877 = vmatprep.subr.mxu0 0.0
        %878 = vmatpush1.msra.mxu0 %v811
        %879 = vmatprep.subr.mxu0 0.0
        %880 = vmatpush1.msra.mxu0 %v812
        %881 = vmatprep.subr.mxu0 0.0
        %882 = vmatpush1.msra.mxu0 %v813
        %883 = vmatprep.subr.mxu0 0.0
        %884 = vmatpush1.msra.mxu0 %v814
        %885 = vmatprep.subr.mxu0 0.0
        %886 = vmatpush1.msra.mxu0 %v815
        %887 = vmatprep.subr.mxu0 0.0
        %888 = vmatpush1.msra.mxu0 %v816
        %889 = vmatprep.subr.mxu0 0.0
        %890 = vmatpush1.msra.mxu0 %v817
        %891 = vmatprep.subr.mxu0 0.0
        %892 = vmatpush1.msra.mxu0 %v818
        %893 = vmatprep.subr.mxu0 0.0
        %894 = vmatpush1.msra.mxu0 %v819
        %895 = vmatprep.mubr.f32.mxu0 %v828
        %896 = vmatmul.mubr.f32.gmra.mrb[0].mxu0 %v824
        %v897 = vpop.f32.mrb[0].mxu0
        %v898 = vadd.f32 0.0, %v897
        %v899 = vpop.f32.mrb[0].mxu0
        %900 = vdwg.mxu0
        %901 = vmatprep.subr.mxu0 0.0
        %902 = vmatpush1.msra.mxu0 %v274
        %903 = vmatprep.subr.mxu0 0.0
        %904 = vmatpush1.msra.mxu0 %v275
        %905 = vmatprep.subr.mxu0 0.0
        %906 = vmatpush1.msra.mxu0 %v276
        %907 = vmatprep.subr.mxu0 0.0
        %908 = vmatpush1.msra.mxu0 %v277
        %909 = vmatprep.subr.mxu0 0.0
        %910 = vmatpush1.msra.mxu0 %v278
        %911 = vmatprep.subr.mxu0 0.0
        %912 = vmatpush1.msra.mxu0 %v279
        %913 = vmatprep.subr.mxu0 0.0
        %914 = vmatpush1.msra.mxu0 %v280
        %915 = vmatprep.subr.mxu0 0.0
        %916 = vmatpush1.msra.mxu0 %v281
        %917 = vmatprep.subr.mxu0 0.0
        %918 = vmatpush1.msra.mxu0 %v282
        %919 = vmatprep.subr.mxu0 0.0
        %920 = vmatpush1.msra.mxu0 %v283
        %921 = vmatprep.subr.mxu0 0.0
        %922 = vmatpush1.msra.mxu0 %v284
        %923 = vmatprep.subr.mxu0 0.0
        %924 = vmatpush1.msra.mxu0 %v285
        %925 = vmatprep.subr.mxu0 0.0
        %926 = vmatpush1.msra.mxu0 %v286
        %927 = vmatprep.subr.mxu0 0.0
        %928 = vmatpush1.msra.mxu0 %v287
        %929 = vmatprep.subr.mxu0 0.0
        %930 = vmatpush1.msra.mxu0 %v288
        %931 = vmatprep.subr.mxu0 0.0
        %932 = vmatpush1.msra.mxu0 %v289
        %933 = vmatprep.subr.mxu0 0.0
        %934 = vmatpush1.msra.mxu0 %v290
        %935 = vmatprep.subr.mxu0 0.0
        %936 = vmatpush1.msra.mxu0 %v291
        %937 = vmatprep.subr.mxu0 0.0
        %938 = vmatpush1.msra.mxu0 %v292
        %939 = vmatprep.subr.mxu0 0.0
        %940 = vmatpush1.msra.mxu0 %v293
        %941 = vmatprep.subr.mxu0 0.0
        %942 = vmatpush1.msra.mxu0 %v294
        %943 = vmatprep.subr.mxu0 0.0
        %944 = vmatpush1.msra.mxu0 %v295
        %945 = vmatprep.subr.mxu0 0.0
        %946 = vmatpush1.msra.mxu0 %v296
        %947 = vmatprep.subr.mxu0 0.0
        %948 = vmatpush1.msra.mxu0 %v297
        %949 = vmatprep.subr.mxu0 0.0
        %950 = vmatpush1.msra.mxu0 %v298
        %951 = vmatprep.subr.mxu0 0.0
        %952 = vmatpush1.msra.mxu0 %v299
        %953 = vmatprep.subr.mxu0 0.0
        %954 = vmatpush1.msra.mxu0 %v300
        %955 = vmatprep.subr.mxu0 0.0
        %956 = vmatpush1.msra.mxu0 %v301
        %957 = vmatprep.subr.mxu0 0.0
        %958 = vmatpush1.msra.mxu0 %v302
        %959 = vmatprep.subr.mxu0 0.0
        %960 = vmatpush1.msra.mxu0 %v303
        %961 = vmatprep.subr.mxu0 0.0
        %962 = vmatpush1.msra.mxu0 %v304
        %963 = vmatprep.subr.mxu0 0.0
        %964 = vmatpush1.msra.mxu0 %v305
        %965 = vmatprep.mubr.f32.mxu0 %v499
        %966 = vmatmul.mubr.f32.gmra.mrb[0].mxu0 %v498
        %v967 = vpop.f32.mrb[0].mxu0
        %v968 = vadd.f32 0.0, %v967
        %v969 = vpop.f32.mrb[0].mxu0
        %970 = vmatprep.mubr.f32.mxu0 %v501
        %971 = vmatmul.mubr.f32.gmra.mrb[0].mxu0 %v500
        %v972 = vpop.f32.mrb[0].mxu0
        %v973 = vadd.f32 0.0, %v972
        %v974 = vpop.f32.mrb[0].mxu0
        %975 = vmatprep.mubr.f32.mxu0 %v503
        %976 = vmatmul.mubr.f32.gmra.mrb[0].mxu0 %v502
        %v977 = vpop.f32.mrb[0].mxu0
        %v978 = vadd.f32 0.0, %v977
        %v979 = vpop.f32.mrb[0].mxu0
        %980 = vmatprep.mubr.f32.mxu0 %v505
        %981 = vmatmul.mubr.f32.gmra.mrb[0].mxu0 %v504
        %v982 = vpop.f32.mrb[0].mxu0
        %v983 = vadd.f32 0.0, %v982
        %v984 = vpop.f32.mrb[0].mxu0
        %985 = vmatprep.mubr.f32.mxu0 %v507
        %986 = vmatmul.mubr.f32.gmra.mrb[0].mxu0 %v506
        %v987 = vpop.f32.mrb[0].mxu0
        %v988 = vadd.f32 0.0, %v987
        %v989 = vpop.f32.mrb[0].mxu0
        %990 = vmatprep.mubr.f32.mxu0 %v509
        %991 = vmatmul.mubr.f32.gmra.mrb[0].mxu0 %v508
        %v992 = vpop.f32.mrb[0].mxu0
        %v993 = vadd.f32 0.0, %v992
        %v994 = vpop.f32.mrb[0].mxu0
        %995 = vmatprep.mubr.f32.mxu0 %v511
        %996 = vmatmul.mubr.f32.gmra.mrb[0].mxu0 %v510
        %v997 = vpop.f32.mrb[0].mxu0
        %v998 = vadd.f32 0.0, %v997
        %v999 = vpop.f32.mrb[0].mxu0
        %1000 = vmatprep.mubr.f32.mxu0 %v513
        %1001 = vmatmul.mubr.f32.gmra.mrb[0].mxu0 %v512
        %v1002 = vpop.f32.mrb[0].mxu0
        %v1003 = vadd.f32 0.0, %v1002
        %v1004 = vpop.f32.mrb[0].mxu0
        %1005 = vmatprep.mubr.f32.mxu0 %v515
        %1006 = vmatmul.mubr.f32.gmra.mrb[0].mxu0 %v514
        %v1007 = vpop.f32.mrb[0].mxu0
        %v1008 = vadd.f32 0.0, %v1007
        %v1009 = vpop.f32.mrb[0].mxu0
        %1010 = vmatprep.mubr.f32.mxu0 %v517
        %1011 = vmatmul.mubr.f32.gmra.mrb[0].mxu0 %v516
        %v1012 = vpop.f32.mrb[0].mxu0
        %v1013 = vadd.f32 0.0, %v1012
        %v1014 = vpop.f32.mrb[0].mxu0
        %1015 = vmatprep.mubr.f32.mxu0 %v519
        %1016 = vmatmul.mubr.f32.gmra.mrb[0].mxu0 %v518
        %v1017 = vpop.f32.mrb[0].mxu0
        %v1018 = vadd.f32 0.0, %v1017
        %v1019 = vpop.f32.mrb[0].mxu0
        %1020 = vmatprep.mubr.f32.mxu0 %v521
        %1021 = vmatmul.mubr.f32.gmra.mrb[0].mxu0 %v520
        %v1022 = vpop.f32.mrb[0].mxu0
        %v1023 = vadd.f32 0.0, %v1022
        %v1024 = vpop.f32.mrb[0].mxu0
        %1025 = vmatprep.mubr.f32.mxu0 %v523
        %1026 = vmatmul.mubr.f32.gmra.mrb[0].mxu0 %v522
        %v1027 = vpop.f32.mrb[0].mxu0
        %v1028 = vadd.f32 0.0, %v1027
        %v1029 = vpop.f32.mrb[0].mxu0
        %1030 = vmatprep.mubr.f32.mxu0 %v525
        %1031 = vmatmul.mubr.f32.gmra.mrb[0].mxu0 %v524
        %v1032 = vpop.f32.mrb[0].mxu0
        %v1033 = vadd.f32 0.0, %v1032
        %v1034 = vpop.f32.mrb[0].mxu0
        %1035 = vmatprep.mubr.f32.mxu0 %v527
        %1036 = vmatmul.mubr.f32.gmra.mrb[0].mxu0 %v526
        %v1037 = vpop.f32.mrb[0].mxu0
        %v1038 = vadd.f32 0.0, %v1037
        %v1039 = vpop.f32.mrb[0].mxu0
        %1040 = vmatprep.mubr.f32.mxu0 %v529
        %1041 = vmatmul.mubr.f32.gmra.mrb[0].mxu0 %v528
        %v1042 = vpop.f32.mrb[0].mxu0
        %v1043 = vadd.f32 0.0, %v1042
        %v1044 = vpop.f32.mrb[0].mxu0
        %1045 = vmatprep.mubr.f32.mxu0 %v531
        %1046 = vmatmul.mubr.f32.gmra.mrb[0].mxu0 %v530
        %v1047 = vpop.f32.mrb[0].mxu0
        %v1048 = vadd.f32 0.0, %v1047
        %v1049 = vpop.f32.mrb[0].mxu0
        %1050 = vmatprep.mubr.f32.mxu0 %v533
        %1051 = vmatmul.mubr.f32.gmra.mrb[0].mxu0 %v532
        %v1052 = vpop.f32.mrb[0].mxu0
        %v1053 = vadd.f32 0.0, %v1052
        %v1054 = vpop.f32.mrb[0].mxu0
        %1055 = vmatprep.mubr.f32.mxu0 %v535
        %1056 = vmatmul.mubr.f32.gmra.mrb[0].mxu0 %v534
        %v1057 = vpop.f32.mrb[0].mxu0
        %v1058 = vadd.f32 0.0, %v1057
        %v1059 = vpop.f32.mrb[0].mxu0
        %1060 = vmatprep.mubr.f32.mxu0 %v537
        %1061 = vmatmul.mubr.f32.gmra.mrb[0].mxu0 %v536
        %v1062 = vpop.f32.mrb[0].mxu0
        %v1063 = vadd.f32 0.0, %v1062
        %v1064 = vpop.f32.mrb[0].mxu0
        %1065 = vmatprep.mubr.f32.mxu0 %v539
        %1066 = vmatmul.mubr.f32.gmra.mrb[0].mxu0 %v538
        %v1067 = vpop.f32.mrb[0].mxu0
        %v1068 = vadd.f32 0.0, %v1067
        %v1069 = vpop.f32.mrb[0].mxu0
        %1070 = vmatprep.mubr.f32.mxu0 %v541
        %1071 = vmatmul.mubr.f32.gmra.mrb[0].mxu0 %v540
        %v1072 = vpop.f32.mrb[0].mxu0
        %v1073 = vadd.f32 0.0, %v1072
        %v1074 = vpop.f32.mrb[0].mxu0
        %1075 = vmatprep.mubr.f32.mxu0 %v543
        %1076 = vmatmul.mubr.f32.gmra.mrb[0].mxu0 %v542
        %v1077 = vpop.f32.mrb[0].mxu0
        %v1078 = vadd.f32 0.0, %v1077
        %v1079 = vpop.f32.mrb[0].mxu0
        %1080 = vmatprep.mubr.f32.mxu0 %v545
        %1081 = vmatmul.mubr.f32.gmra.mrb[0].mxu0 %v544
        %v1082 = vpop.f32.mrb[0].mxu0
        %v1083 = vadd.f32 0.0, %v1082
        %v1084 = vpop.f32.mrb[0].mxu0
        %1085 = vmatprep.mubr.f32.mxu0 %v547
        %1086 = vmatmul.mubr.f32.gmra.mrb[0].mxu0 %v546
        %v1087 = vpop.f32.mrb[0].mxu0
        %v1088 = vadd.f32 0.0, %v1087
        %v1089 = vpop.f32.mrb[0].mxu0
        %1090 = vmatprep.mubr.f32.mxu0 %v549
        %1091 = vmatmul.mubr.f32.gmra.mrb[0].mxu0 %v548
        %v1092 = vpop.f32.mrb[0].mxu0
        %v1093 = vadd.f32 0.0, %v1092
        %v1094 = vpop.f32.mrb[0].mxu0
        %1095 = vmatprep.mubr.f32.mxu0 %v551
        %1096 = vmatmul.mubr.f32.gmra.mrb[0].mxu0 %v550
        %v1097 = vpop.f32.mrb[0].mxu0
        %v1098 = vadd.f32 0.0, %v1097
        %v1099 = vpop.f32.mrb[0].mxu0
        %1100 = vmatprep.mubr.f32.mxu0 %v553
        %1101 = vmatmul.mubr.f32.gmra.mrb[0].mxu0 %v552
        %v1102 = vpop.f32.mrb[0].mxu0
        %v1103 = vadd.f32 0.0, %v1102
        %v1104 = vpop.f32.mrb[0].mxu0
        %1105 = vmatprep.mubr.f32.mxu0 %v555
        %1106 = vmatmul.mubr.f32.gmra.mrb[0].mxu0 %v554
        %v1107 = vpop.f32.mrb[0].mxu0
        %v1108 = vadd.f32 0.0, %v1107
        %v1109 = vpop.f32.mrb[0].mxu0
        %1110 = vmatprep.mubr.f32.mxu0 %v557
        %1111 = vmatmul.mubr.f32.gmra.mrb[0].mxu0 %v556
        %v1112 = vpop.f32.mrb[0].mxu0
        %v1113 = vadd.f32 0.0, %v1112
        %v1114 = vpop.f32.mrb[0].mxu0
        %1115 = vmatprep.mubr.f32.mxu0 %v559
        %1116 = vmatmul.mubr.f32.gmra.mrb[0].mxu0 %v558
        %v1117 = vpop.f32.mrb[0].mxu0
        %v1118 = vadd.f32 0.0, %v1117
        %v1119 = vpop.f32.mrb[0].mxu0
        %1120 = vmatprep.mubr.f32.mxu0 %v561
        %1121 = vmatmul.mubr.f32.gmra.mrb[0].mxu0 %v560
        %v1122 = vpop.f32.mrb[0].mxu0
        %v1123 = vadd.f32 0.0, %v1122
        %v1124 = vpop.f32.mrb[0].mxu0
        %1125 = vdwg.mxu0
        %v1126 = vtanh.pop %v968
        %v1127 = vtanh.pop %v973
        %v1128 = vtanh.pop %v978
        %v1129 = vtanh.pop %v983
        %v1130 = vtanh.pop %v988
        %v1131 = vtanh.pop %v993
        %v1132 = vtanh.pop %v998
        %v1133 = vtanh.pop %v1003
        %v1134 = vtanh.pop %v1008
        %v1135 = vtanh.pop %v1013
        %v1136 = vtanh.pop %v1018
        %v1137 = vtanh.pop %v1023
        %v1138 = vtanh.pop %v1028
        %v1139 = vtanh.pop %v1033
        %v1140 = vtanh.pop %v1038
        %v1141 = vtanh.pop %v1043
        %v1142 = vtanh.pop %v1048
        %v1143 = vtanh.pop %v1053
        %v1144 = vtanh.pop %v1058
        %v1145 = vtanh.pop %v1063
        %v1146 = vtanh.pop %v1068
        %v1147 = vtanh.pop %v1073
        %v1148 = vtanh.pop %v1078
        %v1149 = vtanh.pop %v1083
        %v1150 = vtanh.pop %v1088
        %v1151 = vtanh.pop %v1093
        %v1152 = vtanh.pop %v1098
        %v1153 = vtanh.pop %v1103
        %v1154 = vtanh.pop %v1108
        %v1155 = vtanh.pop %v1113
        %v1156 = vtanh.pop %v1118
        %v1157 = vtanh.pop %v1123
        %1158 = vmatprep.subr.mxu0 0.0
        %1159 = vmatpush1.msra.mxu0 %v1126
        %1160 = vmatprep.subr.mxu0 0.0
        %1161 = vmatpush1.msra.mxu0 %v1127
        %1162 = vmatprep.subr.mxu0 0.0
        %1163 = vmatpush1.msra.mxu0 %v1128
        %1164 = vmatprep.subr.mxu0 0.0
        %1165 = vmatpush1.msra.mxu0 %v1129
        %1166 = vmatprep.subr.mxu0 0.0
        %1167 = vmatpush1.msra.mxu0 %v1130
        %1168 = vmatprep.subr.mxu0 0.0
        %1169 = vmatpush1.msra.mxu0 %v1131
        %1170 = vmatprep.subr.mxu0 0.0
        %1171 = vmatpush1.msra.mxu0 %v1132
        %1172 = vmatprep.subr.mxu0 0.0
        %1173 = vmatpush1.msra.mxu0 %v1133
        %1174 = vmatprep.subr.mxu0 0.0
        %1175 = vmatpush1.msra.mxu0 %v1134
        %1176 = vmatprep.subr.mxu0 0.0
        %1177 = vmatpush1.msra.mxu0 %v1135
        %1178 = vmatprep.subr.mxu0 0.0
        %1179 = vmatpush1.msra.mxu0 %v1136
        %1180 = vmatprep.subr.mxu0 0.0
        %1181 = vmatpush1.msra.mxu0 %v1137
        %1182 = vmatprep.subr.mxu0 0.0
        %1183 = vmatpush1.msra.mxu0 %v1138
        %1184 = vmatprep.subr.mxu0 0.0
        %1185 = vmatpush1.msra.mxu0 %v1139
        %1186 = vmatprep.subr.mxu0 0.0
        %1187 = vmatpush1.msra.mxu0 %v1140
        %1188 = vmatprep.subr.mxu0 0.0
        %1189 = vmatpush1.msra.mxu0 %v1141
        %1190 = vmatprep.subr.mxu0 0.0
        %1191 = vmatpush1.msra.mxu0 %v1142
        %1192 = vmatprep.subr.mxu0 0.0
        %1193 = vmatpush1.msra.mxu0 %v1143
        %1194 = vmatprep.subr.mxu0 0.0
        %1195 = vmatpush1.msra.mxu0 %v1144
        %1196 = vmatprep.subr.mxu0 0.0
        %1197 = vmatpush1.msra.mxu0 %v1145
        %1198 = vmatprep.subr.mxu0 0.0
        %1199 = vmatpush1.msra.mxu0 %v1146
        %1200 = vmatprep.subr.mxu0 0.0
        %1201 = vmatpush1.msra.mxu0 %v1147
        %1202 = vmatprep.subr.mxu0 0.0
        %1203 = vmatpush1.msra.mxu0 %v1148
        %1204 = vmatprep.subr.mxu0 0.0
        %1205 = vmatpush1.msra.mxu0 %v1149
        %1206 = vmatprep.subr.mxu0 0.0
        %1207 = vmatpush1.msra.mxu0 %v1150
        %1208 = vmatprep.subr.mxu0 0.0
        %1209 = vmatpush1.msra.mxu0 %v1151
        %1210 = vmatprep.subr.mxu0 0.0
        %1211 = vmatpush1.msra.mxu0 %v1152
        %1212 = vmatprep.subr.mxu0 0.0
        %1213 = vmatpush1.msra.mxu0 %v1153
        %1214 = vmatprep.subr.mxu0 0.0
        %1215 = vmatpush1.msra.mxu0 %v1154
        %1216 = vmatprep.subr.mxu0 0.0
        %1217 = vmatpush1.msra.mxu0 %v1155
        %1218 = vmatprep.subr.mxu0 0.0
        %1219 = vmatpush1.msra.mxu0 %v1156
        %1220 = vmatprep.subr.mxu0 0.0
        %1221 = vmatpush1.msra.mxu0 %v1157
        %1222 = vmatprep.mubr.f32.mxu0 %v828
        %1223 = vmatmul.mubr.f32.gmra.mrb[0].mxu0 %v824
        %v1224 = vpop.f32.mrb[0].mxu0
        %v1225 = vadd.f32 0.0, %v1224
        %v1226 = vpop.f32.mrb[0].mxu0
        %1227 = vdwg.mxu0
        %1228 = vmatprep.subr.mxu0 0.0
        %1229 = vmatpush1.msra.mxu0 %v306
        %1230 = vmatprep.subr.mxu0 0.0
        %1231 = vmatpush1.msra.mxu0 %v307
        %1232 = vmatprep.subr.mxu0 0.0
        %1233 = vmatpush1.msra.mxu0 %v308
        %1234 = vmatprep.subr.mxu0 0.0
        %1235 = vmatpush1.msra.mxu0 %v309
        %1236 = vmatprep.subr.mxu0 0.0
        %1237 = vmatpush1.msra.mxu0 %v310
        %1238 = vmatprep.subr.mxu0 0.0
        %1239 = vmatpush1.msra.mxu0 %v311
        %1240 = vmatprep.subr.mxu0 0.0
        %1241 = vmatpush1.msra.mxu0 %v312
        %1242 = vmatprep.subr.mxu0 0.0
        %1243 = vmatpush1.msra.mxu0 %v313
        %1244 = vmatprep.subr.mxu0 0.0
        %1245 = vmatpush1.msra.mxu0 %v314
        %1246 = vmatprep.subr.mxu0 0.0
        %1247 = vmatpush1.msra.mxu0 %v315
        %1248 = vmatprep.subr.mxu0 0.0
        %1249 = vmatpush1.msra.mxu0 %v316
        %1250 = vmatprep.subr.mxu0 0.0
        %1251 = vmatpush1.msra.mxu0 %v317
        %1252 = vmatprep.subr.mxu0 0.0
        %1253 = vmatpush1.msra.mxu0 %v318
        %1254 = vmatprep.subr.mxu0 0.0
        %1255 = vmatpush1.msra.mxu0 %v319
        %1256 = vmatprep.subr.mxu0 0.0
        %1257 = vmatpush1.msra.mxu0 %v320
        %1258 = vmatprep.subr.mxu0 0.0
        %1259 = vmatpush1.msra.mxu0 %v321
        %1260 = vmatprep.subr.mxu0 0.0
        %1261 = vmatpush1.msra.mxu0 %v322
        %1262 = vmatprep.subr.mxu0 0.0
        %1263 = vmatpush1.msra.mxu0 %v323
        %1264 = vmatprep.subr.mxu0 0.0
        %1265 = vmatpush1.msra.mxu0 %v324
        %1266 = vmatprep.subr.mxu0 0.0
        %1267 = vmatpush1.msra.mxu0 %v325
        %1268 = vmatprep.subr.mxu0 0.0
        %1269 = vmatpush1.msra.mxu0 %v326
        %1270 = vmatprep.subr.mxu0 0.0
        %1271 = vmatpush1.msra.mxu0 %v327
        %1272 = vmatprep.subr.mxu0 0.0
        %1273 = vmatpush1.msra.mxu0 %v328
        %1274 = vmatprep.subr.mxu0 0.0
        %1275 = vmatpush1.msra.mxu0 %v329
        %1276 = vmatprep.subr.mxu0 0.0
        %1277 = vmatpush1.msra.mxu0 %v330
        %1278 = vmatprep.subr.mxu0 0.0
        %1279 = vmatpush1.msra.mxu0 %v331
        %1280 = vmatprep.subr.mxu0 0.0
        %1281 = vmatpush1.msra.mxu0 %v332
        %1282 = vmatprep.subr.mxu0 0.0
        %1283 = vmatpush1.msra.mxu0 %v333
        %1284 = vmatprep.subr.mxu0 0.0
        %1285 = vmatpush1.msra.mxu0 %v334
        %1286 = vmatprep.subr.mxu0 0.0
        %1287 = vmatpush1.msra.mxu0 %v335
        %1288 = vmatprep.subr.mxu0 0.0
        %1289 = vmatpush1.msra.mxu0 %v336
        %1290 = vmatprep.subr.mxu0 0.0
        %1291 = vmatpush1.msra.mxu0 %v337
        %1292 = vmatprep.mubr.f32.mxu0 %v499
        %1293 = vmatmul.mubr.f32.gmra.mrb[0].mxu0 %v498
        %v1294 = vpop.f32.mrb[0].mxu0
        %v1295 = vadd.f32 0.0, %v1294
        %v1296 = vpop.f32.mrb[0].mxu0
        %1297 = vmatprep.mubr.f32.mxu0 %v501
        %1298 = vmatmul.mubr.f32.gmra.mrb[0].mxu0 %v500
        %v1299 = vpop.f32.mrb[0].mxu0
        %v1300 = vadd.f32 0.0, %v1299
        %v1301 = vpop.f32.mrb[0].mxu0
        %1302 = vmatprep.mubr.f32.mxu0 %v503
        %1303 = vmatmul.mubr.f32.gmra.mrb[0].mxu0 %v502
        %v1304 = vpop.f32.mrb[0].mxu0
        %v1305 = vadd.f32 0.0, %v1304
        %v1306 = vpop.f32.mrb[0].mxu0
        %1307 = vmatprep.mubr.f32.mxu0 %v505
        %1308 = vmatmul.mubr.f32.gmra.mrb[0].mxu0 %v504
        %v1309 = vpop.f32.mrb[0].mxu0
        %v1310 = vadd.f32 0.0, %v1309
        %v1311 = vpop.f32.mrb[0].mxu0
        %1312 = vmatprep.mubr.f32.mxu0 %v507
        %1313 = vmatmul.mubr.f32.gmra.mrb[0].mxu0 %v506
        %v1314 = vpop.f32.mrb[0].mxu0
        %v1315 = vadd.f32 0.0, %v1314
        %v1316 = vpop.f32.mrb[0].mxu0
        %1317 = vmatprep.mubr.f32.mxu0 %v509
        %1318 = vmatmul.mubr.f32.gmra.mrb[0].mxu0 %v508
        %v1319 = vpop.f32.mrb[0].mxu0
        %v1320 = vadd.f32 0.0, %v1319
        %v1321 = vpop.f32.mrb[0].mxu0
        %1322 = vmatprep.mubr.f32.mxu0 %v511
        %1323 = vmatmul.mubr.f32.gmra.mrb[0].mxu0 %v510
        %v1324 = vpop.f32.mrb[0].mxu0
        %v1325 = vadd.f32 0.0, %v1324
        %v1326 = vpop.f32.mrb[0].mxu0
        %1327 = vmatprep.mubr.f32.mxu0 %v513
        %1328 = vmatmul.mubr.f32.gmra.mrb[0].mxu0 %v512
        %v1329 = vpop.f32.mrb[0].mxu0
        %v1330 = vadd.f32 0.0, %v1329
        %v1331 = vpop.f32.mrb[0].mxu0
        %1332 = vmatprep.mubr.f32.mxu0 %v515
        %1333 = vmatmul.mubr.f32.gmra.mrb[0].mxu0 %v514
        %v1334 = vpop.f32.mrb[0].mxu0
        %v1335 = vadd.f32 0.0, %v1334
        %v1336 = vpop.f32.mrb[0].mxu0
        %1337 = vmatprep.mubr.f32.mxu0 %v517
        %1338 = vmatmul.mubr.f32.gmra.mrb[0].mxu0 %v516
        %v1339 = vpop.f32.mrb[0].mxu0
        %v1340 = vadd.f32 0.0, %v1339
        %v1341 = vpop.f32.mrb[0].mxu0
        %1342 = vmatprep.mubr.f32.mxu0 %v519
        %1343 = vmatmul.mubr.f32.gmra.mrb[0].mxu0 %v518
        %v1344 = vpop.f32.mrb[0].mxu0
        %v1345 = vadd.f32 0.0, %v1344
        %v1346 = vpop.f32.mrb[0].mxu0
        %1347 = vmatprep.mubr.f32.mxu0 %v521
        %1348 = vmatmul.mubr.f32.gmra.mrb[0].mxu0 %v520
        %v1349 = vpop.f32.mrb[0].mxu0
        %v1350 = vadd.f32 0.0, %v1349
        %v1351 = vpop.f32.mrb[0].mxu0
        %1352 = vmatprep.mubr.f32.mxu0 %v523
        %1353 = vmatmul.mubr.f32.gmra.mrb[0].mxu0 %v522
        %v1354 = vpop.f32.mrb[0].mxu0
        %v1355 = vadd.f32 0.0, %v1354
        %v1356 = vpop.f32.mrb[0].mxu0
        %1357 = vmatprep.mubr.f32.mxu0 %v525
        %1358 = vmatmul.mubr.f32.gmra.mrb[0].mxu0 %v524
        %v1359 = vpop.f32.mrb[0].mxu0
        %v1360 = vadd.f32 0.0, %v1359
        %v1361 = vpop.f32.mrb[0].mxu0
        %1362 = vmatprep.mubr.f32.mxu0 %v527
        %1363 = vmatmul.mubr.f32.gmra.mrb[0].mxu0 %v526
        %v1364 = vpop.f32.mrb[0].mxu0
        %v1365 = vadd.f32 0.0, %v1364
        %v1366 = vpop.f32.mrb[0].mxu0
        %1367 = vmatprep.mubr.f32.mxu0 %v529
        %1368 = vmatmul.mubr.f32.gmra.mrb[0].mxu0 %v528
        %v1369 = vpop.f32.mrb[0].mxu0
        %v1370 = vadd.f32 0.0, %v1369
        %v1371 = vpop.f32.mrb[0].mxu0
        %1372 = vmatprep.mubr.f32.mxu0 %v531
        %1373 = vmatmul.mubr.f32.gmra.mrb[0].mxu0 %v530
        %v1374 = vpop.f32.mrb[0].mxu0
        %v1375 = vadd.f32 0.0, %v1374
        %v1376 = vpop.f32.mrb[0].mxu0
        %1377 = vmatprep.mubr.f32.mxu0 %v533
        %1378 = vmatmul.mubr.f32.gmra.mrb[0].mxu0 %v532
        %v1379 = vpop.f32.mrb[0].mxu0
        %v1380 = vadd.f32 0.0, %v1379
        %v1381 = vpop.f32.mrb[0].mxu0
        %1382 = vmatprep.mubr.f32.mxu0 %v535
        %1383 = vmatmul.mubr.f32.gmra.mrb[0].mxu0 %v534
        %v1384 = vpop.f32.mrb[0].mxu0
        %v1385 = vadd.f32 0.0, %v1384
        %v1386 = vpop.f32.mrb[0].mxu0
        %1387 = vmatprep.mubr.f32.mxu0 %v537
        %1388 = vmatmul.mubr.f32.gmra.mrb[0].mxu0 %v536
        %v1389 = vpop.f32.mrb[0].mxu0
        %v1390 = vadd.f32 0.0, %v1389
        %v1391 = vpop.f32.mrb[0].mxu0
        %1392 = vmatprep.mubr.f32.mxu0 %v539
        %1393 = vmatmul.mubr.f32.gmra.mrb[0].mxu0 %v538
        %v1394 = vpop.f32.mrb[0].mxu0
        %v1395 = vadd.f32 0.0, %v1394
        %v1396 = vpop.f32.mrb[0].mxu0
        %1397 = vmatprep.mubr.f32.mxu0 %v541
        %1398 = vmatmul.mubr.f32.gmra.mrb[0].mxu0 %v540
        %v1399 = vpop.f32.mrb[0].mxu0
        %v1400 = vadd.f32 0.0, %v1399
        %v1401 = vpop.f32.mrb[0].mxu0
        %1402 = vmatprep.mubr.f32.mxu0 %v543
        %1403 = vmatmul.mubr.f32.gmra.mrb[0].mxu0 %v542
        %v1404 = vpop.f32.mrb[0].mxu0
        %v1405 = vadd.f32 0.0, %v1404
        %v1406 = vpop.f32.mrb[0].mxu0
        %1407 = vmatprep.mubr.f32.mxu0 %v545
        %1408 = vmatmul.mubr.f32.gmra.mrb[0].mxu0 %v544
        %v1409 = vpop.f32.mrb[0].mxu0
        %v1410 = vadd.f32 0.0, %v1409
        %v1411 = vpop.f32.mrb[0].mxu0
        %1412 = vmatprep.mubr.f32.mxu0 %v547
        %1413 = vmatmul.mubr.f32.gmra.mrb[0].mxu0 %v546
        %v1414 = vpop.f32.mrb[0].mxu0
        %v1415 = vadd.f32 0.0, %v1414
        %v1416 = vpop.f32.mrb[0].mxu0
        %1417 = vmatprep.mubr.f32.mxu0 %v549
        %1418 = vmatmul.mubr.f32.gmra.mrb[0].mxu0 %v548
        %v1419 = vpop.f32.mrb[0].mxu0
        %v1420 = vadd.f32 0.0, %v1419
        %v1421 = vpop.f32.mrb[0].mxu0
        %1422 = vmatprep.mubr.f32.mxu0 %v551
        %1423 = vmatmul.mubr.f32.gmra.mrb[0].mxu0 %v550
        %v1424 = vpop.f32.mrb[0].mxu0
        %v1425 = vadd.f32 0.0, %v1424
        %v1426 = vpop.f32.mrb[0].mxu0
        %1427 = vmatprep.mubr.f32.mxu0 %v553
        %1428 = vmatmul.mubr.f32.gmra.mrb[0].mxu0 %v552
        %v1429 = vpop.f32.mrb[0].mxu0
        %v1430 = vadd.f32 0.0, %v1429
        %v1431 = vpop.f32.mrb[0].mxu0
        %1432 = vmatprep.mubr.f32.mxu0 %v555
        %1433 = vmatmul.mubr.f32.gmra.mrb[0].mxu0 %v554
        %v1434 = vpop.f32.mrb[0].mxu0
        %v1435 = vadd.f32 0.0, %v1434
        %v1436 = vpop.f32.mrb[0].mxu0
        %1437 = vmatprep.mubr.f32.mxu0 %v557
        %1438 = vmatmul.mubr.f32.gmra.mrb[0].mxu0 %v556
        %v1439 = vpop.f32.mrb[0].mxu0
        %v1440 = vadd.f32 0.0, %v1439
        %v1441 = vpop.f32.mrb[0].mxu0
        %1442 = vmatprep.mubr.f32.mxu0 %v559
        %1443 = vmatmul.mubr.f32.gmra.mrb[0].mxu0 %v558
        %v1444 = vpop.f32.mrb[0].mxu0
        %v1445 = vadd.f32 0.0, %v1444
        %v1446 = vpop.f32.mrb[0].mxu0
        %1447 = vmatprep.mubr.f32.mxu0 %v561
        %1448 = vmatmul.mubr.f32.gmra.mrb[0].mxu0 %v560
        %v1449 = vpop.f32.mrb[0].mxu0
        %v1450 = vadd.f32 0.0, %v1449
        %v1451 = vpop.f32.mrb[0].mxu0
        %1452 = vdwg.mxu0
        %v1453 = vtanh.pop %v1295
        %v1454 = vtanh.pop %v1300
        %v1455 = vtanh.pop %v1305
        %v1456 = vtanh.pop %v1310
        %v1457 = vtanh.pop %v1315
        %v1458 = vtanh.pop %v1320
        %v1459 = vtanh.pop %v1325
        %v1460 = vtanh.pop %v1330
        %v1461 = vtanh.pop %v1335
        %v1462 = vtanh.pop %v1340
        %v1463 = vtanh.pop %v1345
        %v1464 = vtanh.pop %v1350
        %v1465 = vtanh.pop %v1355
        %v1466 = vtanh.pop %v1360
        %v1467 = vtanh.pop %v1365
        %v1468 = vtanh.pop %v1370
        %v1469 = vtanh.pop %v1375
        %v1470 = vtanh.pop %v1380
        %v1471 = vtanh.pop %v1385
        %v1472 = vtanh.pop %v1390
        %v1473 = vtanh.pop %v1395
        %v1474 = vtanh.pop %v1400
        %v1475 = vtanh.pop %v1405
        %v1476 = vtanh.pop %v1410
        %v1477 = vtanh.pop %v1415
        %v1478 = vtanh.pop %v1420
        %v1479 = vtanh.pop %v1425
        %v1480 = vtanh.pop %v1430
        %v1481 = vtanh.pop %v1435
        %v1482 = vtanh.pop %v1440
        %v1483 = vtanh.pop %v1445
        %v1484 = vtanh.pop %v1450
        %1485 = vmatprep.subr.mxu0 0.0
        %1486 = vmatpush1.msra.mxu0 %v1453
        %1487 = vmatprep.subr.mxu0 0.0
        %1488 = vmatpush1.msra.mxu0 %v1454
        %1489 = vmatprep.subr.mxu0 0.0
        %1490 = vmatpush1.msra.mxu0 %v1455
        %1491 = vmatprep.subr.mxu0 0.0
        %1492 = vmatpush1.msra.mxu0 %v1456
        %1493 = vmatprep.subr.mxu0 0.0
        %1494 = vmatpush1.msra.mxu0 %v1457
        %1495 = vmatprep.subr.mxu0 0.0
        %1496 = vmatpush1.msra.mxu0 %v1458
        %1497 = vmatprep.subr.mxu0 0.0
        %1498 = vmatpush1.msra.mxu0 %v1459
        %1499 = vmatprep.subr.mxu0 0.0
        %1500 = vmatpush1.msra.mxu0 %v1460
        %1501 = vmatprep.subr.mxu0 0.0
        %1502 = vmatpush1.msra.mxu0 %v1461
        %1503 = vmatprep.subr.mxu0 0.0
        %1504 = vmatpush1.msra.mxu0 %v1462
        %1505 = vmatprep.subr.mxu0 0.0
        %1506 = vmatpush1.msra.mxu0 %v1463
        %1507 = vmatprep.subr.mxu0 0.0
        %1508 = vmatpush1.msra.mxu0 %v1464
        %1509 = vmatprep.subr.mxu0 0.0
        %1510 = vmatpush1.msra.mxu0 %v1465
        %1511 = vmatprep.subr.mxu0 0.0
        %1512 = vmatpush1.msra.mxu0 %v1466
        %1513 = vmatprep.subr.mxu0 0.0
        %1514 = vmatpush1.msra.mxu0 %v1467
        %1515 = vmatprep.subr.mxu0 0.0
        %1516 = vmatpush1.msra.mxu0 %v1468
        %1517 = vmatprep.subr.mxu0 0.0
        %1518 = vmatpush1.msra.mxu0 %v1469
        %1519 = vmatprep.subr.mxu0 0.0
        %1520 = vmatpush1.msra.mxu0 %v1470
        %1521 = vmatprep.subr.mxu0 0.0
        %1522 = vmatpush1.msra.mxu0 %v1471
        %1523 = vmatprep.subr.mxu0 0.0
        %1524 = vmatpush1.msra.mxu0 %v1472
        %1525 = vmatprep.subr.mxu0 0.0
        %1526 = vmatpush1.msra.mxu0 %v1473
        %1527 = vmatprep.subr.mxu0 0.0
        %1528 = vmatpush1.msra.mxu0 %v1474
        %1529 = vmatprep.subr.mxu0 0.0
        %1530 = vmatpush1.msra.mxu0 %v1475
        %1531 = vmatprep.subr.mxu0 0.0
        %1532 = vmatpush1.msra.mxu0 %v1476
        %1533 = vmatprep.subr.mxu0 0.0
        %1534 = vmatpush1.msra.mxu0 %v1477
        %1535 = vmatprep.subr.mxu0 0.0
        %1536 = vmatpush1.msra.mxu0 %v1478
        %1537 = vmatprep.subr.mxu0 0.0
        %1538 = vmatpush1.msra.mxu0 %v1479
        %1539 = vmatprep.subr.mxu0 0.0
        %1540 = vmatpush1.msra.mxu0 %v1480
        %1541 = vmatprep.subr.mxu0 0.0
        %1542 = vmatpush1.msra.mxu0 %v1481
        %1543 = vmatprep.subr.mxu0 0.0
        %1544 = vmatpush1.msra.mxu0 %v1482
        %1545 = vmatprep.subr.mxu0 0.0
        %1546 = vmatpush1.msra.mxu0 %v1483
        %1547 = vmatprep.subr.mxu0 0.0
        %1548 = vmatpush1.msra.mxu0 %v1484
        %1549 = vmatprep.mubr.f32.mxu0 %v828
        %1550 = vmatmul.mubr.f32.gmra.mrb[0].mxu0 %v824
        %v1551 = vpop.f32.mrb[0].mxu0
        %v1552 = vadd.f32 0.0, %v1551
        %v1553 = vpop.f32.mrb[0].mxu0
        %1554 = vdwg.mxu0
        %1555 = vmatprep.subr.mxu0 0.0
        %1556 = vmatpush1.msra.mxu0 %v338
        %1557 = vmatprep.subr.mxu0 0.0
        %1558 = vmatpush1.msra.mxu0 %v339
        %1559 = vmatprep.subr.mxu0 0.0
        %1560 = vmatpush1.msra.mxu0 %v340
        %1561 = vmatprep.subr.mxu0 0.0
        %1562 = vmatpush1.msra.mxu0 %v341
        %1563 = vmatprep.subr.mxu0 0.0
        %1564 = vmatpush1.msra.mxu0 %v342
        %1565 = vmatprep.subr.mxu0 0.0
        %1566 = vmatpush1.msra.mxu0 %v343
        %1567 = vmatprep.subr.mxu0 0.0
        %1568 = vmatpush1.msra.mxu0 %v344
        %1569 = vmatprep.subr.mxu0 0.0
        %1570 = vmatpush1.msra.mxu0 %v345
        %1571 = vmatprep.subr.mxu0 0.0
        %1572 = vmatpush1.msra.mxu0 %v346
        %1573 = vmatprep.subr.mxu0 0.0
        %1574 = vmatpush1.msra.mxu0 %v347
        %1575 = vmatprep.subr.mxu0 0.0
        %1576 = vmatpush1.msra.mxu0 %v348
        %1577 = vmatprep.subr.mxu0 0.0
        %1578 = vmatpush1.msra.mxu0 %v349
        %1579 = vmatprep.subr.mxu0 0.0
        %1580 = vmatpush1.msra.mxu0 %v350
        %1581 = vmatprep.subr.mxu0 0.0
        %1582 = vmatpush1.msra.mxu0 %v351
        %1583 = vmatprep.subr.mxu0 0.0
        %1584 = vmatpush1.msra.mxu0 %v352
        %1585 = vmatprep.subr.mxu0 0.0
        %1586 = vmatpush1.msra.mxu0 %v353
        %1587 = vmatprep.subr.mxu0 0.0
        %1588 = vmatpush1.msra.mxu0 %v354
        %1589 = vmatprep.subr.mxu0 0.0
        %1590 = vmatpush1.msra.mxu0 %v355
        %1591 = vmatprep.subr.mxu0 0.0
        %1592 = vmatpush1.msra.mxu0 %v356
        %1593 = vmatprep.subr.mxu0 0.0
        %1594 = vmatpush1.msra.mxu0 %v357
        %1595 = vmatprep.subr.mxu0 0.0
        %1596 = vmatpush1.msra.mxu0 %v358
        %1597 = vmatprep.subr.mxu0 0.0
        %1598 = vmatpush1.msra.mxu0 %v359
        %1599 = vmatprep.subr.mxu0 0.0
        %1600 = vmatpush1.msra.mxu0 %v360
        %1601 = vmatprep.subr.mxu0 0.0
        %1602 = vmatpush1.msra.mxu0 %v361
        %1603 = vmatprep.subr.mxu0 0.0
        %1604 = vmatpush1.msra.mxu0 %v362
        %1605 = vmatprep.subr.mxu0 0.0
        %1606 = vmatpush1.msra.mxu0 %v363
        %1607 = vmatprep.subr.mxu0 0.0
        %1608 = vmatpush1.msra.mxu0 %v364
        %1609 = vmatprep.subr.mxu0 0.0
        %1610 = vmatpush1.msra.mxu0 %v365
        %1611 = vmatprep.subr.mxu0 0.0
        %1612 = vmatpush1.msra.mxu0 %v366
        %1613 = vmatprep.subr.mxu0 0.0
        %1614 = vmatpush1.msra.mxu0 %v367
        %1615 = vmatprep.subr.mxu0 0.0
        %1616 = vmatpush1.msra.mxu0 %v368
        %1617 = vmatprep.subr.mxu0 0.0
        %1618 = vmatpush1.msra.mxu0 %v369
        %1619 = vmatprep.mubr.f32.mxu0 %v499
        %1620 = vmatmul.mubr.f32.gmra.mrb[0].mxu0 %v498
        %v1621 = vpop.f32.mrb[0].mxu0
        %v1622 = vadd.f32 0.0, %v1621
        %v1623 = vpop.f32.mrb[0].mxu0
        %1624 = vmatprep.mubr.f32.mxu0 %v501
        %1625 = vmatmul.mubr.f32.gmra.mrb[0].mxu0 %v500
        %v1626 = vpop.f32.mrb[0].mxu0
        %v1627 = vadd.f32 0.0, %v1626
        %v1628 = vpop.f32.mrb[0].mxu0
        %1629 = vmatprep.mubr.f32.mxu0 %v503
        %1630 = vmatmul.mubr.f32.gmra.mrb[0].mxu0 %v502
        %v1631 = vpop.f32.mrb[0].mxu0
        %v1632 = vadd.f32 0.0, %v1631
        %v1633 = vpop.f32.mrb[0].mxu0
        %1634 = vmatprep.mubr.f32.mxu0 %v505
        %1635 = vmatmul.mubr.f32.gmra.mrb[0].mxu0 %v504
        %v1636 = vpop.f32.mrb[0].mxu0
        %v1637 = vadd.f32 0.0, %v1636
        %v1638 = vpop.f32.mrb[0].mxu0
        %1639 = vmatprep.mubr.f32.mxu0 %v507
        %1640 = vmatmul.mubr.f32.gmra.mrb[0].mxu0 %v506
        %v1641 = vpop.f32.mrb[0].mxu0
        %v1642 = vadd.f32 0.0, %v1641
        %v1643 = vpop.f32.mrb[0].mxu0
        %1644 = vmatprep.mubr.f32.mxu0 %v509
        %1645 = vmatmul.mubr.f32.gmra.mrb[0].mxu0 %v508
        %v1646 = vpop.f32.mrb[0].mxu0
        %v1647 = vadd.f32 0.0, %v1646
        %v1648 = vpop.f32.mrb[0].mxu0
        %1649 = vmatprep.mubr.f32.mxu0 %v511
        %1650 = vmatmul.mubr.f32.gmra.mrb[0].mxu0 %v510
        %v1651 = vpop.f32.mrb[0].mxu0
        %v1652 = vadd.f32 0.0, %v1651
        %v1653 = vpop.f32.mrb[0].mxu0
        %1654 = vmatprep.mubr.f32.mxu0 %v513
        %1655 = vmatmul.mubr.f32.gmra.mrb[0].mxu0 %v512
        %v1656 = vpop.f32.mrb[0].mxu0
        %v1657 = vadd.f32 0.0, %v1656
        %v1658 = vpop.f32.mrb[0].mxu0
        %1659 = vmatprep.mubr.f32.mxu0 %v515
        %1660 = vmatmul.mubr.f32.gmra.mrb[0].mxu0 %v514
        %v1661 = vpop.f32.mrb[0].mxu0
        %v1662 = vadd.f32 0.0, %v1661
        %v1663 = vpop.f32.mrb[0].mxu0
        %1664 = vmatprep.mubr.f32.mxu0 %v517
        %1665 = vmatmul.mubr.f32.gmra.mrb[0].mxu0 %v516
        %v1666 = vpop.f32.mrb[0].mxu0
        %v1667 = vadd.f32 0.0, %v1666
        %v1668 = vpop.f32.mrb[0].mxu0
        %1669 = vmatprep.mubr.f32.mxu0 %v519
        %1670 = vmatmul.mubr.f32.gmra.mrb[0].mxu0 %v518
        %v1671 = vpop.f32.mrb[0].mxu0
        %v1672 = vadd.f32 0.0, %v1671
        %v1673 = vpop.f32.mrb[0].mxu0
        %1674 = vmatprep.mubr.f32.mxu0 %v521
        %1675 = vmatmul.mubr.f32.gmra.mrb[0].mxu0 %v520
        %v1676 = vpop.f32.mrb[0].mxu0
        %v1677 = vadd.f32 0.0, %v1676
        %v1678 = vpop.f32.mrb[0].mxu0
        %1679 = vmatprep.mubr.f32.mxu0 %v523
        %1680 = vmatmul.mubr.f32.gmra.mrb[0].mxu0 %v522
        %v1681 = vpop.f32.mrb[0].mxu0
        %v1682 = vadd.f32 0.0, %v1681
        %v1683 = vpop.f32.mrb[0].mxu0
        %1684 = vmatprep.mubr.f32.mxu0 %v525
        %1685 = vmatmul.mubr.f32.gmra.mrb[0].mxu0 %v524
        %v1686 = vpop.f32.mrb[0].mxu0
        %v1687 = vadd.f32 0.0, %v1686
        %v1688 = vpop.f32.mrb[0].mxu0
        %1689 = vmatprep.mubr.f32.mxu0 %v527
        %1690 = vmatmul.mubr.f32.gmra.mrb[0].mxu0 %v526
        %v1691 = vpop.f32.mrb[0].mxu0
        %v1692 = vadd.f32 0.0, %v1691
        %v1693 = vpop.f32.mrb[0].mxu0
        %1694 = vmatprep.mubr.f32.mxu0 %v529
        %1695 = vmatmul.mubr.f32.gmra.mrb[0].mxu0 %v528
        %v1696 = vpop.f32.mrb[0].mxu0
        %v1697 = vadd.f32 0.0, %v1696
        %v1698 = vpop.f32.mrb[0].mxu0
        %1699 = vmatprep.mubr.f32.mxu0 %v531
        %1700 = vmatmul.mubr.f32.gmra.mrb[0].mxu0 %v530
        %v1701 = vpop.f32.mrb[0].mxu0
        %v1702 = vadd.f32 0.0, %v1701
        %v1703 = vpop.f32.mrb[0].mxu0
        %1704 = vmatprep.mubr.f32.mxu0 %v533
        %1705 = vmatmul.mubr.f32.gmra.mrb[0].mxu0 %v532
        %v1706 = vpop.f32.mrb[0].mxu0
        %v1707 = vadd.f32 0.0, %v1706
        %v1708 = vpop.f32.mrb[0].mxu0
        %1709 = vmatprep.mubr.f32.mxu0 %v535
        %1710 = vmatmul.mubr.f32.gmra.mrb[0].mxu0 %v534
        %v1711 = vpop.f32.mrb[0].mxu0
        %v1712 = vadd.f32 0.0, %v1711
        %v1713 = vpop.f32.mrb[0].mxu0
        %1714 = vmatprep.mubr.f32.mxu0 %v537
        %1715 = vmatmul.mubr.f32.gmra.mrb[0].mxu0 %v536
        %v1716 = vpop.f32.mrb[0].mxu0
        %v1717 = vadd.f32 0.0, %v1716
        %v1718 = vpop.f32.mrb[0].mxu0
        %1719 = vmatprep.mubr.f32.mxu0 %v539
        %1720 = vmatmul.mubr.f32.gmra.mrb[0].mxu0 %v538
        %v1721 = vpop.f32.mrb[0].mxu0
        %v1722 = vadd.f32 0.0, %v1721
        %v1723 = vpop.f32.mrb[0].mxu0
        %1724 = vmatprep.mubr.f32.mxu0 %v541
        %1725 = vmatmul.mubr.f32.gmra.mrb[0].mxu0 %v540
        %v1726 = vpop.f32.mrb[0].mxu0
        %v1727 = vadd.f32 0.0, %v1726
        %v1728 = vpop.f32.mrb[0].mxu0
        %1729 = vmatprep.mubr.f32.mxu0 %v543
        %1730 = vmatmul.mubr.f32.gmra.mrb[0].mxu0 %v542
        %v1731 = vpop.f32.mrb[0].mxu0
        %v1732 = vadd.f32 0.0, %v1731
        %v1733 = vpop.f32.mrb[0].mxu0
        %1734 = vmatprep.mubr.f32.mxu0 %v545
        %1735 = vmatmul.mubr.f32.gmra.mrb[0].mxu0 %v544
        %v1736 = vpop.f32.mrb[0].mxu0
        %v1737 = vadd.f32 0.0, %v1736
        %v1738 = vpop.f32.mrb[0].mxu0
        %1739 = vmatprep.mubr.f32.mxu0 %v547
        %1740 = vmatmul.mubr.f32.gmra.mrb[0].mxu0 %v546
        %v1741 = vpop.f32.mrb[0].mxu0
        %v1742 = vadd.f32 0.0, %v1741
        %v1743 = vpop.f32.mrb[0].mxu0
        %1744 = vmatprep.mubr.f32.mxu0 %v549
        %1745 = vmatmul.mubr.f32.gmra.mrb[0].mxu0 %v548
        %v1746 = vpop.f32.mrb[0].mxu0
        %v1747 = vadd.f32 0.0, %v1746
        %v1748 = vpop.f32.mrb[0].mxu0
        %1749 = vmatprep.mubr.f32.mxu0 %v551
        %1750 = vmatmul.mubr.f32.gmra.mrb[0].mxu0 %v550
        %v1751 = vpop.f32.mrb[0].mxu0
        %v1752 = vadd.f32 0.0, %v1751
        %v1753 = vpop.f32.mrb[0].mxu0
        %1754 = vmatprep.mubr.f32.mxu0 %v553
        %1755 = vmatmul.mubr.f32.gmra.mrb[0].mxu0 %v552
        %v1756 = vpop.f32.mrb[0].mxu0
        %v1757 = vadd.f32 0.0, %v1756
        %v1758 = vpop.f32.mrb[0].mxu0
        %1759 = vmatprep.mubr.f32.mxu0 %v555
        %1760 = vmatmul.mubr.f32.gmra.mrb[0].mxu0 %v554
        %v1761 = vpop.f32.mrb[0].mxu0
        %v1762 = vadd.f32 0.0, %v1761
        %v1763 = vpop.f32.mrb[0].mxu0
        %1764 = vmatprep.mubr.f32.mxu0 %v557
        %1765 = vmatmul.mubr.f32.gmra.mrb[0].mxu0 %v556
        %v1766 = vpop.f32.mrb[0].mxu0
        %v1767 = vadd.f32 0.0, %v1766
        %v1768 = vpop.f32.mrb[0].mxu0
        %1769 = vmatprep.mubr.f32.mxu0 %v559
        %1770 = vmatmul.mubr.f32.gmra.mrb[0].mxu0 %v558
        %v1771 = vpop.f32.mrb[0].mxu0
        %v1772 = vadd.f32 0.0, %v1771
        %v1773 = vpop.f32.mrb[0].mxu0
        %1774 = vmatprep.mubr.f32.mxu0 %v561
        %1775 = vmatmul.mubr.f32.gmra.mrb[0].mxu0 %v560
        %v1776 = vpop.f32.mrb[0].mxu0
        %v1777 = vadd.f32 0.0, %v1776
        %v1778 = vpop.f32.mrb[0].mxu0
        %1779 = vdwg.mxu0
        %v1780 = vtanh.pop %v1622
        %v1781 = vtanh.pop %v1627
        %v1782 = vtanh.pop %v1632
        %v1783 = vtanh.pop %v1637
        %v1784 = vtanh.pop %v1642
        %v1785 = vtanh.pop %v1647
        %v1786 = vtanh.pop %v1652
        %v1787 = vtanh.pop %v1657
        %v1788 = vtanh.pop %v1662
        %v1789 = vtanh.pop %v1667
        %v1790 = vtanh.pop %v1672
        %v1791 = vtanh.pop %v1677
        %v1792 = vtanh.pop %v1682
        %v1793 = vtanh.pop %v1687
        %v1794 = vtanh.pop %v1692
        %v1795 = vtanh.pop %v1697
        %v1796 = vtanh.pop %v1702
        %v1797 = vtanh.pop %v1707
        %v1798 = vtanh.pop %v1712
        %v1799 = vtanh.pop %v1717
        %v1800 = vtanh.pop %v1722
        %v1801 = vtanh.pop %v1727
        %v1802 = vtanh.pop %v1732
        %v1803 = vtanh.pop %v1737
        %v1804 = vtanh.pop %v1742
        %v1805 = vtanh.pop %v1747
        %v1806 = vtanh.pop %v1752
        %v1807 = vtanh.pop %v1757
        %v1808 = vtanh.pop %v1762
        %v1809 = vtanh.pop %v1767
        %v1810 = vtanh.pop %v1772
        %v1811 = vtanh.pop %v1777
        %1812 = vmatprep.subr.mxu0 0.0
        %1813 = vmatpush1.msra.mxu0 %v1780
        %1814 = vmatprep.subr.mxu0 0.0
        %1815 = vmatpush1.msra.mxu0 %v1781
        %1816 = vmatprep.subr.mxu0 0.0
        %1817 = vmatpush1.msra.mxu0 %v1782
        %1818 = vmatprep.subr.mxu0 0.0
        %1819 = vmatpush1.msra.mxu0 %v1783
        %1820 = vmatprep.subr.mxu0 0.0
        %1821 = vmatpush1.msra.mxu0 %v1784
        %1822 = vmatprep.subr.mxu0 0.0
        %1823 = vmatpush1.msra.mxu0 %v1785
        %1824 = vmatprep.subr.mxu0 0.0
        %1825 = vmatpush1.msra.mxu0 %v1786
        %1826 = vmatprep.subr.mxu0 0.0
        %1827 = vmatpush1.msra.mxu0 %v1787
        %1828 = vmatprep.subr.mxu0 0.0
        %1829 = vmatpush1.msra.mxu0 %v1788
        %1830 = vmatprep.subr.mxu0 0.0
        %1831 = vmatpush1.msra.mxu0 %v1789
        %1832 = vmatprep.subr.mxu0 0.0
        %1833 = vmatpush1.msra.mxu0 %v1790
        %1834 = vmatprep.subr.mxu0 0.0
        %1835 = vmatpush1.msra.mxu0 %v1791
        %1836 = vmatprep.subr.mxu0 0.0
        %1837 = vmatpush1.msra.mxu0 %v1792
        %1838 = vmatprep.subr.mxu0 0.0
        %1839 = vmatpush1.msra.mxu0 %v1793
        %1840 = vmatprep.subr.mxu0 0.0
        %1841 = vmatpush1.msra.mxu0 %v1794
        %1842 = vmatprep.subr.mxu0 0.0
        %1843 = vmatpush1.msra.mxu0 %v1795
        %1844 = vmatprep.subr.mxu0 0.0
        %1845 = vmatpush1.msra.mxu0 %v1796
        %1846 = vmatprep.subr.mxu0 0.0
        %1847 = vmatpush1.msra.mxu0 %v1797
        %1848 = vmatprep.subr.mxu0 0.0
        %1849 = vmatpush1.msra.mxu0 %v1798
        %1850 = vmatprep.subr.mxu0 0.0
        %1851 = vmatpush1.msra.mxu0 %v1799
        %1852 = vmatprep.subr.mxu0 0.0
        %1853 = vmatpush1.msra.mxu0 %v1800
        %1854 = vmatprep.subr.mxu0 0.0
        %1855 = vmatpush1.msra.mxu0 %v1801
        %1856 = vmatprep.subr.mxu0 0.0
        %1857 = vmatpush1.msra.mxu0 %v1802
        %1858 = vmatprep.subr.mxu0 0.0
        %1859 = vmatpush1.msra.mxu0 %v1803
        %1860 = vmatprep.subr.mxu0 0.0
        %1861 = vmatpush1.msra.mxu0 %v1804
        %1862 = vmatprep.subr.mxu0 0.0
        %1863 = vmatpush1.msra.mxu0 %v1805
        %1864 = vmatprep.subr.mxu0 0.0
        %1865 = vmatpush1.msra.mxu0 %v1806
        %1866 = vmatprep.subr.mxu0 0.0
        %1867 = vmatpush1.msra.mxu0 %v1807
        %1868 = vmatprep.subr.mxu0 0.0
        %1869 = vmatpush1.msra.mxu0 %v1808
        %1870 = vmatprep.subr.mxu0 0.0
        %1871 = vmatpush1.msra.mxu0 %v1809
        %1872 = vmatprep.subr.mxu0 0.0
        %1873 = vmatpush1.msra.mxu0 %v1810
        %1874 = vmatprep.subr.mxu0 0.0
        %1875 = vmatpush1.msra.mxu0 %v1811
        %1876 = vmatprep.mubr.f32.mxu0 %v828
        %1877 = vmatmul.mubr.f32.gmra.mrb[0].mxu0 %v824
        %v1878 = vpop.f32.mrb[0].mxu0
        %v1879 = vadd.f32 0.0, %v1878
        %v1880 = vpop.f32.mrb[0].mxu0
        %1881 = vdwg.mxu0
        %1882 = vmatprep.subr.mxu0 0.0
        %1883 = vmatpush1.msra.mxu0 %v370
        %1884 = vmatprep.subr.mxu0 0.0
        %1885 = vmatpush1.msra.mxu0 %v371
        %1886 = vmatprep.subr.mxu0 0.0
        %1887 = vmatpush1.msra.mxu0 %v372
        %1888 = vmatprep.subr.mxu0 0.0
        %1889 = vmatpush1.msra.mxu0 %v373
        %1890 = vmatprep.subr.mxu0 0.0
        %1891 = vmatpush1.msra.mxu0 %v374
        %1892 = vmatprep.subr.mxu0 0.0
        %1893 = vmatpush1.msra.mxu0 %v375
        %1894 = vmatprep.subr.mxu0 0.0
        %1895 = vmatpush1.msra.mxu0 %v376
        %1896 = vmatprep.subr.mxu0 0.0
        %1897 = vmatpush1.msra.mxu0 %v377
        %1898 = vmatprep.subr.mxu0 0.0
        %1899 = vmatpush1.msra.mxu0 %v378
        %1900 = vmatprep.subr.mxu0 0.0
        %1901 = vmatpush1.msra.mxu0 %v379
        %1902 = vmatprep.subr.mxu0 0.0
        %1903 = vmatpush1.msra.mxu0 %v380
        %1904 = vmatprep.subr.mxu0 0.0
        %1905 = vmatpush1.msra.mxu0 %v381
        %1906 = vmatprep.subr.mxu0 0.0
        %1907 = vmatpush1.msra.mxu0 %v382
        %1908 = vmatprep.subr.mxu0 0.0
        %1909 = vmatpush1.msra.mxu0 %v383
        %1910 = vmatprep.subr.mxu0 0.0
        %1911 = vmatpush1.msra.mxu0 %v384
        %1912 = vmatprep.subr.mxu0 0.0
        %1913 = vmatpush1.msra.mxu0 %v385
        %1914 = vmatprep.subr.mxu0 0.0
        %1915 = vmatpush1.msra.mxu0 %v386
        %1916 = vmatprep.subr.mxu0 0.0
        %1917 = vmatpush1.msra.mxu0 %v387
        %1918 = vmatprep.subr.mxu0 0.0
        %1919 = vmatpush1.msra.mxu0 %v388
        %1920 = vmatprep.subr.mxu0 0.0
        %1921 = vmatpush1.msra.mxu0 %v389
        %1922 = vmatprep.subr.mxu0 0.0
        %1923 = vmatpush1.msra.mxu0 %v390
        %1924 = vmatprep.subr.mxu0 0.0
        %1925 = vmatpush1.msra.mxu0 %v391
        %1926 = vmatprep.subr.mxu0 0.0
        %1927 = vmatpush1.msra.mxu0 %v392
        %1928 = vmatprep.subr.mxu0 0.0
        %1929 = vmatpush1.msra.mxu0 %v393
        %1930 = vmatprep.subr.mxu0 0.0
        %1931 = vmatpush1.msra.mxu0 %v394
        %1932 = vmatprep.subr.mxu0 0.0
        %1933 = vmatpush1.msra.mxu0 %v395
        %1934 = vmatprep.subr.mxu0 0.0
        %1935 = vmatpush1.msra.mxu0 %v396
        %1936 = vmatprep.subr.mxu0 0.0
        %1937 = vmatpush1.msra.mxu0 %v397
        %1938 = vmatprep.subr.mxu0 0.0
        %1939 = vmatpush1.msra.mxu0 %v398
        %1940 = vmatprep.subr.mxu0 0.0
        %1941 = vmatpush1.msra.mxu0 %v399
        %1942 = vmatprep.subr.mxu0 0.0
        %1943 = vmatpush1.msra.mxu0 %v400
        %1944 = vmatprep.subr.mxu0 0.0
        %1945 = vmatpush1.msra.mxu0 %v401
        %1946 = vmatprep.mubr.f32.mxu0 %v499
        %1947 = vmatmul.mubr.f32.gmra.mrb[0].mxu0 %v498
        %v1948 = vpop.f32.mrb[0].mxu0
        %v1949 = vadd.f32 0.0, %v1948
        %v1950 = vpop.f32.mrb[0].mxu0
        %1951 = vmatprep.mubr.f32.mxu0 %v501
        %1952 = vmatmul.mubr.f32.gmra.mrb[0].mxu0 %v500
        %v1953 = vpop.f32.mrb[0].mxu0
        %v1954 = vadd.f32 0.0, %v1953
        %v1955 = vpop.f32.mrb[0].mxu0
        %1956 = vmatprep.mubr.f32.mxu0 %v503
        %1957 = vmatmul.mubr.f32.gmra.mrb[0].mxu0 %v502
        %v1958 = vpop.f32.mrb[0].mxu0
        %v1959 = vadd.f32 0.0, %v1958
        %v1960 = vpop.f32.mrb[0].mxu0
        %1961 = vmatprep.mubr.f32.mxu0 %v505
        %1962 = vmatmul.mubr.f32.gmra.mrb[0].mxu0 %v504
        %v1963 = vpop.f32.mrb[0].mxu0
        %v1964 = vadd.f32 0.0, %v1963
        %v1965 = vpop.f32.mrb[0].mxu0
        %1966 = vmatprep.mubr.f32.mxu0 %v507
        %1967 = vmatmul.mubr.f32.gmra.mrb[0].mxu0 %v506
        %v1968 = vpop.f32.mrb[0].mxu0
        %v1969 = vadd.f32 0.0, %v1968
        %v1970 = vpop.f32.mrb[0].mxu0
        %1971 = vmatprep.mubr.f32.mxu0 %v509
        %1972 = vmatmul.mubr.f32.gmra.mrb[0].mxu0 %v508
        %v1973 = vpop.f32.mrb[0].mxu0
        %v1974 = vadd.f32 0.0, %v1973
        %v1975 = vpop.f32.mrb[0].mxu0
        %1976 = vmatprep.mubr.f32.mxu0 %v511
        %1977 = vmatmul.mubr.f32.gmra.mrb[0].mxu0 %v510
        %v1978 = vpop.f32.mrb[0].mxu0
        %v1979 = vadd.f32 0.0, %v1978
        %v1980 = vpop.f32.mrb[0].mxu0
        %1981 = vmatprep.mubr.f32.mxu0 %v513
        %1982 = vmatmul.mubr.f32.gmra.mrb[0].mxu0 %v512
        %v1983 = vpop.f32.mrb[0].mxu0
        %v1984 = vadd.f32 0.0, %v1983
        %v1985 = vpop.f32.mrb[0].mxu0
        %1986 = vmatprep.mubr.f32.mxu0 %v515
        %1987 = vmatmul.mubr.f32.gmra.mrb[0].mxu0 %v514
        %v1988 = vpop.f32.mrb[0].mxu0
        %v1989 = vadd.f32 0.0, %v1988
        %v1990 = vpop.f32.mrb[0].mxu0
        %1991 = vmatprep.mubr.f32.mxu0 %v517
        %1992 = vmatmul.mubr.f32.gmra.mrb[0].mxu0 %v516
        %v1993 = vpop.f32.mrb[0].mxu0
        %v1994 = vadd.f32 0.0, %v1993
        %v1995 = vpop.f32.mrb[0].mxu0
        %1996 = vmatprep.mubr.f32.mxu0 %v519
        %1997 = vmatmul.mubr.f32.gmra.mrb[0].mxu0 %v518
        %v1998 = vpop.f32.mrb[0].mxu0
        %v1999 = vadd.f32 0.0, %v1998
        %v2000 = vpop.f32.mrb[0].mxu0
        %2001 = vmatprep.mubr.f32.mxu0 %v521
        %2002 = vmatmul.mubr.f32.gmra.mrb[0].mxu0 %v520
        %v2003 = vpop.f32.mrb[0].mxu0
        %v2004 = vadd.f32 0.0, %v2003
        %v2005 = vpop.f32.mrb[0].mxu0
        %2006 = vmatprep.mubr.f32.mxu0 %v523
        %2007 = vmatmul.mubr.f32.gmra.mrb[0].mxu0 %v522
        %v2008 = vpop.f32.mrb[0].mxu0
        %v2009 = vadd.f32 0.0, %v2008
        %v2010 = vpop.f32.mrb[0].mxu0
        %2011 = vmatprep.mubr.f32.mxu0 %v525
        %2012 = vmatmul.mubr.f32.gmra.mrb[0].mxu0 %v524
        %v2013 = vpop.f32.mrb[0].mxu0
        %v2014 = vadd.f32 0.0, %v2013
        %v2015 = vpop.f32.mrb[0].mxu0
        %2016 = vmatprep.mubr.f32.mxu0 %v527
        %2017 = vmatmul.mubr.f32.gmra.mrb[0].mxu0 %v526
        %v2018 = vpop.f32.mrb[0].mxu0
        %v2019 = vadd.f32 0.0, %v2018
        %v2020 = vpop.f32.mrb[0].mxu0
        %2021 = vmatprep.mubr.f32.mxu0 %v529
        %2022 = vmatmul.mubr.f32.gmra.mrb[0].mxu0 %v528
        %v2023 = vpop.f32.mrb[0].mxu0
        %v2024 = vadd.f32 0.0, %v2023
        %v2025 = vpop.f32.mrb[0].mxu0
        %2026 = vmatprep.mubr.f32.mxu0 %v531
        %2027 = vmatmul.mubr.f32.gmra.mrb[0].mxu0 %v530
        %v2028 = vpop.f32.mrb[0].mxu0
        %v2029 = vadd.f32 0.0, %v2028
        %v2030 = vpop.f32.mrb[0].mxu0
        %2031 = vmatprep.mubr.f32.mxu0 %v533
        %2032 = vmatmul.mubr.f32.gmra.mrb[0].mxu0 %v532
        %v2033 = vpop.f32.mrb[0].mxu0
        %v2034 = vadd.f32 0.0, %v2033
        %v2035 = vpop.f32.mrb[0].mxu0
        %2036 = vmatprep.mubr.f32.mxu0 %v535
        %2037 = vmatmul.mubr.f32.gmra.mrb[0].mxu0 %v534
        %v2038 = vpop.f32.mrb[0].mxu0
        %v2039 = vadd.f32 0.0, %v2038
        %v2040 = vpop.f32.mrb[0].mxu0
        %2041 = vmatprep.mubr.f32.mxu0 %v537
        %2042 = vmatmul.mubr.f32.gmra.mrb[0].mxu0 %v536
        %v2043 = vpop.f32.mrb[0].mxu0
        %v2044 = vadd.f32 0.0, %v2043
        %v2045 = vpop.f32.mrb[0].mxu0
        %2046 = vmatprep.mubr.f32.mxu0 %v539
        %2047 = vmatmul.mubr.f32.gmra.mrb[0].mxu0 %v538
        %v2048 = vpop.f32.mrb[0].mxu0
        %v2049 = vadd.f32 0.0, %v2048
        %v2050 = vpop.f32.mrb[0].mxu0
        %2051 = vmatprep.mubr.f32.mxu0 %v541
        %2052 = vmatmul.mubr.f32.gmra.mrb[0].mxu0 %v540
        %v2053 = vpop.f32.mrb[0].mxu0
        %v2054 = vadd.f32 0.0, %v2053
        %v2055 = vpop.f32.mrb[0].mxu0
        %2056 = vmatprep.mubr.f32.mxu0 %v543
        %2057 = vmatmul.mubr.f32.gmra.mrb[0].mxu0 %v542
        %v2058 = vpop.f32.mrb[0].mxu0
        %v2059 = vadd.f32 0.0, %v2058
        %v2060 = vpop.f32.mrb[0].mxu0
        %2061 = vmatprep.mubr.f32.mxu0 %v545
        %2062 = vmatmul.mubr.f32.gmra.mrb[0].mxu0 %v544
        %v2063 = vpop.f32.mrb[0].mxu0
        %v2064 = vadd.f32 0.0, %v2063
        %v2065 = vpop.f32.mrb[0].mxu0
        %2066 = vmatprep.mubr.f32.mxu0 %v547
        %2067 = vmatmul.mubr.f32.gmra.mrb[0].mxu0 %v546
        %v2068 = vpop.f32.mrb[0].mxu0
        %v2069 = vadd.f32 0.0, %v2068
        %v2070 = vpop.f32.mrb[0].mxu0
        %2071 = vmatprep.mubr.f32.mxu0 %v549
        %2072 = vmatmul.mubr.f32.gmra.mrb[0].mxu0 %v548
        %v2073 = vpop.f32.mrb[0].mxu0
        %v2074 = vadd.f32 0.0, %v2073
        %v2075 = vpop.f32.mrb[0].mxu0
        %2076 = vmatprep.mubr.f32.mxu0 %v551
        %2077 = vmatmul.mubr.f32.gmra.mrb[0].mxu0 %v550
        %v2078 = vpop.f32.mrb[0].mxu0
        %v2079 = vadd.f32 0.0, %v2078
        %v2080 = vpop.f32.mrb[0].mxu0
        %2081 = vmatprep.mubr.f32.mxu0 %v553
        %2082 = vmatmul.mubr.f32.gmra.mrb[0].mxu0 %v552
        %v2083 = vpop.f32.mrb[0].mxu0
        %v2084 = vadd.f32 0.0, %v2083
        %v2085 = vpop.f32.mrb[0].mxu0
        %2086 = vmatprep.mubr.f32.mxu0 %v555
        %2087 = vmatmul.mubr.f32.gmra.mrb[0].mxu0 %v554
        %v2088 = vpop.f32.mrb[0].mxu0
        %v2089 = vadd.f32 0.0, %v2088
        %v2090 = vpop.f32.mrb[0].mxu0
        %2091 = vmatprep.mubr.f32.mxu0 %v557
        %2092 = vmatmul.mubr.f32.gmra.mrb[0].mxu0 %v556
        %v2093 = vpop.f32.mrb[0].mxu0
        %v2094 = vadd.f32 0.0, %v2093
        %v2095 = vpop.f32.mrb[0].mxu0
        %2096 = vmatprep.mubr.f32.mxu0 %v559
        %2097 = vmatmul.mubr.f32.gmra.mrb[0].mxu0 %v558
        %v2098 = vpop.f32.mrb[0].mxu0
        %v2099 = vadd.f32 0.0, %v2098
        %v2100 = vpop.f32.mrb[0].mxu0
        %2101 = vmatprep.mubr.f32.mxu0 %v561
        %2102 = vmatmul.mubr.f32.gmra.mrb[0].mxu0 %v560
        %v2103 = vpop.f32.mrb[0].mxu0
        %v2104 = vadd.f32 0.0, %v2103
        %v2105 = vpop.f32.mrb[0].mxu0
        %2106 = vdwg.mxu0
        %v2107 = vtanh.pop %v1949
        %v2108 = vtanh.pop %v1954
        %v2109 = vtanh.pop %v1959
        %v2110 = vtanh.pop %v1964
        %v2111 = vtanh.pop %v1969
        %v2112 = vtanh.pop %v1974
        %v2113 = vtanh.pop %v1979
        %v2114 = vtanh.pop %v1984
        %v2115 = vtanh.pop %v1989
        %v2116 = vtanh.pop %v1994
        %v2117 = vtanh.pop %v1999
        %v2118 = vtanh.pop %v2004
        %v2119 = vtanh.pop %v2009
        %v2120 = vtanh.pop %v2014
        %v2121 = vtanh.pop %v2019
        %v2122 = vtanh.pop %v2024
        %v2123 = vtanh.pop %v2029
        %v2124 = vtanh.pop %v2034
        %v2125 = vtanh.pop %v2039
        %v2126 = vtanh.pop %v2044
        %v2127 = vtanh.pop %v2049
        %v2128 = vtanh.pop %v2054
        %v2129 = vtanh.pop %v2059
        %v2130 = vtanh.pop %v2064
        %v2131 = vtanh.pop %v2069
        %v2132 = vtanh.pop %v2074
        %v2133 = vtanh.pop %v2079
        %v2134 = vtanh.pop %v2084
        %v2135 = vtanh.pop %v2089
        %v2136 = vtanh.pop %v2094
        %v2137 = vtanh.pop %v2099
        %v2138 = vtanh.pop %v2104
        %2139 = vmatprep.subr.mxu0 0.0
        %2140 = vmatpush1.msra.mxu0 %v2107
        %2141 = vmatprep.subr.mxu0 0.0
        %2142 = vmatpush1.msra.mxu0 %v2108
        %2143 = vmatprep.subr.mxu0 0.0
        %2144 = vmatpush1.msra.mxu0 %v2109
        %2145 = vmatprep.subr.mxu0 0.0
        %2146 = vmatpush1.msra.mxu0 %v2110
        %2147 = vmatprep.subr.mxu0 0.0
        %2148 = vmatpush1.msra.mxu0 %v2111
        %2149 = vmatprep.subr.mxu0 0.0
        %2150 = vmatpush1.msra.mxu0 %v2112
        %2151 = vmatprep.subr.mxu0 0.0
        %2152 = vmatpush1.msra.mxu0 %v2113
        %2153 = vmatprep.subr.mxu0 0.0
        %2154 = vmatpush1.msra.mxu0 %v2114
        %2155 = vmatprep.subr.mxu0 0.0
        %2156 = vmatpush1.msra.mxu0 %v2115
        %2157 = vmatprep.subr.mxu0 0.0
        %2158 = vmatpush1.msra.mxu0 %v2116
        %2159 = vmatprep.subr.mxu0 0.0
        %2160 = vmatpush1.msra.mxu0 %v2117
        %2161 = vmatprep.subr.mxu0 0.0
        %2162 = vmatpush1.msra.mxu0 %v2118
        %2163 = vmatprep.subr.mxu0 0.0
        %2164 = vmatpush1.msra.mxu0 %v2119
        %2165 = vmatprep.subr.mxu0 0.0
        %2166 = vmatpush1.msra.mxu0 %v2120
        %2167 = vmatprep.subr.mxu0 0.0
        %2168 = vmatpush1.msra.mxu0 %v2121
        %2169 = vmatprep.subr.mxu0 0.0
        %2170 = vmatpush1.msra.mxu0 %v2122
        %2171 = vmatprep.subr.mxu0 0.0
        %2172 = vmatpush1.msra.mxu0 %v2123
        %2173 = vmatprep.subr.mxu0 0.0
        %2174 = vmatpush1.msra.mxu0 %v2124
        %2175 = vmatprep.subr.mxu0 0.0
        %2176 = vmatpush1.msra.mxu0 %v2125
        %2177 = vmatprep.subr.mxu0 0.0
        %2178 = vmatpush1.msra.mxu0 %v2126
        %2179 = vmatprep.subr.mxu0 0.0
        %2180 = vmatpush1.msra.mxu0 %v2127
        %2181 = vmatprep.subr.mxu0 0.0
        %2182 = vmatpush1.msra.mxu0 %v2128
        %2183 = vmatprep.subr.mxu0 0.0
        %2184 = vmatpush1.msra.mxu0 %v2129
        %2185 = vmatprep.subr.mxu0 0.0
        %2186 = vmatpush1.msra.mxu0 %v2130
        %2187 = vmatprep.subr.mxu0 0.0
        %2188 = vmatpush1.msra.mxu0 %v2131
        %2189 = vmatprep.subr.mxu0 0.0
        %2190 = vmatpush1.msra.mxu0 %v2132
        %2191 = vmatprep.subr.mxu0 0.0
        %2192 = vmatpush1.msra.mxu0 %v2133
        %2193 = vmatprep.subr.mxu0 0.0
        %2194 = vmatpush1.msra.mxu0 %v2134
        %2195 = vmatprep.subr.mxu0 0.0
        %2196 = vmatpush1.msra.mxu0 %v2135
        %2197 = vmatprep.subr.mxu0 0.0
        %2198 = vmatpush1.msra.mxu0 %v2136
        %2199 = vmatprep.subr.mxu0 0.0
        %2200 = vmatpush1.msra.mxu0 %v2137
        %2201 = vmatprep.subr.mxu0 0.0
        %2202 = vmatpush1.msra.mxu0 %v2138
        %2203 = vmatprep.mubr.f32.mxu0 %v828
        %2204 = vmatmul.mubr.f32.gmra.mrb[0].mxu0 %v824
        %v2205 = vpop.f32.mrb[0].mxu0
        %v2206 = vadd.f32 0.0, %v2205
        %v2207 = vpop.f32.mrb[0].mxu0
        %2208 = vdwg.mxu0
        %2209 = vmatprep.subr.mxu0 0.0
        %2210 = vmatpush1.msra.mxu0 %v402
        %2211 = vmatprep.subr.mxu0 0.0
        %2212 = vmatpush1.msra.mxu0 %v403
        %2213 = vmatprep.subr.mxu0 0.0
        %2214 = vmatpush1.msra.mxu0 %v404
        %2215 = vmatprep.subr.mxu0 0.0
        %2216 = vmatpush1.msra.mxu0 %v405
        %2217 = vmatprep.subr.mxu0 0.0
        %2218 = vmatpush1.msra.mxu0 %v406
        %2219 = vmatprep.subr.mxu0 0.0
        %2220 = vmatpush1.msra.mxu0 %v407
        %2221 = vmatprep.subr.mxu0 0.0
        %2222 = vmatpush1.msra.mxu0 %v408
        %2223 = vmatprep.subr.mxu0 0.0
        %2224 = vmatpush1.msra.mxu0 %v409
        %2225 = vmatprep.subr.mxu0 0.0
        %2226 = vmatpush1.msra.mxu0 %v410
        %2227 = vmatprep.subr.mxu0 0.0
        %2228 = vmatpush1.msra.mxu0 %v411
        %2229 = vmatprep.subr.mxu0 0.0
        %2230 = vmatpush1.msra.mxu0 %v412
        %2231 = vmatprep.subr.mxu0 0.0
        %2232 = vmatpush1.msra.mxu0 %v413
        %2233 = vmatprep.subr.mxu0 0.0
        %2234 = vmatpush1.msra.mxu0 %v414
        %2235 = vmatprep.subr.mxu0 0.0
        %2236 = vmatpush1.msra.mxu0 %v415
        %2237 = vmatprep.subr.mxu0 0.0
        %2238 = vmatpush1.msra.mxu0 %v416
        %2239 = vmatprep.subr.mxu0 0.0
        %2240 = vmatpush1.msra.mxu0 %v417
        %2241 = vmatprep.subr.mxu0 0.0
        %2242 = vmatpush1.msra.mxu0 %v418
        %2243 = vmatprep.subr.mxu0 0.0
        %2244 = vmatpush1.msra.mxu0 %v419
        %2245 = vmatprep.subr.mxu0 0.0
        %2246 = vmatpush1.msra.mxu0 %v420
        %2247 = vmatprep.subr.mxu0 0.0
        %2248 = vmatpush1.msra.mxu0 %v421
        %2249 = vmatprep.subr.mxu0 0.0
        %2250 = vmatpush1.msra.mxu0 %v422
        %2251 = vmatprep.subr.mxu0 0.0
        %2252 = vmatpush1.msra.mxu0 %v423
        %2253 = vmatprep.subr.mxu0 0.0
        %2254 = vmatpush1.msra.mxu0 %v424
        %2255 = vmatprep.subr.mxu0 0.0
        %2256 = vmatpush1.msra.mxu0 %v425
        %2257 = vmatprep.subr.mxu0 0.0
        %2258 = vmatpush1.msra.mxu0 %v426
        %2259 = vmatprep.subr.mxu0 0.0
        %2260 = vmatpush1.msra.mxu0 %v427
        %2261 = vmatprep.subr.mxu0 0.0
        %2262 = vmatpush1.msra.mxu0 %v428
        %2263 = vmatprep.subr.mxu0 0.0
        %2264 = vmatpush1.msra.mxu0 %v429
        %2265 = vmatprep.subr.mxu0 0.0
        %2266 = vmatpush1.msra.mxu0 %v430
        %2267 = vmatprep.subr.mxu0 0.0
        %2268 = vmatpush1.msra.mxu0 %v431
        %2269 = vmatprep.subr.mxu0 0.0
        %2270 = vmatpush1.msra.mxu0 %v432
        %2271 = vmatprep.subr.mxu0 0.0
        %2272 = vmatpush1.msra.mxu0 %v433
        %2273 = vmatprep.mubr.f32.mxu0 %v499
        %2274 = vmatmul.mubr.f32.gmra.mrb[0].mxu0 %v498
        %v2275 = vpop.f32.mrb[0].mxu0
        %v2276 = vadd.f32 0.0, %v2275
        %v2277 = vpop.f32.mrb[0].mxu0
        %2278 = vmatprep.mubr.f32.mxu0 %v501
        %2279 = vmatmul.mubr.f32.gmra.mrb[0].mxu0 %v500
        %v2280 = vpop.f32.mrb[0].mxu0
        %v2281 = vadd.f32 0.0, %v2280
        %v2282 = vpop.f32.mrb[0].mxu0
        %2283 = vmatprep.mubr.f32.mxu0 %v503
        %2284 = vmatmul.mubr.f32.gmra.mrb[0].mxu0 %v502
        %v2285 = vpop.f32.mrb[0].mxu0
        %v2286 = vadd.f32 0.0, %v2285
        %v2287 = vpop.f32.mrb[0].mxu0
        %2288 = vmatprep.mubr.f32.mxu0 %v505
        %2289 = vmatmul.mubr.f32.gmra.mrb[0].mxu0 %v504
        %v2290 = vpop.f32.mrb[0].mxu0
        %v2291 = vadd.f32 0.0, %v2290
        %v2292 = vpop.f32.mrb[0].mxu0
        %2293 = vmatprep.mubr.f32.mxu0 %v507
        %2294 = vmatmul.mubr.f32.gmra.mrb[0].mxu0 %v506
        %v2295 = vpop.f32.mrb[0].mxu0
        %v2296 = vadd.f32 0.0, %v2295
        %v2297 = vpop.f32.mrb[0].mxu0
        %2298 = vmatprep.mubr.f32.mxu0 %v509
        %2299 = vmatmul.mubr.f32.gmra.mrb[0].mxu0 %v508
        %v2300 = vpop.f32.mrb[0].mxu0
        %v2301 = vadd.f32 0.0, %v2300
        %v2302 = vpop.f32.mrb[0].mxu0
        %2303 = vmatprep.mubr.f32.mxu0 %v511
        %2304 = vmatmul.mubr.f32.gmra.mrb[0].mxu0 %v510
        %v2305 = vpop.f32.mrb[0].mxu0
        %v2306 = vadd.f32 0.0, %v2305
        %v2307 = vpop.f32.mrb[0].mxu0
        %2308 = vmatprep.mubr.f32.mxu0 %v513
        %2309 = vmatmul.mubr.f32.gmra.mrb[0].mxu0 %v512
        %v2310 = vpop.f32.mrb[0].mxu0
        %v2311 = vadd.f32 0.0, %v2310
        %v2312 = vpop.f32.mrb[0].mxu0
        %2313 = vmatprep.mubr.f32.mxu0 %v515
        %2314 = vmatmul.mubr.f32.gmra.mrb[0].mxu0 %v514
        %v2315 = vpop.f32.mrb[0].mxu0
        %v2316 = vadd.f32 0.0, %v2315
        %v2317 = vpop.f32.mrb[0].mxu0
        %2318 = vmatprep.mubr.f32.mxu0 %v517
        %2319 = vmatmul.mubr.f32.gmra.mrb[0].mxu0 %v516
        %v2320 = vpop.f32.mrb[0].mxu0
        %v2321 = vadd.f32 0.0, %v2320
        %v2322 = vpop.f32.mrb[0].mxu0
        %2323 = vmatprep.mubr.f32.mxu0 %v519
        %2324 = vmatmul.mubr.f32.gmra.mrb[0].mxu0 %v518
        %v2325 = vpop.f32.mrb[0].mxu0
        %v2326 = vadd.f32 0.0, %v2325
        %v2327 = vpop.f32.mrb[0].mxu0
        %2328 = vmatprep.mubr.f32.mxu0 %v521
        %2329 = vmatmul.mubr.f32.gmra.mrb[0].mxu0 %v520
        %v2330 = vpop.f32.mrb[0].mxu0
        %v2331 = vadd.f32 0.0, %v2330
        %v2332 = vpop.f32.mrb[0].mxu0
        %2333 = vmatprep.mubr.f32.mxu0 %v523
        %2334 = vmatmul.mubr.f32.gmra.mrb[0].mxu0 %v522
        %v2335 = vpop.f32.mrb[0].mxu0
        %v2336 = vadd.f32 0.0, %v2335
        %v2337 = vpop.f32.mrb[0].mxu0
        %2338 = vmatprep.mubr.f32.mxu0 %v525
        %2339 = vmatmul.mubr.f32.gmra.mrb[0].mxu0 %v524
        %v2340 = vpop.f32.mrb[0].mxu0
        %v2341 = vadd.f32 0.0, %v2340
        %v2342 = vpop.f32.mrb[0].mxu0
        %2343 = vmatprep.mubr.f32.mxu0 %v527
        %2344 = vmatmul.mubr.f32.gmra.mrb[0].mxu0 %v526
        %v2345 = vpop.f32.mrb[0].mxu0
        %v2346 = vadd.f32 0.0, %v2345
        %v2347 = vpop.f32.mrb[0].mxu0
        %2348 = vmatprep.mubr.f32.mxu0 %v529
        %2349 = vmatmul.mubr.f32.gmra.mrb[0].mxu0 %v528
        %v2350 = vpop.f32.mrb[0].mxu0
        %v2351 = vadd.f32 0.0, %v2350
        %v2352 = vpop.f32.mrb[0].mxu0
        %2353 = vmatprep.mubr.f32.mxu0 %v531
        %2354 = vmatmul.mubr.f32.gmra.mrb[0].mxu0 %v530
        %v2355 = vpop.f32.mrb[0].mxu0
        %v2356 = vadd.f32 0.0, %v2355
        %v2357 = vpop.f32.mrb[0].mxu0
        %2358 = vmatprep.mubr.f32.mxu0 %v533
        %2359 = vmatmul.mubr.f32.gmra.mrb[0].mxu0 %v532
        %v2360 = vpop.f32.mrb[0].mxu0
        %v2361 = vadd.f32 0.0, %v2360
        %v2362 = vpop.f32.mrb[0].mxu0
        %2363 = vmatprep.mubr.f32.mxu0 %v535
        %2364 = vmatmul.mubr.f32.gmra.mrb[0].mxu0 %v534
        %v2365 = vpop.f32.mrb[0].mxu0
        %v2366 = vadd.f32 0.0, %v2365
        %v2367 = vpop.f32.mrb[0].mxu0
        %2368 = vmatprep.mubr.f32.mxu0 %v537
        %2369 = vmatmul.mubr.f32.gmra.mrb[0].mxu0 %v536
        %v2370 = vpop.f32.mrb[0].mxu0
        %v2371 = vadd.f32 0.0, %v2370
        %v2372 = vpop.f32.mrb[0].mxu0
        %2373 = vmatprep.mubr.f32.mxu0 %v539
        %2374 = vmatmul.mubr.f32.gmra.mrb[0].mxu0 %v538
        %v2375 = vpop.f32.mrb[0].mxu0
        %v2376 = vadd.f32 0.0, %v2375
        %v2377 = vpop.f32.mrb[0].mxu0
        %2378 = vmatprep.mubr.f32.mxu0 %v541
        %2379 = vmatmul.mubr.f32.gmra.mrb[0].mxu0 %v540
        %v2380 = vpop.f32.mrb[0].mxu0
        %v2381 = vadd.f32 0.0, %v2380
        %v2382 = vpop.f32.mrb[0].mxu0
        %2383 = vmatprep.mubr.f32.mxu0 %v543
        %2384 = vmatmul.mubr.f32.gmra.mrb[0].mxu0 %v542
        %v2385 = vpop.f32.mrb[0].mxu0
        %v2386 = vadd.f32 0.0, %v2385
        %v2387 = vpop.f32.mrb[0].mxu0
        %2388 = vmatprep.mubr.f32.mxu0 %v545
        %2389 = vmatmul.mubr.f32.gmra.mrb[0].mxu0 %v544
        %v2390 = vpop.f32.mrb[0].mxu0
        %v2391 = vadd.f32 0.0, %v2390
        %v2392 = vpop.f32.mrb[0].mxu0
        %2393 = vmatprep.mubr.f32.mxu0 %v547
        %2394 = vmatmul.mubr.f32.gmra.mrb[0].mxu0 %v546
        %v2395 = vpop.f32.mrb[0].mxu0
        %v2396 = vadd.f32 0.0, %v2395
        %v2397 = vpop.f32.mrb[0].mxu0
        %2398 = vmatprep.mubr.f32.mxu0 %v549
        %2399 = vmatmul.mubr.f32.gmra.mrb[0].mxu0 %v548
        %v2400 = vpop.f32.mrb[0].mxu0
        %v2401 = vadd.f32 0.0, %v2400
        %v2402 = vpop.f32.mrb[0].mxu0
        %2403 = vmatprep.mubr.f32.mxu0 %v551
        %2404 = vmatmul.mubr.f32.gmra.mrb[0].mxu0 %v550
        %v2405 = vpop.f32.mrb[0].mxu0
        %v2406 = vadd.f32 0.0, %v2405
        %v2407 = vpop.f32.mrb[0].mxu0
        %2408 = vmatprep.mubr.f32.mxu0 %v553
        %2409 = vmatmul.mubr.f32.gmra.mrb[0].mxu0 %v552
        %v2410 = vpop.f32.mrb[0].mxu0
        %v2411 = vadd.f32 0.0, %v2410
        %v2412 = vpop.f32.mrb[0].mxu0
        %2413 = vmatprep.mubr.f32.mxu0 %v555
        %2414 = vmatmul.mubr.f32.gmra.mrb[0].mxu0 %v554
        %v2415 = vpop.f32.mrb[0].mxu0
        %v2416 = vadd.f32 0.0, %v2415
        %v2417 = vpop.f32.mrb[0].mxu0
        %2418 = vmatprep.mubr.f32.mxu0 %v557
        %2419 = vmatmul.mubr.f32.gmra.mrb[0].mxu0 %v556
        %v2420 = vpop.f32.mrb[0].mxu0
        %v2421 = vadd.f32 0.0, %v2420
        %v2422 = vpop.f32.mrb[0].mxu0
        %2423 = vmatprep.mubr.f32.mxu0 %v559
        %2424 = vmatmul.mubr.f32.gmra.mrb[0].mxu0 %v558
        %v2425 = vpop.f32.mrb[0].mxu0
        %v2426 = vadd.f32 0.0, %v2425
        %v2427 = vpop.f32.mrb[0].mxu0
        %2428 = vmatprep.mubr.f32.mxu0 %v561
        %2429 = vmatmul.mubr.f32.gmra.mrb[0].mxu0 %v560
        %v2430 = vpop.f32.mrb[0].mxu0
        %v2431 = vadd.f32 0.0, %v2430
        %v2432 = vpop.f32.mrb[0].mxu0
        %2433 = vdwg.mxu0
        %v2434 = vtanh.pop %v2276
        %v2435 = vtanh.pop %v2281
        %v2436 = vtanh.pop %v2286
        %v2437 = vtanh.pop %v2291
        %v2438 = vtanh.pop %v2296
        %v2439 = vtanh.pop %v2301
        %v2440 = vtanh.pop %v2306
        %v2441 = vtanh.pop %v2311
        %v2442 = vtanh.pop %v2316
        %v2443 = vtanh.pop %v2321
        %v2444 = vtanh.pop %v2326
        %v2445 = vtanh.pop %v2331
        %v2446 = vtanh.pop %v2336
        %v2447 = vtanh.pop %v2341
        %v2448 = vtanh.pop %v2346
        %v2449 = vtanh.pop %v2351
        %v2450 = vtanh.pop %v2356
        %v2451 = vtanh.pop %v2361
        %v2452 = vtanh.pop %v2366
        %v2453 = vtanh.pop %v2371
        %v2454 = vtanh.pop %v2376
        %v2455 = vtanh.pop %v2381
        %v2456 = vtanh.pop %v2386
        %v2457 = vtanh.pop %v2391
        %v2458 = vtanh.pop %v2396
        %v2459 = vtanh.pop %v2401
        %v2460 = vtanh.pop %v2406
        %v2461 = vtanh.pop %v2411
        %v2462 = vtanh.pop %v2416
        %v2463 = vtanh.pop %v2421
        %v2464 = vtanh.pop %v2426
        %v2465 = vtanh.pop %v2431
        %2466 = vmatprep.subr.mxu0 0.0
        %2467 = vmatpush1.msra.mxu0 %v2434
        %2468 = vmatprep.subr.mxu0 0.0
        %2469 = vmatpush1.msra.mxu0 %v2435
        %2470 = vmatprep.subr.mxu0 0.0
        %2471 = vmatpush1.msra.mxu0 %v2436
        %2472 = vmatprep.subr.mxu0 0.0
        %2473 = vmatpush1.msra.mxu0 %v2437
        %2474 = vmatprep.subr.mxu0 0.0
        %2475 = vmatpush1.msra.mxu0 %v2438
        %2476 = vmatprep.subr.mxu0 0.0
        %2477 = vmatpush1.msra.mxu0 %v2439
        %2478 = vmatprep.subr.mxu0 0.0
        %2479 = vmatpush1.msra.mxu0 %v2440
        %2480 = vmatprep.subr.mxu0 0.0
        %2481 = vmatpush1.msra.mxu0 %v2441
        %2482 = vmatprep.subr.mxu0 0.0
        %2483 = vmatpush1.msra.mxu0 %v2442
        %2484 = vmatprep.subr.mxu0 0.0
        %2485 = vmatpush1.msra.mxu0 %v2443
        %2486 = vmatprep.subr.mxu0 0.0
        %2487 = vmatpush1.msra.mxu0 %v2444
        %2488 = vmatprep.subr.mxu0 0.0
        %2489 = vmatpush1.msra.mxu0 %v2445
        %2490 = vmatprep.subr.mxu0 0.0
        %2491 = vmatpush1.msra.mxu0 %v2446
        %2492 = vmatprep.subr.mxu0 0.0
        %2493 = vmatpush1.msra.mxu0 %v2447
        %2494 = vmatprep.subr.mxu0 0.0
        %2495 = vmatpush1.msra.mxu0 %v2448
        %2496 = vmatprep.subr.mxu0 0.0
        %2497 = vmatpush1.msra.mxu0 %v2449
        %2498 = vmatprep.subr.mxu0 0.0
        %2499 = vmatpush1.msra.mxu0 %v2450
        %2500 = vmatprep.subr.mxu0 0.0
        %2501 = vmatpush1.msra.mxu0 %v2451
        %2502 = vmatprep.subr.mxu0 0.0
        %2503 = vmatpush1.msra.mxu0 %v2452
        %2504 = vmatprep.subr.mxu0 0.0
        %2505 = vmatpush1.msra.mxu0 %v2453
        %2506 = vmatprep.subr.mxu0 0.0
        %2507 = vmatpush1.msra.mxu0 %v2454
        %2508 = vmatprep.subr.mxu0 0.0
        %2509 = vmatpush1.msra.mxu0 %v2455
        %2510 = vmatprep.subr.mxu0 0.0
        %2511 = vmatpush1.msra.mxu0 %v2456
        %2512 = vmatprep.subr.mxu0 0.0
        %2513 = vmatpush1.msra.mxu0 %v2457
        %2514 = vmatprep.subr.mxu0 0.0
        %2515 = vmatpush1.msra.mxu0 %v2458
        %2516 = vmatprep.subr.mxu0 0.0
        %2517 = vmatpush1.msra.mxu0 %v2459
        %2518 = vmatprep.subr.mxu0 0.0
        %2519 = vmatpush1.msra.mxu0 %v2460
        %2520 = vmatprep.subr.mxu0 0.0
        %2521 = vmatpush1.msra.mxu0 %v2461
        %2522 = vmatprep.subr.mxu0 0.0
        %2523 = vmatpush1.msra.mxu0 %v2462
        %2524 = vmatprep.subr.mxu0 0.0
        %2525 = vmatpush1.msra.mxu0 %v2463
        %2526 = vmatprep.subr.mxu0 0.0
        %2527 = vmatpush1.msra.mxu0 %v2464
        %2528 = vmatprep.subr.mxu0 0.0
        %2529 = vmatpush1.msra.mxu0 %v2465
        %2530 = vmatprep.mubr.f32.mxu0 %v828
        %2531 = vmatmul.mubr.f32.gmra.mrb[0].mxu0 %v824
        %v2532 = vpop.f32.mrb[0].mxu0
        %v2533 = vadd.f32 0.0, %v2532
        %v2534 = vpop.f32.mrb[0].mxu0
        %2535 = vdwg.mxu0
        %2536 = vmatprep.subr.mxu0 0.0
        %2537 = vmatpush1.msra.mxu0 %v434
        %2538 = vmatprep.subr.mxu0 0.0
        %2539 = vmatpush1.msra.mxu0 %v435
        %2540 = vmatprep.subr.mxu0 0.0
        %2541 = vmatpush1.msra.mxu0 %v436
        %2542 = vmatprep.subr.mxu0 0.0
        %2543 = vmatpush1.msra.mxu0 %v437
        %2544 = vmatprep.subr.mxu0 0.0
        %2545 = vmatpush1.msra.mxu0 %v438
        %2546 = vmatprep.subr.mxu0 0.0
        %2547 = vmatpush1.msra.mxu0 %v439
        %2548 = vmatprep.subr.mxu0 0.0
        %2549 = vmatpush1.msra.mxu0 %v440
        %2550 = vmatprep.subr.mxu0 0.0
        %2551 = vmatpush1.msra.mxu0 %v441
        %2552 = vmatprep.subr.mxu0 0.0
        %2553 = vmatpush1.msra.mxu0 %v442
        %2554 = vmatprep.subr.mxu0 0.0
        %2555 = vmatpush1.msra.mxu0 %v443
        %2556 = vmatprep.subr.mxu0 0.0
        %2557 = vmatpush1.msra.mxu0 %v444
        %2558 = vmatprep.subr.mxu0 0.0
        %2559 = vmatpush1.msra.mxu0 %v445
        %2560 = vmatprep.subr.mxu0 0.0
        %2561 = vmatpush1.msra.mxu0 %v446
        %2562 = vmatprep.subr.mxu0 0.0
        %2563 = vmatpush1.msra.mxu0 %v447
        %2564 = vmatprep.subr.mxu0 0.0
        %2565 = vmatpush1.msra.mxu0 %v448
        %2566 = vmatprep.subr.mxu0 0.0
        %2567 = vmatpush1.msra.mxu0 %v449
        %2568 = vmatprep.subr.mxu0 0.0
        %2569 = vmatpush1.msra.mxu0 %v450
        %2570 = vmatprep.subr.mxu0 0.0
        %2571 = vmatpush1.msra.mxu0 %v451
        %2572 = vmatprep.subr.mxu0 0.0
        %2573 = vmatpush1.msra.mxu0 %v452
        %2574 = vmatprep.subr.mxu0 0.0
        %2575 = vmatpush1.msra.mxu0 %v453
        %2576 = vmatprep.subr.mxu0 0.0
        %2577 = vmatpush1.msra.mxu0 %v454
        %2578 = vmatprep.subr.mxu0 0.0
        %2579 = vmatpush1.msra.mxu0 %v455
        %2580 = vmatprep.subr.mxu0 0.0
        %2581 = vmatpush1.msra.mxu0 %v456
        %2582 = vmatprep.subr.mxu0 0.0
        %2583 = vmatpush1.msra.mxu0 %v457
        %2584 = vmatprep.subr.mxu0 0.0
        %2585 = vmatpush1.msra.mxu0 %v458
        %2586 = vmatprep.subr.mxu0 0.0
        %2587 = vmatpush1.msra.mxu0 %v459
        %2588 = vmatprep.subr.mxu0 0.0
        %2589 = vmatpush1.msra.mxu0 %v460
        %2590 = vmatprep.subr.mxu0 0.0
        %2591 = vmatpush1.msra.mxu0 %v461
        %2592 = vmatprep.subr.mxu0 0.0
        %2593 = vmatpush1.msra.mxu0 %v462
        %2594 = vmatprep.subr.mxu0 0.0
        %2595 = vmatpush1.msra.mxu0 %v463
        %2596 = vmatprep.subr.mxu0 0.0
        %2597 = vmatpush1.msra.mxu0 %v464
        %2598 = vmatprep.subr.mxu0 0.0
        %2599 = vmatpush1.msra.mxu0 %v465
        %2600 = vmatprep.mubr.f32.mxu0 %v499
        %2601 = vmatmul.mubr.f32.gmra.mrb[0].mxu0 %v498
        %v2602 = vpop.f32.mrb[0].mxu0
        %v2603 = vadd.f32 0.0, %v2602
        %v2604 = vpop.f32.mrb[0].mxu0
        %2605 = vmatprep.mubr.f32.mxu0 %v501
        %2606 = vmatmul.mubr.f32.gmra.mrb[0].mxu0 %v500
        %v2607 = vpop.f32.mrb[0].mxu0
        %v2608 = vadd.f32 0.0, %v2607
        %v2609 = vpop.f32.mrb[0].mxu0
        %2610 = vmatprep.mubr.f32.mxu0 %v503
        %2611 = vmatmul.mubr.f32.gmra.mrb[0].mxu0 %v502
        %v2612 = vpop.f32.mrb[0].mxu0
        %v2613 = vadd.f32 0.0, %v2612
        %v2614 = vpop.f32.mrb[0].mxu0
        %2615 = vmatprep.mubr.f32.mxu0 %v505
        %2616 = vmatmul.mubr.f32.gmra.mrb[0].mxu0 %v504
        %v2617 = vpop.f32.mrb[0].mxu0
        %v2618 = vadd.f32 0.0, %v2617
        %v2619 = vpop.f32.mrb[0].mxu0
        %2620 = vmatprep.mubr.f32.mxu0 %v507
        %2621 = vmatmul.mubr.f32.gmra.mrb[0].mxu0 %v506
        %v2622 = vpop.f32.mrb[0].mxu0
        %v2623 = vadd.f32 0.0, %v2622
        %v2624 = vpop.f32.mrb[0].mxu0
        %2625 = vmatprep.mubr.f32.mxu0 %v509
        %2626 = vmatmul.mubr.f32.gmra.mrb[0].mxu0 %v508
        %v2627 = vpop.f32.mrb[0].mxu0
        %v2628 = vadd.f32 0.0, %v2627
        %v2629 = vpop.f32.mrb[0].mxu0
        %2630 = vmatprep.mubr.f32.mxu0 %v511
        %2631 = vmatmul.mubr.f32.gmra.mrb[0].mxu0 %v510
        %v2632 = vpop.f32.mrb[0].mxu0
        %v2633 = vadd.f32 0.0, %v2632
        %v2634 = vpop.f32.mrb[0].mxu0
        %2635 = vmatprep.mubr.f32.mxu0 %v513
        %2636 = vmatmul.mubr.f32.gmra.mrb[0].mxu0 %v512
        %v2637 = vpop.f32.mrb[0].mxu0
        %v2638 = vadd.f32 0.0, %v2637
        %v2639 = vpop.f32.mrb[0].mxu0
        %2640 = vmatprep.mubr.f32.mxu0 %v515
        %2641 = vmatmul.mubr.f32.gmra.mrb[0].mxu0 %v514
        %v2642 = vpop.f32.mrb[0].mxu0
        %v2643 = vadd.f32 0.0, %v2642
        %v2644 = vpop.f32.mrb[0].mxu0
        %2645 = vmatprep.mubr.f32.mxu0 %v517
        %2646 = vmatmul.mubr.f32.gmra.mrb[0].mxu0 %v516
        %v2647 = vpop.f32.mrb[0].mxu0
        %v2648 = vadd.f32 0.0, %v2647
        %v2649 = vpop.f32.mrb[0].mxu0
        %2650 = vmatprep.mubr.f32.mxu0 %v519
        %2651 = vmatmul.mubr.f32.gmra.mrb[0].mxu0 %v518
        %v2652 = vpop.f32.mrb[0].mxu0
        %v2653 = vadd.f32 0.0, %v2652
        %v2654 = vpop.f32.mrb[0].mxu0
        %2655 = vmatprep.mubr.f32.mxu0 %v521
        %2656 = vmatmul.mubr.f32.gmra.mrb[0].mxu0 %v520
        %v2657 = vpop.f32.mrb[0].mxu0
        %v2658 = vadd.f32 0.0, %v2657
        %v2659 = vpop.f32.mrb[0].mxu0
        %2660 = vmatprep.mubr.f32.mxu0 %v523
        %2661 = vmatmul.mubr.f32.gmra.mrb[0].mxu0 %v522
        %v2662 = vpop.f32.mrb[0].mxu0
        %v2663 = vadd.f32 0.0, %v2662
        %v2664 = vpop.f32.mrb[0].mxu0
        %2665 = vmatprep.mubr.f32.mxu0 %v525
        %2666 = vmatmul.mubr.f32.gmra.mrb[0].mxu0 %v524
        %v2667 = vpop.f32.mrb[0].mxu0
        %v2668 = vadd.f32 0.0, %v2667
        %v2669 = vpop.f32.mrb[0].mxu0
        %2670 = vmatprep.mubr.f32.mxu0 %v527
        %2671 = vmatmul.mubr.f32.gmra.mrb[0].mxu0 %v526
        %v2672 = vpop.f32.mrb[0].mxu0
        %v2673 = vadd.f32 0.0, %v2672
        %v2674 = vpop.f32.mrb[0].mxu0
        %2675 = vmatprep.mubr.f32.mxu0 %v529
        %2676 = vmatmul.mubr.f32.gmra.mrb[0].mxu0 %v528
        %v2677 = vpop.f32.mrb[0].mxu0
        %v2678 = vadd.f32 0.0, %v2677
        %v2679 = vpop.f32.mrb[0].mxu0
        %2680 = vmatprep.mubr.f32.mxu0 %v531
        %2681 = vmatmul.mubr.f32.gmra.mrb[0].mxu0 %v530
        %v2682 = vpop.f32.mrb[0].mxu0
        %v2683 = vadd.f32 0.0, %v2682
        %v2684 = vpop.f32.mrb[0].mxu0
        %2685 = vmatprep.mubr.f32.mxu0 %v533
        %2686 = vmatmul.mubr.f32.gmra.mrb[0].mxu0 %v532
        %v2687 = vpop.f32.mrb[0].mxu0
        %v2688 = vadd.f32 0.0, %v2687
        %v2689 = vpop.f32.mrb[0].mxu0
        %2690 = vmatprep.mubr.f32.mxu0 %v535
        %2691 = vmatmul.mubr.f32.gmra.mrb[0].mxu0 %v534
        %v2692 = vpop.f32.mrb[0].mxu0
        %v2693 = vadd.f32 0.0, %v2692
        %v2694 = vpop.f32.mrb[0].mxu0
        %2695 = vmatprep.mubr.f32.mxu0 %v537
        %2696 = vmatmul.mubr.f32.gmra.mrb[0].mxu0 %v536
        %v2697 = vpop.f32.mrb[0].mxu0
        %v2698 = vadd.f32 0.0, %v2697
        %v2699 = vpop.f32.mrb[0].mxu0
        %2700 = vmatprep.mubr.f32.mxu0 %v539
        %2701 = vmatmul.mubr.f32.gmra.mrb[0].mxu0 %v538
        %v2702 = vpop.f32.mrb[0].mxu0
        %v2703 = vadd.f32 0.0, %v2702
        %v2704 = vpop.f32.mrb[0].mxu0
        %2705 = vmatprep.mubr.f32.mxu0 %v541
        %2706 = vmatmul.mubr.f32.gmra.mrb[0].mxu0 %v540
        %v2707 = vpop.f32.mrb[0].mxu0
        %v2708 = vadd.f32 0.0, %v2707
        %v2709 = vpop.f32.mrb[0].mxu0
        %2710 = vmatprep.mubr.f32.mxu0 %v543
        %2711 = vmatmul.mubr.f32.gmra.mrb[0].mxu0 %v542
        %v2712 = vpop.f32.mrb[0].mxu0
        %v2713 = vadd.f32 0.0, %v2712
        %v2714 = vpop.f32.mrb[0].mxu0
        %2715 = vmatprep.mubr.f32.mxu0 %v545
        %2716 = vmatmul.mubr.f32.gmra.mrb[0].mxu0 %v544
        %v2717 = vpop.f32.mrb[0].mxu0
        %v2718 = vadd.f32 0.0, %v2717
        %v2719 = vpop.f32.mrb[0].mxu0
        %2720 = vmatprep.mubr.f32.mxu0 %v547
        %2721 = vmatmul.mubr.f32.gmra.mrb[0].mxu0 %v546
        %v2722 = vpop.f32.mrb[0].mxu0
        %v2723 = vadd.f32 0.0, %v2722
        %v2724 = vpop.f32.mrb[0].mxu0
        %2725 = vmatprep.mubr.f32.mxu0 %v549
        %2726 = vmatmul.mubr.f32.gmra.mrb[0].mxu0 %v548
        %v2727 = vpop.f32.mrb[0].mxu0
        %v2728 = vadd.f32 0.0, %v2727
        %v2729 = vpop.f32.mrb[0].mxu0
        %2730 = vmatprep.mubr.f32.mxu0 %v551
        %2731 = vmatmul.mubr.f32.gmra.mrb[0].mxu0 %v550
        %v2732 = vpop.f32.mrb[0].mxu0
        %v2733 = vadd.f32 0.0, %v2732
        %v2734 = vpop.f32.mrb[0].mxu0
        %2735 = vmatprep.mubr.f32.mxu0 %v553
        %2736 = vmatmul.mubr.f32.gmra.mrb[0].mxu0 %v552
        %v2737 = vpop.f32.mrb[0].mxu0
        %v2738 = vadd.f32 0.0, %v2737
        %v2739 = vpop.f32.mrb[0].mxu0
        %2740 = vmatprep.mubr.f32.mxu0 %v555
        %2741 = vmatmul.mubr.f32.gmra.mrb[0].mxu0 %v554
        %v2742 = vpop.f32.mrb[0].mxu0
        %v2743 = vadd.f32 0.0, %v2742
        %v2744 = vpop.f32.mrb[0].mxu0
        %2745 = vmatprep.mubr.f32.mxu0 %v557
        %2746 = vmatmul.mubr.f32.gmra.mrb[0].mxu0 %v556
        %v2747 = vpop.f32.mrb[0].mxu0
        %v2748 = vadd.f32 0.0, %v2747
        %v2749 = vpop.f32.mrb[0].mxu0
        %2750 = vmatprep.mubr.f32.mxu0 %v559
        %2751 = vmatmul.mubr.f32.gmra.mrb[0].mxu0 %v558
        %v2752 = vpop.f32.mrb[0].mxu0
        %v2753 = vadd.f32 0.0, %v2752
        %v2754 = vpop.f32.mrb[0].mxu0
        %2755 = vmatprep.mubr.f32.mxu0 %v561
        %2756 = vmatmul.mubr.f32.gmra.mrb[0].mxu0 %v560
        %v2757 = vpop.f32.mrb[0].mxu0
        %v2758 = vadd.f32 0.0, %v2757
        %v2759 = vpop.f32.mrb[0].mxu0
        %2760 = vdwg.mxu0
        %v2761 = vtanh.pop %v2603
        %v2762 = vtanh.pop %v2608
        %v2763 = vtanh.pop %v2613
        %v2764 = vtanh.pop %v2618
        %v2765 = vtanh.pop %v2623
        %v2766 = vtanh.pop %v2628
        %v2767 = vtanh.pop %v2633
        %v2768 = vtanh.pop %v2638
        %v2769 = vtanh.pop %v2643
        %v2770 = vtanh.pop %v2648
        %v2771 = vtanh.pop %v2653
        %v2772 = vtanh.pop %v2658
        %v2773 = vtanh.pop %v2663
        %v2774 = vtanh.pop %v2668
        %v2775 = vtanh.pop %v2673
        %v2776 = vtanh.pop %v2678
        %v2777 = vtanh.pop %v2683
        %v2778 = vtanh.pop %v2688
        %v2779 = vtanh.pop %v2693
        %v2780 = vtanh.pop %v2698
        %v2781 = vtanh.pop %v2703
        %v2782 = vtanh.pop %v2708
        %v2783 = vtanh.pop %v2713
        %v2784 = vtanh.pop %v2718
        %v2785 = vtanh.pop %v2723
        %v2786 = vtanh.pop %v2728
        %v2787 = vtanh.pop %v2733
        %v2788 = vtanh.pop %v2738
        %v2789 = vtanh.pop %v2743
        %v2790 = vtanh.pop %v2748
        %v2791 = vtanh.pop %v2753
        %v2792 = vtanh.pop %v2758
        %2793 = vmatprep.subr.mxu0 0.0
        %2794 = vmatpush1.msra.mxu0 %v2761
        %2795 = vmatprep.subr.mxu0 0.0
        %2796 = vmatpush1.msra.mxu0 %v2762
        %2797 = vmatprep.subr.mxu0 0.0
        %2798 = vmatpush1.msra.mxu0 %v2763
        %2799 = vmatprep.subr.mxu0 0.0
        %2800 = vmatpush1.msra.mxu0 %v2764
        %2801 = vmatprep.subr.mxu0 0.0
        %2802 = vmatpush1.msra.mxu0 %v2765
        %2803 = vmatprep.subr.mxu0 0.0
        %2804 = vmatpush1.msra.mxu0 %v2766
        %2805 = vmatprep.subr.mxu0 0.0
        %2806 = vmatpush1.msra.mxu0 %v2767
        %2807 = vmatprep.subr.mxu0 0.0
        %2808 = vmatpush1.msra.mxu0 %v2768
        %2809 = vmatprep.subr.mxu0 0.0
        %2810 = vmatpush1.msra.mxu0 %v2769
        %2811 = vmatprep.subr.mxu0 0.0
        %2812 = vmatpush1.msra.mxu0 %v2770
        %2813 = vmatprep.subr.mxu0 0.0
        %2814 = vmatpush1.msra.mxu0 %v2771
        %2815 = vmatprep.subr.mxu0 0.0
        %2816 = vmatpush1.msra.mxu0 %v2772
        %2817 = vmatprep.subr.mxu0 0.0
        %2818 = vmatpush1.msra.mxu0 %v2773
        %2819 = vmatprep.subr.mxu0 0.0
        %2820 = vmatpush1.msra.mxu0 %v2774
        %2821 = vmatprep.subr.mxu0 0.0
        %2822 = vmatpush1.msra.mxu0 %v2775
        %2823 = vmatprep.subr.mxu0 0.0
        %2824 = vmatpush1.msra.mxu0 %v2776
        %2825 = vmatprep.subr.mxu0 0.0
        %2826 = vmatpush1.msra.mxu0 %v2777
        %2827 = vmatprep.subr.mxu0 0.0
        %2828 = vmatpush1.msra.mxu0 %v2778
        %2829 = vmatprep.subr.mxu0 0.0
        %2830 = vmatpush1.msra.mxu0 %v2779
        %2831 = vmatprep.subr.mxu0 0.0
        %2832 = vmatpush1.msra.mxu0 %v2780
        %2833 = vmatprep.subr.mxu0 0.0
        %2834 = vmatpush1.msra.mxu0 %v2781
        %2835 = vmatprep.subr.mxu0 0.0
        %2836 = vmatpush1.msra.mxu0 %v2782
        %2837 = vmatprep.subr.mxu0 0.0
        %2838 = vmatpush1.msra.mxu0 %v2783
        %2839 = vmatprep.subr.mxu0 0.0
        %2840 = vmatpush1.msra.mxu0 %v2784
        %2841 = vmatprep.subr.mxu0 0.0
        %2842 = vmatpush1.msra.mxu0 %v2785
        %2843 = vmatprep.subr.mxu0 0.0
        %2844 = vmatpush1.msra.mxu0 %v2786
        %2845 = vmatprep.subr.mxu0 0.0
        %2846 = vmatpush1.msra.mxu0 %v2787
        %2847 = vmatprep.subr.mxu0 0.0
        %2848 = vmatpush1.msra.mxu0 %v2788
        %2849 = vmatprep.subr.mxu0 0.0
        %2850 = vmatpush1.msra.mxu0 %v2789
        %2851 = vmatprep.subr.mxu0 0.0
        %2852 = vmatpush1.msra.mxu0 %v2790
        %2853 = vmatprep.subr.mxu0 0.0
        %2854 = vmatpush1.msra.mxu0 %v2791
        %2855 = vmatprep.subr.mxu0 0.0
        %2856 = vmatpush1.msra.mxu0 %v2792
        %2857 = vmatprep.mubr.f32.mxu0 %v828
        %2858 = vmatmul.mubr.f32.gmra.mrb[0].mxu0 %v824
        %v2859 = vpop.f32.mrb[0].mxu0
        %v2860 = vadd.f32 0.0, %v2859
        %v2861 = vpop.f32.mrb[0].mxu0
        %2862 = vdwg.mxu0
        %2863 = vmatprep.subr.mxu0 0.0
        %2864 = vmatpush1.msra.mxu0 %v466
        %2865 = vmatprep.subr.mxu0 0.0
        %2866 = vmatpush1.msra.mxu0 %v467
        %2867 = vmatprep.subr.mxu0 0.0
        %2868 = vmatpush1.msra.mxu0 %v468
        %2869 = vmatprep.subr.mxu0 0.0
        %2870 = vmatpush1.msra.mxu0 %v469
        %2871 = vmatprep.subr.mxu0 0.0
        %2872 = vmatpush1.msra.mxu0 %v470
        %2873 = vmatprep.subr.mxu0 0.0
        %2874 = vmatpush1.msra.mxu0 %v471
        %2875 = vmatprep.subr.mxu0 0.0
        %2876 = vmatpush1.msra.mxu0 %v472
        %2877 = vmatprep.subr.mxu0 0.0
        %2878 = vmatpush1.msra.mxu0 %v473
        %2879 = vmatprep.subr.mxu0 0.0
        %2880 = vmatpush1.msra.mxu0 %v474
        %2881 = vmatprep.subr.mxu0 0.0
        %2882 = vmatpush1.msra.mxu0 %v475
        %2883 = vmatprep.subr.mxu0 0.0
        %2884 = vmatpush1.msra.mxu0 %v476
        %2885 = vmatprep.subr.mxu0 0.0
        %2886 = vmatpush1.msra.mxu0 %v477
        %2887 = vmatprep.subr.mxu0 0.0
        %2888 = vmatpush1.msra.mxu0 %v478
        %2889 = vmatprep.subr.mxu0 0.0
        %2890 = vmatpush1.msra.mxu0 %v479
        %2891 = vmatprep.subr.mxu0 0.0
        %2892 = vmatpush1.msra.mxu0 %v480
        %2893 = vmatprep.subr.mxu0 0.0
        %2894 = vmatpush1.msra.mxu0 %v481
        %2895 = vmatprep.subr.mxu0 0.0
        %2896 = vmatpush1.msra.mxu0 %v482
        %2897 = vmatprep.subr.mxu0 0.0
        %2898 = vmatpush1.msra.mxu0 %v483
        %2899 = vmatprep.subr.mxu0 0.0
        %2900 = vmatpush1.msra.mxu0 %v484
        %2901 = vmatprep.subr.mxu0 0.0
        %2902 = vmatpush1.msra.mxu0 %v485
        %2903 = vmatprep.subr.mxu0 0.0
        %2904 = vmatpush1.msra.mxu0 %v486
        %2905 = vmatprep.subr.mxu0 0.0
        %2906 = vmatpush1.msra.mxu0 %v487
        %2907 = vmatprep.subr.mxu0 0.0
        %2908 = vmatpush1.msra.mxu0 %v488
        %2909 = vmatprep.subr.mxu0 0.0
        %2910 = vmatpush1.msra.mxu0 %v489
        %2911 = vmatprep.subr.mxu0 0.0
        %2912 = vmatpush1.msra.mxu0 %v490
        %2913 = vmatprep.subr.mxu0 0.0
        %2914 = vmatpush1.msra.mxu0 %v491
        %2915 = vmatprep.subr.mxu0 0.0
        %2916 = vmatpush1.msra.mxu0 %v492
        %2917 = vmatprep.subr.mxu0 0.0
        %2918 = vmatpush1.msra.mxu0 %v493
        %2919 = vmatprep.subr.mxu0 0.0
        %2920 = vmatpush1.msra.mxu0 %v494
        %2921 = vmatprep.subr.mxu0 0.0
        %2922 = vmatpush1.msra.mxu0 %v495
        %2923 = vmatprep.subr.mxu0 0.0
        %2924 = vmatpush1.msra.mxu0 %v496
        %2925 = vmatprep.subr.mxu0 0.0
        %2926 = vmatpush1.msra.mxu0 %v497
        %2927 = vmatprep.mubr.f32.mxu0 %v499
        %2928 = vmatmul.mubr.f32.gmra.mrb[0].mxu0 %v498
        %v2929 = vpop.f32.mrb[0].mxu0
        %v2930 = vadd.f32 0.0, %v2929
        %v2931 = vpop.f32.mrb[0].mxu0
        %2932 = vmatprep.mubr.f32.mxu0 %v501
        %2933 = vmatmul.mubr.f32.gmra.mrb[0].mxu0 %v500
        %v2934 = vpop.f32.mrb[0].mxu0
        %v2935 = vadd.f32 0.0, %v2934
        %v2936 = vpop.f32.mrb[0].mxu0
        %2937 = vmatprep.mubr.f32.mxu0 %v503
        %2938 = vmatmul.mubr.f32.gmra.mrb[0].mxu0 %v502
        %v2939 = vpop.f32.mrb[0].mxu0
        %v2940 = vadd.f32 0.0, %v2939
        %v2941 = vpop.f32.mrb[0].mxu0
        %2942 = vmatprep.mubr.f32.mxu0 %v505
        %2943 = vmatmul.mubr.f32.gmra.mrb[0].mxu0 %v504
        %v2944 = vpop.f32.mrb[0].mxu0
        %v2945 = vadd.f32 0.0, %v2944
        %v2946 = vpop.f32.mrb[0].mxu0
        %2947 = vmatprep.mubr.f32.mxu0 %v507
        %2948 = vmatmul.mubr.f32.gmra.mrb[0].mxu0 %v506
        %v2949 = vpop.f32.mrb[0].mxu0
        %v2950 = vadd.f32 0.0, %v2949
        %v2951 = vpop.f32.mrb[0].mxu0
        %2952 = vmatprep.mubr.f32.mxu0 %v509
        %2953 = vmatmul.mubr.f32.gmra.mrb[0].mxu0 %v508
        %v2954 = vpop.f32.mrb[0].mxu0
        %v2955 = vadd.f32 0.0, %v2954
        %v2956 = vpop.f32.mrb[0].mxu0
        %2957 = vmatprep.mubr.f32.mxu0 %v511
        %2958 = vmatmul.mubr.f32.gmra.mrb[0].mxu0 %v510
        %v2959 = vpop.f32.mrb[0].mxu0
        %v2960 = vadd.f32 0.0, %v2959
        %v2961 = vpop.f32.mrb[0].mxu0
        %2962 = vmatprep.mubr.f32.mxu0 %v513
        %2963 = vmatmul.mubr.f32.gmra.mrb[0].mxu0 %v512
        %v2964 = vpop.f32.mrb[0].mxu0
        %v2965 = vadd.f32 0.0, %v2964
        %v2966 = vpop.f32.mrb[0].mxu0
        %2967 = vmatprep.mubr.f32.mxu0 %v515
        %2968 = vmatmul.mubr.f32.gmra.mrb[0].mxu0 %v514
        %v2969 = vpop.f32.mrb[0].mxu0
        %v2970 = vadd.f32 0.0, %v2969
        %v2971 = vpop.f32.mrb[0].mxu0
        %2972 = vmatprep.mubr.f32.mxu0 %v517
        %2973 = vmatmul.mubr.f32.gmra.mrb[0].mxu0 %v516
        %v2974 = vpop.f32.mrb[0].mxu0
        %v2975 = vadd.f32 0.0, %v2974
        %v2976 = vpop.f32.mrb[0].mxu0
        %2977 = vmatprep.mubr.f32.mxu0 %v519
        %2978 = vmatmul.mubr.f32.gmra.mrb[0].mxu0 %v518
        %v2979 = vpop.f32.mrb[0].mxu0
        %v2980 = vadd.f32 0.0, %v2979
        %v2981 = vpop.f32.mrb[0].mxu0
        %2982 = vmatprep.mubr.f32.mxu0 %v521
        %2983 = vmatmul.mubr.f32.gmra.mrb[0].mxu0 %v520
        %v2984 = vpop.f32.mrb[0].mxu0
        %v2985 = vadd.f32 0.0, %v2984
        %v2986 = vpop.f32.mrb[0].mxu0
        %2987 = vmatprep.mubr.f32.mxu0 %v523
        %2988 = vmatmul.mubr.f32.gmra.mrb[0].mxu0 %v522
        %v2989 = vpop.f32.mrb[0].mxu0
        %v2990 = vadd.f32 0.0, %v2989
        %v2991 = vpop.f32.mrb[0].mxu0
        %2992 = vmatprep.mubr.f32.mxu0 %v525
        %2993 = vmatmul.mubr.f32.gmra.mrb[0].mxu0 %v524
        %v2994 = vpop.f32.mrb[0].mxu0
        %v2995 = vadd.f32 0.0, %v2994
        %v2996 = vpop.f32.mrb[0].mxu0
        %2997 = vmatprep.mubr.f32.mxu0 %v527
        %2998 = vmatmul.mubr.f32.gmra.mrb[0].mxu0 %v526
        %v2999 = vpop.f32.mrb[0].mxu0
        %v3000 = vadd.f32 0.0, %v2999
        %v3001 = vpop.f32.mrb[0].mxu0
        %3002 = vmatprep.mubr.f32.mxu0 %v529
        %3003 = vmatmul.mubr.f32.gmra.mrb[0].mxu0 %v528
        %v3004 = vpop.f32.mrb[0].mxu0
        %v3005 = vadd.f32 0.0, %v3004
        %v3006 = vpop.f32.mrb[0].mxu0
        %3007 = vmatprep.mubr.f32.mxu0 %v531
        %3008 = vmatmul.mubr.f32.gmra.mrb[0].mxu0 %v530
        %v3009 = vpop.f32.mrb[0].mxu0
        %v3010 = vadd.f32 0.0, %v3009
        %v3011 = vpop.f32.mrb[0].mxu0
        %3012 = vmatprep.mubr.f32.mxu0 %v533
        %3013 = vmatmul.mubr.f32.gmra.mrb[0].mxu0 %v532
        %v3014 = vpop.f32.mrb[0].mxu0
        %v3015 = vadd.f32 0.0, %v3014
        %v3016 = vpop.f32.mrb[0].mxu0
        %3017 = vmatprep.mubr.f32.mxu0 %v535
        %3018 = vmatmul.mubr.f32.gmra.mrb[0].mxu0 %v534
        %v3019 = vpop.f32.mrb[0].mxu0
        %v3020 = vadd.f32 0.0, %v3019
        %v3021 = vpop.f32.mrb[0].mxu0
        %3022 = vmatprep.mubr.f32.mxu0 %v537
        %3023 = vmatmul.mubr.f32.gmra.mrb[0].mxu0 %v536
        %v3024 = vpop.f32.mrb[0].mxu0
        %v3025 = vadd.f32 0.0, %v3024
        %v3026 = vpop.f32.mrb[0].mxu0
        %3027 = vmatprep.mubr.f32.mxu0 %v539
        %3028 = vmatmul.mubr.f32.gmra.mrb[0].mxu0 %v538
        %v3029 = vpop.f32.mrb[0].mxu0
        %v3030 = vadd.f32 0.0, %v3029
        %v3031 = vpop.f32.mrb[0].mxu0
        %3032 = vmatprep.mubr.f32.mxu0 %v541
        %3033 = vmatmul.mubr.f32.gmra.mrb[0].mxu0 %v540
        %v3034 = vpop.f32.mrb[0].mxu0
        %v3035 = vadd.f32 0.0, %v3034
        %v3036 = vpop.f32.mrb[0].mxu0
        %3037 = vmatprep.mubr.f32.mxu0 %v543
        %3038 = vmatmul.mubr.f32.gmra.mrb[0].mxu0 %v542
        %v3039 = vpop.f32.mrb[0].mxu0
        %v3040 = vadd.f32 0.0, %v3039
        %v3041 = vpop.f32.mrb[0].mxu0
        %3042 = vmatprep.mubr.f32.mxu0 %v545
        %3043 = vmatmul.mubr.f32.gmra.mrb[0].mxu0 %v544
        %v3044 = vpop.f32.mrb[0].mxu0
        %v3045 = vadd.f32 0.0, %v3044
        %v3046 = vpop.f32.mrb[0].mxu0
        %3047 = vmatprep.mubr.f32.mxu0 %v547
        %3048 = vmatmul.mubr.f32.gmra.mrb[0].mxu0 %v546
        %v3049 = vpop.f32.mrb[0].mxu0
        %v3050 = vadd.f32 0.0, %v3049
        %v3051 = vpop.f32.mrb[0].mxu0
        %3052 = vmatprep.mubr.f32.mxu0 %v549
        %3053 = vmatmul.mubr.f32.gmra.mrb[0].mxu0 %v548
        %v3054 = vpop.f32.mrb[0].mxu0
        %v3055 = vadd.f32 0.0, %v3054
        %v3056 = vpop.f32.mrb[0].mxu0
        %3057 = vmatprep.mubr.f32.mxu0 %v551
        %3058 = vmatmul.mubr.f32.gmra.mrb[0].mxu0 %v550
        %v3059 = vpop.f32.mrb[0].mxu0
        %v3060 = vadd.f32 0.0, %v3059
        %v3061 = vpop.f32.mrb[0].mxu0
        %3062 = vmatprep.mubr.f32.mxu0 %v553
        %3063 = vmatmul.mubr.f32.gmra.mrb[0].mxu0 %v552
        %v3064 = vpop.f32.mrb[0].mxu0
        %v3065 = vadd.f32 0.0, %v3064
        %v3066 = vpop.f32.mrb[0].mxu0
        %3067 = vmatprep.mubr.f32.mxu0 %v555
        %3068 = vmatmul.mubr.f32.gmra.mrb[0].mxu0 %v554
        %v3069 = vpop.f32.mrb[0].mxu0
        %v3070 = vadd.f32 0.0, %v3069
        %v3071 = vpop.f32.mrb[0].mxu0
        %3072 = vmatprep.mubr.f32.mxu0 %v557
        %3073 = vmatmul.mubr.f32.gmra.mrb[0].mxu0 %v556
        %v3074 = vpop.f32.mrb[0].mxu0
        %v3075 = vadd.f32 0.0, %v3074
        %v3076 = vpop.f32.mrb[0].mxu0
        %3077 = vmatprep.mubr.f32.mxu0 %v559
        %3078 = vmatmul.mubr.f32.gmra.mrb[0].mxu0 %v558
        %v3079 = vpop.f32.mrb[0].mxu0
        %v3080 = vadd.f32 0.0, %v3079
        %v3081 = vpop.f32.mrb[0].mxu0
        %3082 = vmatprep.mubr.f32.mxu0 %v561
        %3083 = vmatmul.mubr.f32.gmra.mrb[0].mxu0 %v560
        %v3084 = vpop.f32.mrb[0].mxu0
        %v3085 = vadd.f32 0.0, %v3084
        %v3086 = vpop.f32.mrb[0].mxu0
        %3087 = vdwg.mxu0
        %v3088 = vtanh.pop %v2930
        %v3089 = vtanh.pop %v2935
        %v3090 = vtanh.pop %v2940
        %v3091 = vtanh.pop %v2945
        %v3092 = vtanh.pop %v2950
        %v3093 = vtanh.pop %v2955
        %v3094 = vtanh.pop %v2960
        %v3095 = vtanh.pop %v2965
        %v3096 = vtanh.pop %v2970
        %v3097 = vtanh.pop %v2975
        %v3098 = vtanh.pop %v2980
        %v3099 = vtanh.pop %v2985
        %v3100 = vtanh.pop %v2990
        %v3101 = vtanh.pop %v2995
        %v3102 = vtanh.pop %v3000
        %v3103 = vtanh.pop %v3005
        %v3104 = vtanh.pop %v3010
        %v3105 = vtanh.pop %v3015
        %v3106 = vtanh.pop %v3020
        %v3107 = vtanh.pop %v3025
        %v3108 = vtanh.pop %v3030
        %v3109 = vtanh.pop %v3035
        %v3110 = vtanh.pop %v3040
        %v3111 = vtanh.pop %v3045
        %v3112 = vtanh.pop %v3050
        %v3113 = vtanh.pop %v3055
        %v3114 = vtanh.pop %v3060
        %v3115 = vtanh.pop %v3065
        %v3116 = vtanh.pop %v3070
        %v3117 = vtanh.pop %v3075
        %v3118 = vtanh.pop %v3080
        %v3119 = vtanh.pop %v3085
        %3120 = vmatprep.subr.mxu0 0.0
        %3121 = vmatpush1.msra.mxu0 %v3088
        %3122 = vmatprep.subr.mxu0 0.0
        %3123 = vmatpush1.msra.mxu0 %v3089
        %3124 = vmatprep.subr.mxu0 0.0
        %3125 = vmatpush1.msra.mxu0 %v3090
        %3126 = vmatprep.subr.mxu0 0.0
        %3127 = vmatpush1.msra.mxu0 %v3091
        %3128 = vmatprep.subr.mxu0 0.0
        %3129 = vmatpush1.msra.mxu0 %v3092
        %3130 = vmatprep.subr.mxu0 0.0
        %3131 = vmatpush1.msra.mxu0 %v3093
        %3132 = vmatprep.subr.mxu0 0.0
        %3133 = vmatpush1.msra.mxu0 %v3094
        %3134 = vmatprep.subr.mxu0 0.0
        %3135 = vmatpush1.msra.mxu0 %v3095
        %3136 = vmatprep.subr.mxu0 0.0
        %3137 = vmatpush1.msra.mxu0 %v3096
        %3138 = vmatprep.subr.mxu0 0.0
        %3139 = vmatpush1.msra.mxu0 %v3097
        %3140 = vmatprep.subr.mxu0 0.0
        %3141 = vmatpush1.msra.mxu0 %v3098
        %3142 = vmatprep.subr.mxu0 0.0
        %3143 = vmatpush1.msra.mxu0 %v3099
        %3144 = vmatprep.subr.mxu0 0.0
        %3145 = vmatpush1.msra.mxu0 %v3100
        %3146 = vmatprep.subr.mxu0 0.0
        %3147 = vmatpush1.msra.mxu0 %v3101
        %3148 = vmatprep.subr.mxu0 0.0
        %3149 = vmatpush1.msra.mxu0 %v3102
        %3150 = vmatprep.subr.mxu0 0.0
        %3151 = vmatpush1.msra.mxu0 %v3103
        %3152 = vmatprep.subr.mxu0 0.0
        %3153 = vmatpush1.msra.mxu0 %v3104
        %3154 = vmatprep.subr.mxu0 0.0
        %3155 = vmatpush1.msra.mxu0 %v3105
        %3156 = vmatprep.subr.mxu0 0.0
        %3157 = vmatpush1.msra.mxu0 %v3106
        %3158 = vmatprep.subr.mxu0 0.0
        %3159 = vmatpush1.msra.mxu0 %v3107
        %3160 = vmatprep.subr.mxu0 0.0
        %3161 = vmatpush1.msra.mxu0 %v3108
        %3162 = vmatprep.subr.mxu0 0.0
        %3163 = vmatpush1.msra.mxu0 %v3109
        %3164 = vmatprep.subr.mxu0 0.0
        %3165 = vmatpush1.msra.mxu0 %v3110
        %3166 = vmatprep.subr.mxu0 0.0
        %3167 = vmatpush1.msra.mxu0 %v3111
        %3168 = vmatprep.subr.mxu0 0.0
        %3169 = vmatpush1.msra.mxu0 %v3112
        %3170 = vmatprep.subr.mxu0 0.0
        %3171 = vmatpush1.msra.mxu0 %v3113
        %3172 = vmatprep.subr.mxu0 0.0
        %3173 = vmatpush1.msra.mxu0 %v3114
        %3174 = vmatprep.subr.mxu0 0.0
        %3175 = vmatpush1.msra.mxu0 %v3115
        %3176 = vmatprep.subr.mxu0 0.0
        %3177 = vmatpush1.msra.mxu0 %v3116
        %3178 = vmatprep.subr.mxu0 0.0
        %3179 = vmatpush1.msra.mxu0 %v3117
        %3180 = vmatprep.subr.mxu0 0.0
        %3181 = vmatpush1.msra.mxu0 %v3118
        %3182 = vmatprep.subr.mxu0 0.0
        %3183 = vmatpush1.msra.mxu0 %v3119
        %3184 = vmatprep.mubr.f32.mxu0 %v828
        %3185 = vmatmul.mubr.f32.gmra.mrb[0].mxu0 %v824
        %v3186 = vpop.f32.mrb[0].mxu0
        %v3187 = vadd.f32 0.0, %v3186
        %v3188 = vpop.f32.mrb[0].mxu0
        %3189 = vdwg.mxu0
        %v3191 = vrot.slane %v1225, 7
        %v3194 = vrot.slane %v1552, 6
        %v3197 = vrot.slane %v1879, 5
        %v3200 = vrot.slane %v2206, 4
        %v3203 = vrot.slane %v2533, 3
        %v3206 = vrot.slane %v2860, 2
        %v3209 = vrot.slane %v3187, 1
        %vm3211 = vcmask 1040384
        %v3212 = vsel %vm3211, %v898, %v3191
        %vm3213 = vcmask 1041408
        %v3214 = vsel %vm3213, %v3212, %v3194
        %vm3215 = vcmask 1042432
        %v3216 = vsel %vm3215, %v3214, %v3197
        %vm3217 = vcmask 1043456
        %v3218 = vsel %vm3217, %v3216, %v3200
        %vm3219 = vcmask 1044480
        %v3220 = vsel %vm3219, %v3218, %v3203
        %vm3221 = vcmask 1045504
        %v3222 = vsel %vm3221, %v3220, %v3206
        %vm3223 = vcmask 1046528
        %v3224 = vsel %vm3223, %v3222, %v3209
        %s3225 = smul.u32 %s26, 128
        %v3226 = vlaneseq
        %v3227 = vand.u32 %v3226, 127
        %v3228 = vstv %s3225
        %v3229 = vadd.s32 %v3228, %v3227
        %vm3230 = vcmp.lt.s32.totalorder %v3229, 64
        %v3231 = vsel %vm3230, %v3224, -1e+30
        %v3232 = vld [vmem:[#allocation2] sm:$0xff]
        %3233 = vmax.xlane.f32.xlu0 %v3231
        %v3234 = vpop.xlane.xlu0 %3233
        %v3235 = vmax.f32 %v3232, %v3234
        %v3236 = vsub.f32 %v3232, %v3235
        %v3237 = vmul.f32 %v3236, 1.442695
        %v3238 = vpow.pop %v3237
        %3240 = vset.pattern.permute.xlu0 0
        %3241 = vperm.xlu0 %3240, %v3235
        %v3242 = vpop.permute.xlu0 %3241
        %v3244 = vsub.f32 %v3231, %v3242
        %v3245 = vmul.f32 %v3244, 1.442695
        %v3246 = vpow.pop %v3245
        %v3247 = vld [vmem:[#allocation3] sm:$0xff]
        %v3248 = vmul.f32 %v3238, %v3247
        %3249 = vadd.xlane.f32.xlu0 %v3246
        %v3250 = vpop.xlane.xlu0 %3249
        %v3251 = vadd.f32 %v3248, %v3250
        %vm3252 = vcmask 7168
        %3253 = vst.msk [vmem:[#allocation3] sm:$0xff] %vm3252, %v3251
        %3254 = vst.msk [vmem:[#allocation2] sm:$0xff] %vm3252, %v3235
        %v3256 = vcombine.high %v3246, %v3246
        %v3258 = vunpack.c.l.s4 1966171168
        %v3259 = vunpack.c.0.s8 %v3258
        %v3260 = vlaneseq
        %v3261 = vshrl.u32 %v3260, 7
        %v3262 = vsub.s32 %v3259, %v3261
        %v3263 = vrot.slane %v3246, %v3262
        %v3265 = vunpack.c.l.s4 1966171168
        %v3266 = vunpack.c.0.s8 %v3265
        %v3267 = vlaneseq
        %v3268 = vshrl.u32 %v3267, 7
        %v3269 = vsub.s32 %v3266, %v3268
        %v3270 = vrot.slane %v3256, %v3269
        %v3271 = vcombine.high %v3263, %v3263
        %v3272 = vcombine.high %v3270, %v3270
        %v3274 = vunpack.c.l.s4 1966171168
        %v3275 = vunpack.c.0.s8 %v3274
        %v3276 = vlaneseq
        %v3277 = vshrl.u32 %v3276, 7
        %v3278 = vsub.s32 %v3275, %v3277
        %v3279 = vrot.slane %v3263, %v3278
        %v3281 = vunpack.c.l.s4 1966171168
        %v3282 = vunpack.c.0.s8 %v3281
        %v3283 = vlaneseq
        %v3284 = vshrl.u32 %v3283, 7
        %v3285 = vsub.s32 %v3282, %v3284
        %v3286 = vrot.slane %v3270, %v3285
        %v3288 = vunpack.c.l.s4 1966171168
        %v3289 = vunpack.c.0.s8 %v3288
        %v3290 = vlaneseq
        %v3291 = vshrl.u32 %v3290, 7
        %v3292 = vsub.s32 %v3289, %v3291
        %v3293 = vrot.slane %v3271, %v3292
        %v3295 = vunpack.c.l.s4 1966171168
        %v3296 = vunpack.c.0.s8 %v3295
        %v3297 = vlaneseq
        %v3298 = vshrl.u32 %v3297, 7
        %v3299 = vsub.s32 %v3296, %v3298
        %v3300 = vrot.slane %v3272, %v3299
        %v3301 = vcombine.high %v3279, %v3279
        %v3302 = vcombine.high %v3286, %v3286
        %v3303 = vcombine.high %v3293, %v3293
        %v3304 = vcombine.high %v3300, %v3300
        %3313 = vmatprep.subr.mxu0 0.0
        %3314 = vmatpush1.xpose.msra.mxu0 %v242
        %3315 = vmatprep.subr.mxu0 0.0
        %3316 = vmatpush1.xpose.msra.mxu0 %v243
        %3317 = vmatprep.subr.mxu0 0.0
        %3318 = vmatpush1.xpose.msra.mxu0 %v244
        %3319 = vmatprep.subr.mxu0 0.0
        %3320 = vmatpush1.xpose.msra.mxu0 %v245
        %3321 = vmatprep.subr.mxu0 0.0
        %3322 = vmatpush1.xpose.msra.mxu0 %v246
        %3323 = vmatprep.subr.mxu0 0.0
        %3324 = vmatpush1.xpose.msra.mxu0 %v247
        %3325 = vmatprep.subr.mxu0 0.0
        %3326 = vmatpush1.xpose.msra.mxu0 %v248
        %3327 = vmatprep.subr.mxu0 0.0
        %3328 = vmatpush1.xpose.msra.mxu0 %v249
        %3329 = vmatprep.subr.mxu0 0.0
        %3330 = vmatpush1.xpose.msra.mxu0 %v250
        %3331 = vmatprep.subr.mxu0 0.0
        %3332 = vmatpush1.xpose.msra.mxu0 %v251
        %3333 = vmatprep.subr.mxu0 0.0
        %3334 = vmatpush1.xpose.msra.mxu0 %v252
        %3335 = vmatprep.subr.mxu0 0.0
        %3336 = vmatpush1.xpose.msra.mxu0 %v253
        %3337 = vmatprep.subr.mxu0 0.0
        %3338 = vmatpush1.xpose.msra.mxu0 %v254
        %3339 = vmatprep.subr.mxu0 0.0
        %3340 = vmatpush1.xpose.msra.mxu0 %v255
        %3341 = vmatprep.subr.mxu0 0.0
        %3342 = vmatpush1.xpose.msra.mxu0 %v256
        %3343 = vmatprep.subr.mxu0 0.0
        %3344 = vmatpush1.xpose.msra.mxu0 %v257
        %3345 = vmatprep.subr.mxu0 0.0
        %3346 = vmatpush1.xpose.msra.mxu0 %v258
        %3347 = vmatprep.subr.mxu0 0.0
        %3348 = vmatpush1.xpose.msra.mxu0 %v259
        %3349 = vmatprep.subr.mxu0 0.0
        %3350 = vmatpush1.xpose.msra.mxu0 %v260
        %3351 = vmatprep.subr.mxu0 0.0
        %3352 = vmatpush1.xpose.msra.mxu0 %v261
        %3353 = vmatprep.subr.mxu0 0.0
        %3354 = vmatpush1.xpose.msra.mxu0 %v262
        %3355 = vmatprep.subr.mxu0 0.0
        %3356 = vmatpush1.xpose.msra.mxu0 %v263
        %3357 = vmatprep.subr.mxu0 0.0
        %3358 = vmatpush1.xpose.msra.mxu0 %v264
        %3359 = vmatprep.subr.mxu0 0.0
        %3360 = vmatpush1.xpose.msra.mxu0 %v265
        %3361 = vmatprep.subr.mxu0 0.0
        %3362 = vmatpush1.xpose.msra.mxu0 %v266
        %3363 = vmatprep.subr.mxu0 0.0
        %3364 = vmatpush1.xpose.msra.mxu0 %v267
        %3365 = vmatprep.subr.mxu0 0.0
        %3366 = vmatpush1.xpose.msra.mxu0 %v268
        %3367 = vmatprep.subr.mxu0 0.0
        %3368 = vmatpush1.xpose.msra.mxu0 %v269
        %3369 = vmatprep.subr.mxu0 0.0
        %3370 = vmatpush1.xpose.msra.mxu0 %v270
        %3371 = vmatprep.subr.mxu0 0.0
        %3372 = vmatpush1.xpose.msra.mxu0 %v271
        %3373 = vmatprep.subr.mxu0 0.0
        %3374 = vmatpush1.xpose.msra.mxu0 %v272
        %3375 = vmatprep.subr.mxu0 0.0
        %3376 = vmatpush1.xpose.msra.mxu0 %v273
        %3377 = vmatprep.mubr.f32.mxu0 0.0
        %3378 = vmatmul.mubr.f32.gmra.mrb[0].mxu0 %v3279
        %v3379 = vpop.f32.mrb[0].mxu0
        %v3380 = vadd.f32 0.0, %v3379
        %v3381 = vpop.f32.mrb[0].mxu0
        %v3382 = vadd.f32 0.0, %v3381
        %3383 = vdwg.mxu0
        %3384 = vmatprep.subr.mxu0 0.0
        %3385 = vmatpush1.xpose.msra.mxu0 %v274
        %3386 = vmatprep.subr.mxu0 0.0
        %3387 = vmatpush1.xpose.msra.mxu0 %v275
        %3388 = vmatprep.subr.mxu0 0.0
        %3389 = vmatpush1.xpose.msra.mxu0 %v276
        %3390 = vmatprep.subr.mxu0 0.0
        %3391 = vmatpush1.xpose.msra.mxu0 %v277
        %3392 = vmatprep.subr.mxu0 0.0
        %3393 = vmatpush1.xpose.msra.mxu0 %v278
        %3394 = vmatprep.subr.mxu0 0.0
        %3395 = vmatpush1.xpose.msra.mxu0 %v279
        %3396 = vmatprep.subr.mxu0 0.0
        %3397 = vmatpush1.xpose.msra.mxu0 %v280
        %3398 = vmatprep.subr.mxu0 0.0
        %3399 = vmatpush1.xpose.msra.mxu0 %v281
        %3400 = vmatprep.subr.mxu0 0.0
        %3401 = vmatpush1.xpose.msra.mxu0 %v282
        %3402 = vmatprep.subr.mxu0 0.0
        %3403 = vmatpush1.xpose.msra.mxu0 %v283
        %3404 = vmatprep.subr.mxu0 0.0
        %3405 = vmatpush1.xpose.msra.mxu0 %v284
        %3406 = vmatprep.subr.mxu0 0.0
        %3407 = vmatpush1.xpose.msra.mxu0 %v285
        %3408 = vmatprep.subr.mxu0 0.0
        %3409 = vmatpush1.xpose.msra.mxu0 %v286
        %3410 = vmatprep.subr.mxu0 0.0
        %3411 = vmatpush1.xpose.msra.mxu0 %v287
        %3412 = vmatprep.subr.mxu0 0.0
        %3413 = vmatpush1.xpose.msra.mxu0 %v288
        %3414 = vmatprep.subr.mxu0 0.0
        %3415 = vmatpush1.xpose.msra.mxu0 %v289
        %3416 = vmatprep.subr.mxu0 0.0
        %3417 = vmatpush1.xpose.msra.mxu0 %v290
        %3418 = vmatprep.subr.mxu0 0.0
        %3419 = vmatpush1.xpose.msra.mxu0 %v291
        %3420 = vmatprep.subr.mxu0 0.0
        %3421 = vmatpush1.xpose.msra.mxu0 %v292
        %3422 = vmatprep.subr.mxu0 0.0
        %3423 = vmatpush1.xpose.msra.mxu0 %v293
        %3424 = vmatprep.subr.mxu0 0.0
        %3425 = vmatpush1.xpose.msra.mxu0 %v294
        %3426 = vmatprep.subr.mxu0 0.0
        %3427 = vmatpush1.xpose.msra.mxu0 %v295
        %3428 = vmatprep.subr.mxu0 0.0
        %3429 = vmatpush1.xpose.msra.mxu0 %v296
        %3430 = vmatprep.subr.mxu0 0.0
        %3431 = vmatpush1.xpose.msra.mxu0 %v297
        %3432 = vmatprep.subr.mxu0 0.0
        %3433 = vmatpush1.xpose.msra.mxu0 %v298
        %3434 = vmatprep.subr.mxu0 0.0
        %3435 = vmatpush1.xpose.msra.mxu0 %v299
        %3436 = vmatprep.subr.mxu0 0.0
        %3437 = vmatpush1.xpose.msra.mxu0 %v300
        %3438 = vmatprep.subr.mxu0 0.0
        %3439 = vmatpush1.xpose.msra.mxu0 %v301
        %3440 = vmatprep.subr.mxu0 0.0
        %3441 = vmatpush1.xpose.msra.mxu0 %v302
        %3442 = vmatprep.subr.mxu0 0.0
        %3443 = vmatpush1.xpose.msra.mxu0 %v303
        %3444 = vmatprep.subr.mxu0 0.0
        %3445 = vmatpush1.xpose.msra.mxu0 %v304
        %3446 = vmatprep.subr.mxu0 0.0
        %3447 = vmatpush1.xpose.msra.mxu0 %v305
        %3448 = vmatprep.mubr.f32.mxu0 0.0
        %3449 = vmatmul.mubr.f32.gmra.mrb[0].mxu0 %v3293
        %v3450 = vpop.f32.mrb[0].mxu0
        %v3451 = vadd.f32 0.0, %v3450
        %v3452 = vpop.f32.mrb[0].mxu0
        %v3453 = vadd.f32 0.0, %v3452
        %3454 = vdwg.mxu0
        %3455 = vmatprep.subr.mxu0 0.0
        %3456 = vmatpush1.xpose.msra.mxu0 %v306
        %3457 = vmatprep.subr.mxu0 0.0
        %3458 = vmatpush1.xpose.msra.mxu0 %v307
        %3459 = vmatprep.subr.mxu0 0.0
        %3460 = vmatpush1.xpose.msra.mxu0 %v308
        %3461 = vmatprep.subr.mxu0 0.0
        %3462 = vmatpush1.xpose.msra.mxu0 %v309
        %3463 = vmatprep.subr.mxu0 0.0
        %3464 = vmatpush1.xpose.msra.mxu0 %v310
        %3465 = vmatprep.subr.mxu0 0.0
        %3466 = vmatpush1.xpose.msra.mxu0 %v311
        %3467 = vmatprep.subr.mxu0 0.0
        %3468 = vmatpush1.xpose.msra.mxu0 %v312
        %3469 = vmatprep.subr.mxu0 0.0
        %3470 = vmatpush1.xpose.msra.mxu0 %v313
        %3471 = vmatprep.subr.mxu0 0.0
        %3472 = vmatpush1.xpose.msra.mxu0 %v314
        %3473 = vmatprep.subr.mxu0 0.0
        %3474 = vmatpush1.xpose.msra.mxu0 %v315
        %3475 = vmatprep.subr.mxu0 0.0
        %3476 = vmatpush1.xpose.msra.mxu0 %v316
        %3477 = vmatprep.subr.mxu0 0.0
        %3478 = vmatpush1.xpose.msra.mxu0 %v317
        %3479 = vmatprep.subr.mxu0 0.0
        %3480 = vmatpush1.xpose.msra.mxu0 %v318
        %3481 = vmatprep.subr.mxu0 0.0
        %3482 = vmatpush1.xpose.msra.mxu0 %v319
        %3483 = vmatprep.subr.mxu0 0.0
        %3484 = vmatpush1.xpose.msra.mxu0 %v320
        %3485 = vmatprep.subr.mxu0 0.0
        %3486 = vmatpush1.xpose.msra.mxu0 %v321
        %3487 = vmatprep.subr.mxu0 0.0
        %3488 = vmatpush1.xpose.msra.mxu0 %v322
        %3489 = vmatprep.subr.mxu0 0.0
        %3490 = vmatpush1.xpose.msra.mxu0 %v323
        %3491 = vmatprep.subr.mxu0 0.0
        %3492 = vmatpush1.xpose.msra.mxu0 %v324
        %3493 = vmatprep.subr.mxu0 0.0
        %3494 = vmatpush1.xpose.msra.mxu0 %v325
        %3495 = vmatprep.subr.mxu0 0.0
        %3496 = vmatpush1.xpose.msra.mxu0 %v326
        %3497 = vmatprep.subr.mxu0 0.0
        %3498 = vmatpush1.xpose.msra.mxu0 %v327
        %3499 = vmatprep.subr.mxu0 0.0
        %3500 = vmatpush1.xpose.msra.mxu0 %v328
        %3501 = vmatprep.subr.mxu0 0.0
        %3502 = vmatpush1.xpose.msra.mxu0 %v329
        %3503 = vmatprep.subr.mxu0 0.0
        %3504 = vmatpush1.xpose.msra.mxu0 %v330
        %3505 = vmatprep.subr.mxu0 0.0
        %3506 = vmatpush1.xpose.msra.mxu0 %v331
        %3507 = vmatprep.subr.mxu0 0.0
        %3508 = vmatpush1.xpose.msra.mxu0 %v332
        %3509 = vmatprep.subr.mxu0 0.0
        %3510 = vmatpush1.xpose.msra.mxu0 %v333
        %3511 = vmatprep.subr.mxu0 0.0
        %3512 = vmatpush1.xpose.msra.mxu0 %v334
        %3513 = vmatprep.subr.mxu0 0.0
        %3514 = vmatpush1.xpose.msra.mxu0 %v335
        %3515 = vmatprep.subr.mxu0 0.0
        %3516 = vmatpush1.xpose.msra.mxu0 %v336
        %3517 = vmatprep.subr.mxu0 0.0
        %3518 = vmatpush1.xpose.msra.mxu0 %v337
        %3519 = vmatprep.mubr.f32.mxu0 0.0
        %3520 = vmatmul.mubr.f32.gmra.mrb[0].mxu0 %v3301
        %v3521 = vpop.f32.mrb[0].mxu0
        %v3522 = vadd.f32 0.0, %v3521
        %v3523 = vpop.f32.mrb[0].mxu0
        %v3524 = vadd.f32 0.0, %v3523
        %3525 = vdwg.mxu0
        %3526 = vmatprep.subr.mxu0 0.0
        %3527 = vmatpush1.xpose.msra.mxu0 %v338
        %3528 = vmatprep.subr.mxu0 0.0
        %3529 = vmatpush1.xpose.msra.mxu0 %v339
        %3530 = vmatprep.subr.mxu0 0.0
        %3531 = vmatpush1.xpose.msra.mxu0 %v340
        %3532 = vmatprep.subr.mxu0 0.0
        %3533 = vmatpush1.xpose.msra.mxu0 %v341
        %3534 = vmatprep.subr.mxu0 0.0
        %3535 = vmatpush1.xpose.msra.mxu0 %v342
        %3536 = vmatprep.subr.mxu0 0.0
        %3537 = vmatpush1.xpose.msra.mxu0 %v343
        %3538 = vmatprep.subr.mxu0 0.0
        %3539 = vmatpush1.xpose.msra.mxu0 %v344
        %3540 = vmatprep.subr.mxu0 0.0
        %3541 = vmatpush1.xpose.msra.mxu0 %v345
        %3542 = vmatprep.subr.mxu0 0.0
        %3543 = vmatpush1.xpose.msra.mxu0 %v346
        %3544 = vmatprep.subr.mxu0 0.0
        %3545 = vmatpush1.xpose.msra.mxu0 %v347
        %3546 = vmatprep.subr.mxu0 0.0
        %3547 = vmatpush1.xpose.msra.mxu0 %v348
        %3548 = vmatprep.subr.mxu0 0.0
        %3549 = vmatpush1.xpose.msra.mxu0 %v349
        %3550 = vmatprep.subr.mxu0 0.0
        %3551 = vmatpush1.xpose.msra.mxu0 %v350
        %3552 = vmatprep.subr.mxu0 0.0
        %3553 = vmatpush1.xpose.msra.mxu0 %v351
        %3554 = vmatprep.subr.mxu0 0.0
        %3555 = vmatpush1.xpose.msra.mxu0 %v352
        %3556 = vmatprep.subr.mxu0 0.0
        %3557 = vmatpush1.xpose.msra.mxu0 %v353
        %3558 = vmatprep.subr.mxu0 0.0
        %3559 = vmatpush1.xpose.msra.mxu0 %v354
        %3560 = vmatprep.subr.mxu0 0.0
        %3561 = vmatpush1.xpose.msra.mxu0 %v355
        %3562 = vmatprep.subr.mxu0 0.0
        %3563 = vmatpush1.xpose.msra.mxu0 %v356
        %3564 = vmatprep.subr.mxu0 0.0
        %3565 = vmatpush1.xpose.msra.mxu0 %v357
        %3566 = vmatprep.subr.mxu0 0.0
        %3567 = vmatpush1.xpose.msra.mxu0 %v358
        %3568 = vmatprep.subr.mxu0 0.0
        %3569 = vmatpush1.xpose.msra.mxu0 %v359
        %3570 = vmatprep.subr.mxu0 0.0
        %3571 = vmatpush1.xpose.msra.mxu0 %v360
        %3572 = vmatprep.subr.mxu0 0.0
        %3573 = vmatpush1.xpose.msra.mxu0 %v361
        %3574 = vmatprep.subr.mxu0 0.0
        %3575 = vmatpush1.xpose.msra.mxu0 %v362
        %3576 = vmatprep.subr.mxu0 0.0
        %3577 = vmatpush1.xpose.msra.mxu0 %v363
        %3578 = vmatprep.subr.mxu0 0.0
        %3579 = vmatpush1.xpose.msra.mxu0 %v364
        %3580 = vmatprep.subr.mxu0 0.0
        %3581 = vmatpush1.xpose.msra.mxu0 %v365
        %3582 = vmatprep.subr.mxu0 0.0
        %3583 = vmatpush1.xpose.msra.mxu0 %v366
        %3584 = vmatprep.subr.mxu0 0.0
        %3585 = vmatpush1.xpose.msra.mxu0 %v367
        %3586 = vmatprep.subr.mxu0 0.0
        %3587 = vmatpush1.xpose.msra.mxu0 %v368
        %3588 = vmatprep.subr.mxu0 0.0
        %3589 = vmatpush1.xpose.msra.mxu0 %v369
        %3590 = vmatprep.mubr.f32.mxu0 0.0
        %3591 = vmatmul.mubr.f32.gmra.mrb[0].mxu0 %v3303
        %v3592 = vpop.f32.mrb[0].mxu0
        %v3593 = vadd.f32 0.0, %v3592
        %v3594 = vpop.f32.mrb[0].mxu0
        %v3595 = vadd.f32 0.0, %v3594
        %3596 = vdwg.mxu0
        %3597 = vmatprep.subr.mxu0 0.0
        %3598 = vmatpush1.xpose.msra.mxu0 %v370
        %3599 = vmatprep.subr.mxu0 0.0
        %3600 = vmatpush1.xpose.msra.mxu0 %v371
        %3601 = vmatprep.subr.mxu0 0.0
        %3602 = vmatpush1.xpose.msra.mxu0 %v372
        %3603 = vmatprep.subr.mxu0 0.0
        %3604 = vmatpush1.xpose.msra.mxu0 %v373
        %3605 = vmatprep.subr.mxu0 0.0
        %3606 = vmatpush1.xpose.msra.mxu0 %v374
        %3607 = vmatprep.subr.mxu0 0.0
        %3608 = vmatpush1.xpose.msra.mxu0 %v375
        %3609 = vmatprep.subr.mxu0 0.0
        %3610 = vmatpush1.xpose.msra.mxu0 %v376
        %3611 = vmatprep.subr.mxu0 0.0
        %3612 = vmatpush1.xpose.msra.mxu0 %v377
        %3613 = vmatprep.subr.mxu0 0.0
        %3614 = vmatpush1.xpose.msra.mxu0 %v378
        %3615 = vmatprep.subr.mxu0 0.0
        %3616 = vmatpush1.xpose.msra.mxu0 %v379
        %3617 = vmatprep.subr.mxu0 0.0
        %3618 = vmatpush1.xpose.msra.mxu0 %v380
        %3619 = vmatprep.subr.mxu0 0.0
        %3620 = vmatpush1.xpose.msra.mxu0 %v381
        %3621 = vmatprep.subr.mxu0 0.0
        %3622 = vmatpush1.xpose.msra.mxu0 %v382
        %3623 = vmatprep.subr.mxu0 0.0
        %3624 = vmatpush1.xpose.msra.mxu0 %v383
        %3625 = vmatprep.subr.mxu0 0.0
        %3626 = vmatpush1.xpose.msra.mxu0 %v384
        %3627 = vmatprep.subr.mxu0 0.0
        %3628 = vmatpush1.xpose.msra.mxu0 %v385
        %3629 = vmatprep.subr.mxu0 0.0
        %3630 = vmatpush1.xpose.msra.mxu0 %v386
        %3631 = vmatprep.subr.mxu0 0.0
        %3632 = vmatpush1.xpose.msra.mxu0 %v387
        %3633 = vmatprep.subr.mxu0 0.0
        %3634 = vmatpush1.xpose.msra.mxu0 %v388
        %3635 = vmatprep.subr.mxu0 0.0
        %3636 = vmatpush1.xpose.msra.mxu0 %v389
        %3637 = vmatprep.subr.mxu0 0.0
        %3638 = vmatpush1.xpose.msra.mxu0 %v390
        %3639 = vmatprep.subr.mxu0 0.0
        %3640 = vmatpush1.xpose.msra.mxu0 %v391
        %3641 = vmatprep.subr.mxu0 0.0
        %3642 = vmatpush1.xpose.msra.mxu0 %v392
        %3643 = vmatprep.subr.mxu0 0.0
        %3644 = vmatpush1.xpose.msra.mxu0 %v393
        %3645 = vmatprep.subr.mxu0 0.0
        %3646 = vmatpush1.xpose.msra.mxu0 %v394
        %3647 = vmatprep.subr.mxu0 0.0
        %3648 = vmatpush1.xpose.msra.mxu0 %v395
        %3649 = vmatprep.subr.mxu0 0.0
        %3650 = vmatpush1.xpose.msra.mxu0 %v396
        %3651 = vmatprep.subr.mxu0 0.0
        %3652 = vmatpush1.xpose.msra.mxu0 %v397
        %3653 = vmatprep.subr.mxu0 0.0
        %3654 = vmatpush1.xpose.msra.mxu0 %v398
        %3655 = vmatprep.subr.mxu0 0.0
        %3656 = vmatpush1.xpose.msra.mxu0 %v399
        %3657 = vmatprep.subr.mxu0 0.0
        %3658 = vmatpush1.xpose.msra.mxu0 %v400
        %3659 = vmatprep.subr.mxu0 0.0
        %3660 = vmatpush1.xpose.msra.mxu0 %v401
        %3661 = vmatprep.mubr.f32.mxu0 0.0
        %3662 = vmatmul.mubr.f32.gmra.mrb[0].mxu0 %v3286
        %v3663 = vpop.f32.mrb[0].mxu0
        %v3664 = vadd.f32 0.0, %v3663
        %v3665 = vpop.f32.mrb[0].mxu0
        %v3666 = vadd.f32 0.0, %v3665
        %3667 = vdwg.mxu0
        %3668 = vmatprep.subr.mxu0 0.0
        %3669 = vmatpush1.xpose.msra.mxu0 %v402
        %3670 = vmatprep.subr.mxu0 0.0
        %3671 = vmatpush1.xpose.msra.mxu0 %v403
        %3672 = vmatprep.subr.mxu0 0.0
        %3673 = vmatpush1.xpose.msra.mxu0 %v404
        %3674 = vmatprep.subr.mxu0 0.0
        %3675 = vmatpush1.xpose.msra.mxu0 %v405
        %3676 = vmatprep.subr.mxu0 0.0
        %3677 = vmatpush1.xpose.msra.mxu0 %v406
        %3678 = vmatprep.subr.mxu0 0.0
        %3679 = vmatpush1.xpose.msra.mxu0 %v407
        %3680 = vmatprep.subr.mxu0 0.0
        %3681 = vmatpush1.xpose.msra.mxu0 %v408
        %3682 = vmatprep.subr.mxu0 0.0
        %3683 = vmatpush1.xpose.msra.mxu0 %v409
        %3684 = vmatprep.subr.mxu0 0.0
        %3685 = vmatpush1.xpose.msra.mxu0 %v410
        %3686 = vmatprep.subr.mxu0 0.0
        %3687 = vmatpush1.xpose.msra.mxu0 %v411
        %3688 = vmatprep.subr.mxu0 0.0
        %3689 = vmatpush1.xpose.msra.mxu0 %v412
        %3690 = vmatprep.subr.mxu0 0.0
        %3691 = vmatpush1.xpose.msra.mxu0 %v413
        %3692 = vmatprep.subr.mxu0 0.0
        %3693 = vmatpush1.xpose.msra.mxu0 %v414
        %3694 = vmatprep.subr.mxu0 0.0
        %3695 = vmatpush1.xpose.msra.mxu0 %v415
        %3696 = vmatprep.subr.mxu0 0.0
        %3697 = vmatpush1.xpose.msra.mxu0 %v416
        %3698 = vmatprep.subr.mxu0 0.0
        %3699 = vmatpush1.xpose.msra.mxu0 %v417
        %3700 = vmatprep.subr.mxu0 0.0
        %3701 = vmatpush1.xpose.msra.mxu0 %v418
        %3702 = vmatprep.subr.mxu0 0.0
        %3703 = vmatpush1.xpose.msra.mxu0 %v419
        %3704 = vmatprep.subr.mxu0 0.0
        %3705 = vmatpush1.xpose.msra.mxu0 %v420
        %3706 = vmatprep.subr.mxu0 0.0
        %3707 = vmatpush1.xpose.msra.mxu0 %v421
        %3708 = vmatprep.subr.mxu0 0.0
        %3709 = vmatpush1.xpose.msra.mxu0 %v422
        %3710 = vmatprep.subr.mxu0 0.0
        %3711 = vmatpush1.xpose.msra.mxu0 %v423
        %3712 = vmatprep.subr.mxu0 0.0
        %3713 = vmatpush1.xpose.msra.mxu0 %v424
        %3714 = vmatprep.subr.mxu0 0.0
        %3715 = vmatpush1.xpose.msra.mxu0 %v425
        %3716 = vmatprep.subr.mxu0 0.0
        %3717 = vmatpush1.xpose.msra.mxu0 %v426
        %3718 = vmatprep.subr.mxu0 0.0
        %3719 = vmatpush1.xpose.msra.mxu0 %v427
        %3720 = vmatprep.subr.mxu0 0.0
        %3721 = vmatpush1.xpose.msra.mxu0 %v428
        %3722 = vmatprep.subr.mxu0 0.0
        %3723 = vmatpush1.xpose.msra.mxu0 %v429
        %3724 = vmatprep.subr.mxu0 0.0
        %3725 = vmatpush1.xpose.msra.mxu0 %v430
        %3726 = vmatprep.subr.mxu0 0.0
        %3727 = vmatpush1.xpose.msra.mxu0 %v431
        %3728 = vmatprep.subr.mxu0 0.0
        %3729 = vmatpush1.xpose.msra.mxu0 %v432
        %3730 = vmatprep.subr.mxu0 0.0
        %3731 = vmatpush1.xpose.msra.mxu0 %v433
        %3732 = vmatprep.mubr.f32.mxu0 0.0
        %3733 = vmatmul.mubr.f32.gmra.mrb[0].mxu0 %v3300
        %v3734 = vpop.f32.mrb[0].mxu0
        %v3735 = vadd.f32 0.0, %v3734
        %v3736 = vpop.f32.mrb[0].mxu0
        %v3737 = vadd.f32 0.0, %v3736
        %3738 = vdwg.mxu0
        %3739 = vmatprep.subr.mxu0 0.0
        %3740 = vmatpush1.xpose.msra.mxu0 %v434
        %3741 = vmatprep.subr.mxu0 0.0
        %3742 = vmatpush1.xpose.msra.mxu0 %v435
        %3743 = vmatprep.subr.mxu0 0.0
        %3744 = vmatpush1.xpose.msra.mxu0 %v436
        %3745 = vmatprep.subr.mxu0 0.0
        %3746 = vmatpush1.xpose.msra.mxu0 %v437
        %3747 = vmatprep.subr.mxu0 0.0
        %3748 = vmatpush1.xpose.msra.mxu0 %v438
        %3749 = vmatprep.subr.mxu0 0.0
        %3750 = vmatpush1.xpose.msra.mxu0 %v439
        %3751 = vmatprep.subr.mxu0 0.0
        %3752 = vmatpush1.xpose.msra.mxu0 %v440
        %3753 = vmatprep.subr.mxu0 0.0
        %3754 = vmatpush1.xpose.msra.mxu0 %v441
        %3755 = vmatprep.subr.mxu0 0.0
        %3756 = vmatpush1.xpose.msra.mxu0 %v442
        %3757 = vmatprep.subr.mxu0 0.0
        %3758 = vmatpush1.xpose.msra.mxu0 %v443
        %3759 = vmatprep.subr.mxu0 0.0
        %3760 = vmatpush1.xpose.msra.mxu0 %v444
        %3761 = vmatprep.subr.mxu0 0.0
        %3762 = vmatpush1.xpose.msra.mxu0 %v445
        %3763 = vmatprep.subr.mxu0 0.0
        %3764 = vmatpush1.xpose.msra.mxu0 %v446
        %3765 = vmatprep.subr.mxu0 0.0
        %3766 = vmatpush1.xpose.msra.mxu0 %v447
        %3767 = vmatprep.subr.mxu0 0.0
        %3768 = vmatpush1.xpose.msra.mxu0 %v448
        %3769 = vmatprep.subr.mxu0 0.0
        %3770 = vmatpush1.xpose.msra.mxu0 %v449
        %3771 = vmatprep.subr.mxu0 0.0
        %3772 = vmatpush1.xpose.msra.mxu0 %v450
        %3773 = vmatprep.subr.mxu0 0.0
        %3774 = vmatpush1.xpose.msra.mxu0 %v451
        %3775 = vmatprep.subr.mxu0 0.0
        %3776 = vmatpush1.xpose.msra.mxu0 %v452
        %3777 = vmatprep.subr.mxu0 0.0
        %3778 = vmatpush1.xpose.msra.mxu0 %v453
        %3779 = vmatprep.subr.mxu0 0.0
        %3780 = vmatpush1.xpose.msra.mxu0 %v454
        %3781 = vmatprep.subr.mxu0 0.0
        %3782 = vmatpush1.xpose.msra.mxu0 %v455
        %3783 = vmatprep.subr.mxu0 0.0
        %3784 = vmatpush1.xpose.msra.mxu0 %v456
        %3785 = vmatprep.subr.mxu0 0.0
        %3786 = vmatpush1.xpose.msra.mxu0 %v457
        %3787 = vmatprep.subr.mxu0 0.0
        %3788 = vmatpush1.xpose.msra.mxu0 %v458
        %3789 = vmatprep.subr.mxu0 0.0
        %3790 = vmatpush1.xpose.msra.mxu0 %v459
        %3791 = vmatprep.subr.mxu0 0.0
        %3792 = vmatpush1.xpose.msra.mxu0 %v460
        %3793 = vmatprep.subr.mxu0 0.0
        %3794 = vmatpush1.xpose.msra.mxu0 %v461
        %3795 = vmatprep.subr.mxu0 0.0
        %3796 = vmatpush1.xpose.msra.mxu0 %v462
        %3797 = vmatprep.subr.mxu0 0.0
        %3798 = vmatpush1.xpose.msra.mxu0 %v463
        %3799 = vmatprep.subr.mxu0 0.0
        %3800 = vmatpush1.xpose.msra.mxu0 %v464
        %3801 = vmatprep.subr.mxu0 0.0
        %3802 = vmatpush1.xpose.msra.mxu0 %v465
        %3803 = vmatprep.mubr.f32.mxu0 0.0
        %3804 = vmatmul.mubr.f32.gmra.mrb[0].mxu0 %v3302
        %v3805 = vpop.f32.mrb[0].mxu0
        %v3806 = vadd.f32 0.0, %v3805
        %v3807 = vpop.f32.mrb[0].mxu0
        %v3808 = vadd.f32 0.0, %v3807
        %3809 = vdwg.mxu0
        %3810 = vmatprep.subr.mxu0 0.0
        %3811 = vmatpush1.xpose.msra.mxu0 %v466
        %3812 = vmatprep.subr.mxu0 0.0
        %3813 = vmatpush1.xpose.msra.mxu0 %v467
        %3814 = vmatprep.subr.mxu0 0.0
        %3815 = vmatpush1.xpose.msra.mxu0 %v468
        %3816 = vmatprep.subr.mxu0 0.0
        %3817 = vmatpush1.xpose.msra.mxu0 %v469
        %3818 = vmatprep.subr.mxu0 0.0
        %3819 = vmatpush1.xpose.msra.mxu0 %v470
        %3820 = vmatprep.subr.mxu0 0.0
        %3821 = vmatpush1.xpose.msra.mxu0 %v471
        %3822 = vmatprep.subr.mxu0 0.0
        %3823 = vmatpush1.xpose.msra.mxu0 %v472
        %3824 = vmatprep.subr.mxu0 0.0
        %3825 = vmatpush1.xpose.msra.mxu0 %v473
        %3826 = vmatprep.subr.mxu0 0.0
        %3827 = vmatpush1.xpose.msra.mxu0 %v474
        %3828 = vmatprep.subr.mxu0 0.0
        %3829 = vmatpush1.xpose.msra.mxu0 %v475
        %3830 = vmatprep.subr.mxu0 0.0
        %3831 = vmatpush1.xpose.msra.mxu0 %v476
        %3832 = vmatprep.subr.mxu0 0.0
        %3833 = vmatpush1.xpose.msra.mxu0 %v477
        %3834 = vmatprep.subr.mxu0 0.0
        %3835 = vmatpush1.xpose.msra.mxu0 %v478
        %3836 = vmatprep.subr.mxu0 0.0
        %3837 = vmatpush1.xpose.msra.mxu0 %v479
        %3838 = vmatprep.subr.mxu0 0.0
        %3839 = vmatpush1.xpose.msra.mxu0 %v480
        %3840 = vmatprep.subr.mxu0 0.0
        %3841 = vmatpush1.xpose.msra.mxu0 %v481
        %3842 = vmatprep.subr.mxu0 0.0
        %3843 = vmatpush1.xpose.msra.mxu0 %v482
        %3844 = vmatprep.subr.mxu0 0.0
        %3845 = vmatpush1.xpose.msra.mxu0 %v483
        %3846 = vmatprep.subr.mxu0 0.0
        %3847 = vmatpush1.xpose.msra.mxu0 %v484
        %3848 = vmatprep.subr.mxu0 0.0
        %3849 = vmatpush1.xpose.msra.mxu0 %v485
        %3850 = vmatprep.subr.mxu0 0.0
        %3851 = vmatpush1.xpose.msra.mxu0 %v486
        %3852 = vmatprep.subr.mxu0 0.0
        %3853 = vmatpush1.xpose.msra.mxu0 %v487
        %3854 = vmatprep.subr.mxu0 0.0
        %3855 = vmatpush1.xpose.msra.mxu0 %v488
        %3856 = vmatprep.subr.mxu0 0.0
        %3857 = vmatpush1.xpose.msra.mxu0 %v489
        %3858 = vmatprep.subr.mxu0 0.0
        %3859 = vmatpush1.xpose.msra.mxu0 %v490
        %3860 = vmatprep.subr.mxu0 0.0
        %3861 = vmatpush1.xpose.msra.mxu0 %v491
        %3862 = vmatprep.subr.mxu0 0.0
        %3863 = vmatpush1.xpose.msra.mxu0 %v492
        %3864 = vmatprep.subr.mxu0 0.0
        %3865 = vmatpush1.xpose.msra.mxu0 %v493
        %3866 = vmatprep.subr.mxu0 0.0
        %3867 = vmatpush1.xpose.msra.mxu0 %v494
        %3868 = vmatprep.subr.mxu0 0.0
        %3869 = vmatpush1.xpose.msra.mxu0 %v495
        %3870 = vmatprep.subr.mxu0 0.0
        %3871 = vmatpush1.xpose.msra.mxu0 %v496
        %3872 = vmatprep.subr.mxu0 0.0
        %3873 = vmatpush1.xpose.msra.mxu0 %v497
        %3874 = vmatprep.mubr.f32.mxu0 0.0
        %3875 = vmatmul.mubr.f32.gmra.mrb[0].mxu0 %v3304
        %v3876 = vpop.f32.mrb[0].mxu0
        %v3877 = vadd.f32 0.0, %v3876
        %v3878 = vpop.f32.mrb[0].mxu0
        %v3879 = vadd.f32 0.0, %v3878
        %3880 = vdwg.mxu0
        %v3881 = vld [vmem:[#allocation4] sm:$0xff]
        %v3882 = vld [vmem:[#allocation4 + $0x8] sm:$0xff]
        %3884 = vset.pattern.permute.xlu0 0
        %3885 = vperm.xlu0 %3884, %v3238
        %v3886 = vpop.permute.xlu0 %3885
        %v3888 = vmul.f32 %v3886, %v3881
        %v3889 = vmul.f32 %v3886, %v3882
        %v3906 = vrot.slane %v3451, 7
        %vm3907 = vcmask 1041409
        %v3908 = vsel %vm3907, %v3906, %v3380
        %v3909 = vrot.slane %v3522, 6
        %vm3910 = vcmask 1042434
        %v3911 = vsel %vm3910, %v3909, %v3908
        %v3912 = vrot.slane %v3593, 5
        %vm3913 = vcmask 1043459
        %v3914 = vsel %vm3913, %v3912, %v3911
        %v3915 = vrot.slane %v3664, 4
        %vm3916 = vcmask 1044484
        %v3917 = vsel %vm3916, %v3915, %v3914
        %v3918 = vrot.slane %v3735, 3
        %vm3919 = vcmask 1045509
        %v3920 = vsel %vm3919, %v3918, %v3917
        %v3921 = vrot.slane %v3806, 2
        %vm3922 = vcmask 1046534
        %v3923 = vsel %vm3922, %v3921, %v3920
        %v3924 = vrot.slane %v3877, 1
        %vm3925 = vcmask 1047559
        %v3926 = vsel %vm3925, %v3924, %v3923
        %v3927 = vrot.slane %v3453, 7
        %v3928 = vsel %vm3907, %v3927, %v3382
        %v3929 = vrot.slane %v3524, 6
        %v3930 = vsel %vm3910, %v3929, %v3928
        %v3931 = vrot.slane %v3595, 5
        %v3932 = vsel %vm3913, %v3931, %v3930
        %v3933 = vrot.slane %v3666, 4
        %v3934 = vsel %vm3916, %v3933, %v3932
        %v3935 = vrot.slane %v3737, 3
        %v3936 = vsel %vm3919, %v3935, %v3934
        %v3937 = vrot.slane %v3808, 2
        %v3938 = vsel %vm3922, %v3937, %v3936
        %v3939 = vrot.slane %v3879, 1
        %v3940 = vsel %vm3925, %v3939, %v3938
        %v3943 = vadd.f32 %v3888, %v3926
        %v3944 = vadd.f32 %v3889, %v3940
        %3945 = vst [vmem:[#allocation4] sm:$0xff] %v3943
        %3946 = vst [vmem:[#allocation4 + $0x8] sm:$0xff] %v3944
        // Predicated region
        $region49: #{tpu_custom_call.1} parent=31 // pred_check
          %p3947 = pneg %p233
        $region50: #{tpu_custom_call.1} parent=31 // pred_check_branch
          %3949 = sbr.rel (%p3947) target = $region52
        $region51: #{tpu_custom_call.1} parent=31 // pred_region
          %v3950 = vld [vmem:[#allocation4] sm:$0xff]
          %v3951 = vld [vmem:[#allocation4 + $0x8] sm:$0xff]
          %v3952 = vld [vmem:[#allocation3] sm:$0xff]
          %v3953 = vrcp.pop %v3952
          %3955 = vset.pattern.permute.xlu0 0
          %3956 = vperm.xlu0 %3955, %v3953
          %v3957 = vpop.permute.xlu0 %3956
          %v3959 = vmul.f32 %v3950, %v3957
          %v3960 = vmul.f32 %v3951, %v3957
          %3961 = vst [vmem:[%s231] sm:$0xff] %v3959
          %3962 = vst [vmem:[%s231 + $0x8] sm:$0xff] %v3960
        $region52: #{tpu_custom_call.1} parent=31 // pred_fallthru
          _
        %s3963 = sand.u32 %s111, 1
        %s3964 = scalar_lea.sflag [#allocation7], %s3963
        %s3965 = sand.u32 %s111, 1
        %s3966 = smul.addr %s3965, 16
        %s3967 = scalar_lea.vmem [#allocation11], %s3966
        // Predicated region
        $region53: #{tpu_custom_call.1} parent=31 // pred_check
          %p3968 = pneg %p121
        $region54: #{tpu_custom_call.1} parent=31 // pred_check_branch
          %3970 = sbr.rel (%p3968) target = $region56
        $region55: #{tpu_custom_call.1} parent=31 // pred_region
          %s3972 = ssub.s32 256, 256
          %3973 = vsyncadd %s3964, %s3972
          %s3974 = smul.addr %s25, 2
          %s3975 = smul.addr %s3974, 128
          %s3976 = scalar_lea.hbm %s3, %s3975
          %s3978 = sshll.u32 %s3967, 4
          %s3979 = int_to_ptr.vmem [resolvable:$true] %s3978
          %3981 = dma.vmem_to_hbm [thread:$0]  %s3979, 256, %s3976, %s3964
        $region56: #{tpu_custom_call.1} parent=31 // pred_fallthru
          _
      $region32: #{tpu_custom_call.1} parent=5 // pred_fallthru
        _
      %p3982 = scmp.le.s32.totalorder 2, %s16
      // Predicated region
      $region57: #{tpu_custom_call.1} parent=5 // pred_check
        %p3983 = pneg %p3982
      $region58: #{tpu_custom_call.1} parent=5 // pred_check_branch
        %3985 = sbr.rel (%p3983) target = $region60
      $region59: #{tpu_custom_call.1} parent=5 // pred_region
        %s3986 = ssub.s32 %s16, 2
        // Predicated region
        $region61: #{tpu_custom_call.1} parent=59 // pred_check
          %p3987 = pneg %p127
        $region62: #{tpu_custom_call.1} parent=59 // pred_check_branch
          %3989 = sbr.rel (%p3987) target = $region64
        $region63: #{tpu_custom_call.1} parent=59 // pred_region
          %s3990 = sand.u32 %s112, 1
          %s3991 = scalar_lea.sflag [#allocation7], %s3990
          %s3992 = sand.u32 %s112, 1
          %s3993 = smul.addr %s3992, 16
          %s3994 = scalar_lea.vmem [#allocation11], %s3993
          %3995 = dma.done %s3991, 256
        $region64: #{tpu_custom_call.1} parent=59 // pred_fallthru
          _
      $region60: #{tpu_custom_call.1} parent=5 // pred_fallthru
        _
    $region6: #{tpu_custom_call.1} parent=1 // loop_footer
      %s20 = sadd.s32 1, %s16
    $region7: #{tpu_custom_call.1} parent=1 // loop_footer_branch
      %15 = sbr.rel target = $region3
    $region8: #{tpu_custom_call.1} parent=1 // loop_exit
      _
    %3996 = vsyncpa [#allocation6], 1
    %s3997 = scalar_lea.sflag [#allocation6], 1
    %3998 = vsyncpa %s3997, 1
    %3999 = vsyncpa [#allocation9], 1
    %4000 = vsyncpa [#allocation7], 1
    %s4001 = scalar_lea.sflag [#allocation7], 1
    %4002 = vsyncpa %s4001, 1

</llo_original>
